<compile_context>
chip_gen: v6e
topology: v6e:2x2x1
jax: 0.10.0
libtpu: 0.0.40
codegen_flags: <defaults>
</compile_context>

<pallas_src>
import math

import jax
import jax.numpy as jnp
from jax import lax
from jax.experimental import pallas as pl
from jax.experimental.pallas import tpu as pltpu

# Small TPU-friendly config consistent with the module structure
# (scaled down from emb_dim=768 / context_length=1024).
B = 2           # batch
S = 64          # sequence length (<= context_length)
E = 128         # emb_dim
H = 4           # n_heads
HD = E // H     # head_dim
HIDDEN = 4 * E  # FF hidden dim
EPS = 1e-5
DROP_RATE = 0.1  # not applied (eval semantics)


def make_transformer_block_kernel(nseq, seq, emb, nheads):
    """Build a kernel processing a (nseq*seq, emb) row tile (nseq full sequences)."""
    hd = emb // nheads
    gelu_c = math.sqrt(2.0 / math.pi)

    def kernel(x_ref, ln1_s_ref, ln1_b_ref,
               wqkv_ref, wo_ref, bo_ref,
               ln2_s_ref, ln2_b_ref,
               w1_ref, b1_ref, w2_ref, b2_ref,
               out_ref):
        f32, bf16 = jnp.float32, jnp.bfloat16

        def layernorm(z, s_ref, b_ref):
            # Single pass: var = E[z^2] - mean^2, rsqrt instead of divide (EUP, not VALU).
            m = jnp.mean(z, axis=-1, keepdims=True)
            ms = jnp.mean(z * z, axis=-1, keepdims=True)
            inv = lax.rsqrt(ms - m * m + EPS)
            return (z - m) * inv * s_ref[...] + b_ref[...]

        x = x_ref[...]                                             # (R, E) f32, R = nseq*seq

        # ---- LayerNorm 1 ----
        xn_b = layernorm(x, ln1_s_ref, ln1_b_ref).astype(bf16)

        # ---- Fused QKV projection (qkv_bias=False); 1/sqrt(hd) pre-folded into q cols ----
        qkv = jnp.dot(xn_b, wqkv_ref[...], preferred_element_type=f32)   # (R, 3E)
        q = qkv[:, :emb].astype(bf16)                              # cast early: drop f32 copies
        k = qkv[:, emb:2 * emb].astype(bf16)
        v = qkv[:, 2 * emb:].astype(bf16)

        row = lax.broadcasted_iota(jnp.int32, (seq, seq), 0)
        col = lax.broadcasted_iota(jnp.int32, (seq, seq), 1)
        causal = col <= row

        # ---- Causal multi-head attention (static unroll over sequences and heads) ----
        seq_ctx = []
        for n in range(nseq):
            rs = slice(n * seq, (n + 1) * seq)
            head_ctx = []
            for h in range(nheads):
                cs = slice(h * hd, (h + 1) * hd)
                qh = q[rs, cs]                                     # (seq, hd) bf16
                kh = k[rs, cs]
                vh = v[rs, cs]
                # scores = qh @ kh^T (contract head_dim; no explicit transpose).
                s = lax.dot_general(qh, kh, (((1,), (1,)), ((), ())),
                                    preferred_element_type=f32)    # (seq, seq)
                s = jnp.where(causal, s, -1e30)
                p = jnp.exp(s - jnp.max(s, axis=-1, keepdims=True))
                l = jnp.sum(p, axis=-1, keepdims=True)
                # TODO(synk): attention-weight dropout (p=0.1) not applied — eval semantics.
                ctx = jnp.dot(p.astype(bf16), vh,
                              preferred_element_type=f32)          # (seq, hd) unnormalized
                ctx = ctx * pl.reciprocal(l, approx=True)          # deferred softmax norm (EUP)
                head_ctx.append(ctx.astype(bf16))
            seq_ctx.append(jnp.concatenate(head_ctx, axis=-1))     # (seq, emb)
        ctx_all = seq_ctx[0] if nseq == 1 else jnp.concatenate(seq_ctx, axis=0)  # (R, emb)

        # ---- Single K=128 output projection ----
        attn = jnp.dot(ctx_all, wo_ref[...], preferred_element_type=f32) + bo_ref[...]

        # TODO(synk): drop_shortcut dropout (p=0.1) not applied — eval semantics.
        x = x + attn                                               # residual 1

        # ---- LayerNorm 2 + FeedForward ----
        xn2_b = layernorm(x, ln2_s_ref, ln2_b_ref).astype(bf16)
        h1 = jnp.dot(xn2_b, w1_ref[...], preferred_element_type=f32) + b1_ref[...]   # (R, 4E)
        g = 0.5 * h1 * (1.0 + jnp.tanh(gelu_c * (h1 + 0.044715 * (h1 * h1 * h1))))
        h2 = jnp.dot(g.astype(bf16), w2_ref[...], preferred_element_type=f32) + b2_ref[...]

        out_ref[...] = (x + h2).astype(out_ref.dtype)              # residual 2

    return kernel


def _seqs_per_grid_step(batch):
    """v7x has 2 TensorCores/chip -> keep a >=2-step parallel grid axis.
    v5e/v6e have 1 TC -> fuse the whole batch into the row dim (grid=(1,), M=B*S)."""
    try:
        kind = jax.devices()[0].device_kind.lower()
    except Exception:
        kind = ""
    if "v7" in kind or "tpu7" in kind:
        return 1
    return batch


def transformer_block_forward(x, params):
    """x: (B, S, E) f32. Weights in (in, out) layout, bf16; QKV fused & q pre-scaled."""
    bsz, seq, emb = x.shape
    nseq = _seqs_per_grid_step(bsz)
    assert bsz % nseq == 0
    tile_rows = nseq * seq
    num_tiles = bsz // nseq

    x2 = x.reshape(bsz * seq, emb)

    def const_spec(shape):
        nd = len(shape)
        return pl.BlockSpec(shape, lambda i, _n=nd: (0,) * _n)

    kernel = make_transformer_block_kernel(nseq, seq, emb, H)

    out = pl.pallas_call(
        kernel,
        out_shape=jax.ShapeDtypeStruct((bsz * seq, emb), jnp.float32),
        grid_spec=pltpu.PrefetchScalarGridSpec(
            num_scalar_prefetch=0,
            grid=(num_tiles,),
            in_specs=[
                pl.BlockSpec((tile_rows, emb), lambda i: (i, 0)),   # x (row tile)
                const_spec((1, E)), const_spec((1, E)),             # ln1 scale / shift
                const_spec((E, 3 * E)),                             # fused Wqkv (q pre-scaled)
                const_spec((E, E)), const_spec((1, E)),             # Wo, bo
                const_spec((1, E)), const_spec((1, E)),             # ln2 scale / shift
                const_spec((E, HIDDEN)), const_spec((1, HIDDEN)),   # W1, b1
                const_spec((HIDDEN, E)), const_spec((1, E)),        # W2, b2
            ],
            out_specs=pl.BlockSpec((tile_rows, emb), lambda i: (i, 0)),
        ),
        compiler_params=pltpu.CompilerParams(
            dimension_semantics=("parallel",)),
    )(x2,
      params["ln1_s"], params["ln1_b"],
      params["wqkv"], params["wo"], params["bo"],
      params["ln2_s"], params["ln2_b"],
      params["w1"], params["b1"], params["w2"], params["b2"])

    return out.reshape(bsz, seq, emb)


def transformer_block_reference(x, p):
    """Pure-JAX reference mirroring the kernel's bf16-matmul / f32-accumulate math."""
    f32, bf16 = jnp.float32, jnp.bfloat16

    def ln(z, s, b):
        m = jnp.mean(z, axis=-1, keepdims=True)
        v = jnp.mean((z - m) ** 2, axis=-1, keepdims=True)
        return (z - m) / jnp.sqrt(v + EPS) * s + b

    def mm(a, w):
        return jnp.dot(a.astype(bf16), w, preferred_element_type=f32)

    bsz, seq, emb = x.shape
    xn = ln(x, p["ln1_s"], p["ln1_b"])
    qkv = mm(xn, p["wqkv"])                                   # (B, S, 3E); q already scaled
    q, k, v = qkv[..., :emb], qkv[..., emb:2 * emb], qkv[..., 2 * emb:]
    qh = q.reshape(bsz, seq, H, HD).transpose(0, 2, 1, 3).astype(bf16)
    kh = k.reshape(bsz, seq, H, HD).transpose(0, 2, 1, 3).astype(bf16)
    vh = v.reshape(bsz, seq, H, HD).transpose(0, 2, 1, 3).astype(bf16)
    s = jnp.einsum("bhqd,bhkd->bhqk", qh, kh, preferred_element_type=f32)
    causal = jnp.tril(jnp.ones((seq, seq), dtype=bool))
    s = jnp.where(causal, s, -1e30)
    s = s - jnp.max(s, axis=-1, keepdims=True)
    pr = jnp.exp(s)
    pr = pr / jnp.sum(pr, axis=-1, keepdims=True)
    ctx = jnp.einsum("bhqk,bhkd->bhqd", pr.astype(bf16), vh, preferred_element_type=f32)
    ctx = ctx.transpose(0, 2, 1, 3).reshape(bsz, seq, emb)
    attn = mm(ctx, p["wo"]) + p["bo"]
    x1 = x + attn
    xn2 = ln(x1, p["ln2_s"], p["ln2_b"])
    h1 = mm(xn2, p["w1"]) + p["b1"]
    g = 0.5 * h1 * (1.0 + jnp.tanh(math.sqrt(2.0 / math.pi)
                                   * (h1 + 0.044715 * h1 ** 3)))
    h2 = mm(g, p["w2"]) + p["b2"]
    return x1 + h2


if __name__ == "__main__":
    key = jax.random.PRNGKey(0)
    ks = jax.random.split(key, 16)

    def wf32(k, shape, scale=0.05):
        return scale * jax.random.normal(k, shape, dtype=jnp.float32)

    x = jax.random.normal(ks[0], (B, S, E), dtype=jnp.float32)

    # Torch weights would be (out, in); we cache the (in, out) transpose, fuse QKV, and
    # fold the attention scale 1/sqrt(head_dim) into the q columns at param-prep time.
    wq = wf32(ks[3], (E, E)) * (1.0 / math.sqrt(HD))
    wk = wf32(ks[4], (E, E))
    wv = wf32(ks[5], (E, E))
    wqkv = jnp.concatenate([wq, wk, wv], axis=1).astype(jnp.bfloat16)      # (E, 3E)

    params = dict(
        ln1_s=1.0 + 0.1 * jax.random.normal(ks[1], (1, E), dtype=jnp.float32),
        ln1_b=0.1 * jax.random.normal(ks[2], (1, E), dtype=jnp.float32),
        wqkv=wqkv,
        wo=wf32(ks[6], (E, E)).astype(jnp.bfloat16),
        bo=0.02 * jax.random.normal(ks[7], (1, E), dtype=jnp.float32),
        ln2_s=1.0 + 0.1 * jax.random.normal(ks[8], (1, E), dtype=jnp.float32),
        ln2_b=0.1 * jax.random.normal(ks[9], (1, E), dtype=jnp.float32),
        w1=wf32(ks[10], (E, HIDDEN)).astype(jnp.bfloat16),
        b1=0.02 * jax.random.normal(ks[11], (1, HIDDEN), dtype=jnp.float32),
        w2=wf32(ks[12], (HIDDEN, E)).astype(jnp.bfloat16),
        b2=0.02 * jax.random.normal(ks[13], (1, E), dtype=jnp.float32),
    )

    out = transformer_block_forward(x, params)
    out = jax.block_until_ready(out)

    ref = transformer_block_reference(x, params)
    assert out.shape == (B, S, E)
    max_err = float(jnp.max(jnp.abs(out - ref)))
    assert jnp.allclose(out, ref, atol=1e-2, rtol=1e-2), f"max abs err = {max_err}"

    print("KERNEL_OK")
</pallas_src>

<mosaic_0001>
module attributes {stable_mosaic.version = 11 : i64} {
  func.func @kernel(%arg0: i32, %arg1: memref<128x128xf32, #tpu.memory_space<vmem>>, %arg2: memref<1x128xf32, #tpu.memory_space<vmem>>, %arg3: memref<1x128xf32, #tpu.memory_space<vmem>>, %arg4: memref<128x384xbf16, #tpu.memory_space<vmem>>, %arg5: memref<128x128xbf16, #tpu.memory_space<vmem>>, %arg6: memref<1x128xf32, #tpu.memory_space<vmem>>, %arg7: memref<1x128xf32, #tpu.memory_space<vmem>>, %arg8: memref<1x128xf32, #tpu.memory_space<vmem>>, %arg9: memref<128x512xbf16, #tpu.memory_space<vmem>>, %arg10: memref<1x512xf32, #tpu.memory_space<vmem>>, %arg11: memref<512x128xbf16, #tpu.memory_space<vmem>>, %arg12: memref<1x128xf32, #tpu.memory_space<vmem>>, %arg13: memref<128x128xf32, #tpu.memory_space<vmem>>) attributes {dimension_semantics = [#tpu.dimension_semantics<parallel>], iteration_bounds = array<i64: 1>, scalar_prefetch = 0 : i64, scratch_operands = 0 : i64, tpu.core_type = #tpu.core_type<tc>, window_params = [{transform_indices = @transform_0, window_bounds = array<i64: 128, 128>}, {pipeline_mode = #tpu.pipeline_mode<synchronous>, transform_indices = @transform_1, window_bounds = array<i64: 1, 128>}, {pipeline_mode = #tpu.pipeline_mode<synchronous>, transform_indices = @transform_2, window_bounds = array<i64: 1, 128>}, {pipeline_mode = #tpu.pipeline_mode<synchronous>, transform_indices = @transform_3, window_bounds = array<i64: 128, 384>}, {pipeline_mode = #tpu.pipeline_mode<synchronous>, transform_indices = @transform_4, window_bounds = array<i64: 128, 128>}, {pipeline_mode = #tpu.pipeline_mode<synchronous>, transform_indices = @transform_5, window_bounds = array<i64: 1, 128>}, {pipeline_mode = #tpu.pipeline_mode<synchronous>, transform_indices = @transform_6, window_bounds = array<i64: 1, 128>}, {pipeline_mode = #tpu.pipeline_mode<synchronous>, transform_indices = @transform_7, window_bounds = array<i64: 1, 128>}, {pipeline_mode = #tpu.pipeline_mode<synchronous>, transform_indices = @transform_8, window_bounds = array<i64: 128, 512>}, {pipeline_mode = #tpu.pipeline_mode<synchronous>, transform_indices = @transform_9, window_bounds = array<i64: 1, 512>}, {pipeline_mode = #tpu.pipeline_mode<synchronous>, transform_indices = @transform_10, window_bounds = array<i64: 512, 128>}, {pipeline_mode = #tpu.pipeline_mode<synchronous>, transform_indices = @transform_11, window_bounds = array<i64: 1, 128>}, {transform_indices = @transform_12, window_bounds = array<i64: 128, 128>}]} {
    %c0 = arith.constant 0 : index
    %c0_0 = arith.constant 0 : index
    %0 = vector.load %arg1[%c0, %c0_0] : memref<128x128xf32, #tpu.memory_space<vmem>>, vector<128x128xf32>
    %cst = arith.constant dense<0.000000e+00> : vector<128xf32>
    %1 = vector.multi_reduction <add>, %0, %cst [1] : vector<128x128xf32> to vector<128xf32>
    %2 = vector.shape_cast %1 : vector<128xf32> to vector<128x1xf32>
    %cst_1 = arith.constant 1.280000e+02 : f32
    %3 = vector.broadcast %cst_1 : f32 to vector<128x1xf32>
    %4 = arith.divf %2, %3 : vector<128x1xf32>
    %5 = arith.mulf %0, %0 : vector<128x128xf32>
    %cst_2 = arith.constant dense<0.000000e+00> : vector<128xf32>
    %6 = vector.multi_reduction <add>, %5, %cst_2 [1] : vector<128x128xf32> to vector<128xf32>
    %7 = vector.shape_cast %6 : vector<128xf32> to vector<128x1xf32>
    %cst_3 = arith.constant 1.280000e+02 : f32
    %8 = vector.broadcast %cst_3 : f32 to vector<128x1xf32>
    %9 = arith.divf %7, %8 : vector<128x1xf32>
    %10 = arith.mulf %4, %4 : vector<128x1xf32>
    %11 = arith.subf %9, %10 : vector<128x1xf32>
    %cst_4 = arith.constant 9.99999974E-6 : f32
    %12 = vector.broadcast %cst_4 : f32 to vector<128x1xf32>
    %13 = arith.addf %11, %12 : vector<128x1xf32>
    %14 = math.rsqrt %13 : vector<128x1xf32>
    %15 = vector.broadcast %4 : vector<128x1xf32> to vector<128x128xf32>
    %16 = arith.subf %0, %15 : vector<128x128xf32>
    %17 = vector.broadcast %14 : vector<128x1xf32> to vector<128x128xf32>
    %18 = arith.mulf %16, %17 : vector<128x128xf32>
    %c0_5 = arith.constant 0 : index
    %c0_6 = arith.constant 0 : index
    %19 = vector.load %arg2[%c0_5, %c0_6] : memref<1x128xf32, #tpu.memory_space<vmem>>, vector<1x128xf32>
    %20 = vector.broadcast %19 : vector<1x128xf32> to vector<128x128xf32>
    %21 = arith.mulf %18, %20 : vector<128x128xf32>
    %c0_7 = arith.constant 0 : index
    %c0_8 = arith.constant 0 : index
    %22 = vector.load %arg3[%c0_7, %c0_8] : memref<1x128xf32, #tpu.memory_space<vmem>>, vector<1x128xf32>
    %23 = vector.broadcast %22 : vector<1x128xf32> to vector<128x128xf32>
    %24 = arith.addf %21, %23 : vector<128x128xf32>
    %25 = arith.truncf %24 : vector<128x128xf32> to vector<128x128xbf16>
    %c0_9 = arith.constant 0 : index
    %c0_10 = arith.constant 0 : index
    %26 = vector.load %arg4[%c0_9, %c0_10] : memref<128x384xbf16, #tpu.memory_space<vmem>>, vector<128x384xbf16>
    %cst_11 = arith.constant dense<0.000000e+00> : vector<128x384xf32>
    %27 = tpu.matmul %25, %26, %cst_11 {dimension_numbers = #tpu.dot_dimension_numbers<[1], [0], [0], [1], [0, 0, 1, 1], [], []>} : vector<128x128xbf16>, vector<128x384xbf16>, vector<128x384xf32> -> vector<128x384xf32>
    %28 = vector.extract_strided_slice %27 {offsets = [0, 0], sizes = [128, 128], strides = [1, 1]} : vector<128x384xf32> to vector<128x128xf32>
    %29 = arith.truncf %28 : vector<128x128xf32> to vector<128x128xbf16>
    %30 = vector.extract_strided_slice %27 {offsets = [0, 128], sizes = [128, 128], strides = [1, 1]} : vector<128x384xf32> to vector<128x128xf32>
    %31 = arith.truncf %30 : vector<128x128xf32> to vector<128x128xbf16>
    %32 = vector.extract_strided_slice %27 {offsets = [0, 256], sizes = [128, 128], strides = [1, 1]} : vector<128x384xf32> to vector<128x128xf32>
    %33 = arith.truncf %32 : vector<128x128xf32> to vector<128x128xbf16>
    %34 = tpu.iota {dimensions = array<i32: 0>} : vector<64x64xi32>
    %35 = tpu.iota {dimensions = array<i32: 1>} : vector<64x64xi32>
    %36 = arith.cmpi sle, %35, %34 : vector<64x64xi32>
    %37 = vector.extract_strided_slice %29 {offsets = [0, 0], sizes = [64, 32], strides = [1, 1]} : vector<128x128xbf16> to vector<64x32xbf16>
    %38 = vector.extract_strided_slice %31 {offsets = [0, 0], sizes = [64, 32], strides = [1, 1]} : vector<128x128xbf16> to vector<64x32xbf16>
    %39 = vector.extract_strided_slice %33 {offsets = [0, 0], sizes = [64, 32], strides = [1, 1]} : vector<128x128xbf16> to vector<64x32xbf16>
    %cst_12 = arith.constant dense<0.000000e+00> : vector<64x64xf32>
    %40 = tpu.matmul %37, %38, %cst_12 {dimension_numbers = #tpu.dot_dimension_numbers<[1], [1], [0], [0], [0, 0, 1, 0], [], []>} : vector<64x32xbf16>, vector<64x32xbf16>, vector<64x64xf32> -> vector<64x64xf32>
    %cst_13 = arith.constant -1.000000e+30 : f32
    %41 = vector.broadcast %cst_13 : f32 to vector<64x64xf32>
    %42 = arith.select %36, %40, %41 : vector<64x64xi1>, vector<64x64xf32>
    %cst_14 = arith.constant dense<0xFF800000> : vector<64xf32>
    %43 = vector.multi_reduction <maximumf>, %42, %cst_14 [1] : vector<64x64xf32> to vector<64xf32>
    %44 = vector.shape_cast %43 : vector<64xf32> to vector<64x1xf32>
    %45 = vector.broadcast %44 : vector<64x1xf32> to vector<64x64xf32>
    %46 = arith.subf %42, %45 : vector<64x64xf32>
    %47 = math.exp %46 : vector<64x64xf32>
    %cst_15 = arith.constant dense<0.000000e+00> : vector<64xf32>
    %48 = vector.multi_reduction <add>, %47, %cst_15 [1] : vector<64x64xf32> to vector<64xf32>
    %49 = vector.shape_cast %48 : vector<64xf32> to vector<64x1xf32>
    %50 = arith.truncf %47 : vector<64x64xf32> to vector<64x64xbf16>
    %cst_16 = arith.constant dense<0.000000e+00> : vector<64x32xf32>
    %51 = tpu.matmul %50, %39, %cst_16 {dimension_numbers = #tpu.dot_dimension_numbers<[1], [0], [0], [1], [0, 0, 1, 1], [], []>} : vector<64x64xbf16>, vector<64x32xbf16>, vector<64x32xf32> -> vector<64x32xf32>
    %52 = tpu.reciprocal %49 {approx = true} : vector<64x1xf32> -> vector<64x1xf32>
    %53 = vector.broadcast %52 : vector<64x1xf32> to vector<64x32xf32>
    %54 = arith.mulf %51, %53 : vector<64x32xf32>
    %55 = arith.truncf %54 : vector<64x32xf32> to vector<64x32xbf16>
    %56 = vector.extract_strided_slice %29 {offsets = [0, 32], sizes = [64, 32], strides = [1, 1]} : vector<128x128xbf16> to vector<64x32xbf16>
    %57 = vector.extract_strided_slice %31 {offsets = [0, 32], sizes = [64, 32], strides = [1, 1]} : vector<128x128xbf16> to vector<64x32xbf16>
    %58 = vector.extract_strided_slice %33 {offsets = [0, 32], sizes = [64, 32], strides = [1, 1]} : vector<128x128xbf16> to vector<64x32xbf16>
    %cst_17 = arith.constant dense<0.000000e+00> : vector<64x64xf32>
    %59 = tpu.matmul %56, %57, %cst_17 {dimension_numbers = #tpu.dot_dimension_numbers<[1], [1], [0], [0], [0, 0, 1, 0], [], []>} : vector<64x32xbf16>, vector<64x32xbf16>, vector<64x64xf32> -> vector<64x64xf32>
    %cst_18 = arith.constant -1.000000e+30 : f32
    %60 = vector.broadcast %cst_18 : f32 to vector<64x64xf32>
    %61 = arith.select %36, %59, %60 : vector<64x64xi1>, vector<64x64xf32>
    %cst_19 = arith.constant dense<0xFF800000> : vector<64xf32>
    %62 = vector.multi_reduction <maximumf>, %61, %cst_19 [1] : vector<64x64xf32> to vector<64xf32>
    %63 = vector.shape_cast %62 : vector<64xf32> to vector<64x1xf32>
    %64 = vector.broadcast %63 : vector<64x1xf32> to vector<64x64xf32>
    %65 = arith.subf %61, %64 : vector<64x64xf32>
    %66 = math.exp %65 : vector<64x64xf32>
    %cst_20 = arith.constant dense<0.000000e+00> : vector<64xf32>
    %67 = vector.multi_reduction <add>, %66, %cst_20 [1] : vector<64x64xf32> to vector<64xf32>
    %68 = vector.shape_cast %67 : vector<64xf32> to vector<64x1xf32>
    %69 = arith.truncf %66 : vector<64x64xf32> to vector<64x64xbf16>
    %cst_21 = arith.constant dense<0.000000e+00> : vector<64x32xf32>
    %70 = tpu.matmul %69, %58, %cst_21 {dimension_numbers = #tpu.dot_dimension_numbers<[1], [0], [0], [1], [0, 0, 1, 1], [], []>} : vector<64x64xbf16>, vector<64x32xbf16>, vector<64x32xf32> -> vector<64x32xf32>
    %71 = tpu.reciprocal %68 {approx = true} : vector<64x1xf32> -> vector<64x1xf32>
    %72 = vector.broadcast %71 : vector<64x1xf32> to vector<64x32xf32>
    %73 = arith.mulf %70, %72 : vector<64x32xf32>
    %74 = arith.truncf %73 : vector<64x32xf32> to vector<64x32xbf16>
    %75 = vector.extract_strided_slice %29 {offsets = [0, 64], sizes = [64, 32], strides = [1, 1]} : vector<128x128xbf16> to vector<64x32xbf16>
    %76 = vector.extract_strided_slice %31 {offsets = [0, 64], sizes = [64, 32], strides = [1, 1]} : vector<128x128xbf16> to vector<64x32xbf16>
    %77 = vector.extract_strided_slice %33 {offsets = [0, 64], sizes = [64, 32], strides = [1, 1]} : vector<128x128xbf16> to vector<64x32xbf16>
    %cst_22 = arith.constant dense<0.000000e+00> : vector<64x64xf32>
    %78 = tpu.matmul %75, %76, %cst_22 {dimension_numbers = #tpu.dot_dimension_numbers<[1], [1], [0], [0], [0, 0, 1, 0], [], []>} : vector<64x32xbf16>, vector<64x32xbf16>, vector<64x64xf32> -> vector<64x64xf32>
    %cst_23 = arith.constant -1.000000e+30 : f32
    %79 = vector.broadcast %cst_23 : f32 to vector<64x64xf32>
    %80 = arith.select %36, %78, %79 : vector<64x64xi1>, vector<64x64xf32>
    %cst_24 = arith.constant dense<0xFF800000> : vector<64xf32>
    %81 = vector.multi_reduction <maximumf>, %80, %cst_24 [1] : vector<64x64xf32> to vector<64xf32>
    %82 = vector.shape_cast %81 : vector<64xf32> to vector<64x1xf32>
    %83 = vector.broadcast %82 : vector<64x1xf32> to vector<64x64xf32>
    %84 = arith.subf %80, %83 : vector<64x64xf32>
    %85 = math.exp %84 : vector<64x64xf32>
    %cst_25 = arith.constant dense<0.000000e+00> : vector<64xf32>
    %86 = vector.multi_reduction <add>, %85, %cst_25 [1] : vector<64x64xf32> to vector<64xf32>
    %87 = vector.shape_cast %86 : vector<64xf32> to vector<64x1xf32>
    %88 = arith.truncf %85 : vector<64x64xf32> to vector<64x64xbf16>
    %cst_26 = arith.constant dense<0.000000e+00> : vector<64x32xf32>
    %89 = tpu.matmul %88, %77, %cst_26 {dimension_numbers = #tpu.dot_dimension_numbers<[1], [0], [0], [1], [0, 0, 1, 1], [], []>} : vector<64x64xbf16>, vector<64x32xbf16>, vector<64x32xf32> -> vector<64x32xf32>
    %90 = tpu.reciprocal %87 {approx = true} : vector<64x1xf32> -> vector<64x1xf32>
    %91 = vector.broadcast %90 : vector<64x1xf32> to vector<64x32xf32>
    %92 = arith.mulf %89, %91 : vector<64x32xf32>
    %93 = arith.truncf %92 : vector<64x32xf32> to vector<64x32xbf16>
    %94 = vector.extract_strided_slice %29 {offsets = [0, 96], sizes = [64, 32], strides = [1, 1]} : vector<128x128xbf16> to vector<64x32xbf16>
    %95 = vector.extract_strided_slice %31 {offsets = [0, 96], sizes = [64, 32], strides = [1, 1]} : vector<128x128xbf16> to vector<64x32xbf16>
    %96 = vector.extract_strided_slice %33 {offsets = [0, 96], sizes = [64, 32], strides = [1, 1]} : vector<128x128xbf16> to vector<64x32xbf16>
    %cst_27 = arith.constant dense<0.000000e+00> : vector<64x64xf32>
    %97 = tpu.matmul %94, %95, %cst_27 {dimension_numbers = #tpu.dot_dimension_numbers<[1], [1], [0], [0], [0, 0, 1, 0], [], []>} : vector<64x32xbf16>, vector<64x32xbf16>, vector<64x64xf32> -> vector<64x64xf32>
    %cst_28 = arith.constant -1.000000e+30 : f32
    %98 = vector.broadcast %cst_28 : f32 to vector<64x64xf32>
    %99 = arith.select %36, %97, %98 : vector<64x64xi1>, vector<64x64xf32>
    %cst_29 = arith.constant dense<0xFF800000> : vector<64xf32>
    %100 = vector.multi_reduction <maximumf>, %99, %cst_29 [1] : vector<64x64xf32> to vector<64xf32>
    %101 = vector.shape_cast %100 : vector<64xf32> to vector<64x1xf32>
    %102 = vector.broadcast %101 : vector<64x1xf32> to vector<64x64xf32>
    %103 = arith.subf %99, %102 : vector<64x64xf32>
    %104 = math.exp %103 : vector<64x64xf32>
    %cst_30 = arith.constant dense<0.000000e+00> : vector<64xf32>
    %105 = vector.multi_reduction <add>, %104, %cst_30 [1] : vector<64x64xf32> to vector<64xf32>
    %106 = vector.shape_cast %105 : vector<64xf32> to vector<64x1xf32>
    %107 = arith.truncf %104 : vector<64x64xf32> to vector<64x64xbf16>
    %cst_31 = arith.constant dense<0.000000e+00> : vector<64x32xf32>
    %108 = tpu.matmul %107, %96, %cst_31 {dimension_numbers = #tpu.dot_dimension_numbers<[1], [0], [0], [1], [0, 0, 1, 1], [], []>} : vector<64x64xbf16>, vector<64x32xbf16>, vector<64x32xf32> -> vector<64x32xf32>
    %109 = tpu.reciprocal %106 {approx = true} : vector<64x1xf32> -> vector<64x1xf32>
    %110 = vector.broadcast %109 : vector<64x1xf32> to vector<64x32xf32>
    %111 = arith.mulf %108, %110 : vector<64x32xf32>
    %112 = arith.truncf %111 : vector<64x32xf32> to vector<64x32xbf16>
    %113 = tpu.concatenate %55, %74, %93, %112 in 1 : vector<64x32xbf16>, vector<64x32xbf16>, vector<64x32xbf16>, vector<64x32xbf16> -> vector<64x128xbf16>
    %114 = vector.extract_strided_slice %29 {offsets = [64, 0], sizes = [64, 32], strides = [1, 1]} : vector<128x128xbf16> to vector<64x32xbf16>
    %115 = vector.extract_strided_slice %31 {offsets = [64, 0], sizes = [64, 32], strides = [1, 1]} : vector<128x128xbf16> to vector<64x32xbf16>
    %116 = vector.extract_strided_slice %33 {offsets = [64, 0], sizes = [64, 32], strides = [1, 1]} : vector<128x128xbf16> to vector<64x32xbf16>
    %cst_32 = arith.constant dense<0.000000e+00> : vector<64x64xf32>
    %117 = tpu.matmul %114, %115, %cst_32 {dimension_numbers = #tpu.dot_dimension_numbers<[1], [1], [0], [0], [0, 0, 1, 0], [], []>} : vector<64x32xbf16>, vector<64x32xbf16>, vector<64x64xf32> -> vector<64x64xf32>
    %cst_33 = arith.constant -1.000000e+30 : f32
    %118 = vector.broadcast %cst_33 : f32 to vector<64x64xf32>
    %119 = arith.select %36, %117, %118 : vector<64x64xi1>, vector<64x64xf32>
    %cst_34 = arith.constant dense<0xFF800000> : vector<64xf32>
    %120 = vector.multi_reduction <maximumf>, %119, %cst_34 [1] : vector<64x64xf32> to vector<64xf32>
    %121 = vector.shape_cast %120 : vector<64xf32> to vector<64x1xf32>
    %122 = vector.broadcast %121 : vector<64x1xf32> to vector<64x64xf32>
    %123 = arith.subf %119, %122 : vector<64x64xf32>
    %124 = math.exp %123 : vector<64x64xf32>
    %cst_35 = arith.constant dense<0.000000e+00> : vector<64xf32>
    %125 = vector.multi_reduction <add>, %124, %cst_35 [1] : vector<64x64xf32> to vector<64xf32>
    %126 = vector.shape_cast %125 : vector<64xf32> to vector<64x1xf32>
    %127 = arith.truncf %124 : vector<64x64xf32> to vector<64x64xbf16>
    %cst_36 = arith.constant dense<0.000000e+00> : vector<64x32xf32>
    %128 = tpu.matmul %127, %116, %cst_36 {dimension_numbers = #tpu.dot_dimension_numbers<[1], [0], [0], [1], [0, 0, 1, 1], [], []>} : vector<64x64xbf16>, vector<64x32xbf16>, vector<64x32xf32> -> vector<64x32xf32>
    %129 = tpu.reciprocal %126 {approx = true} : vector<64x1xf32> -> vector<64x1xf32>
    %130 = vector.broadcast %129 : vector<64x1xf32> to vector<64x32xf32>
    %131 = arith.mulf %128, %130 : vector<64x32xf32>
    %132 = arith.truncf %131 : vector<64x32xf32> to vector<64x32xbf16>
    %133 = vector.extract_strided_slice %29 {offsets = [64, 32], sizes = [64, 32], strides = [1, 1]} : vector<128x128xbf16> to vector<64x32xbf16>
    %134 = vector.extract_strided_slice %31 {offsets = [64, 32], sizes = [64, 32], strides = [1, 1]} : vector<128x128xbf16> to vector<64x32xbf16>
    %135 = vector.extract_strided_slice %33 {offsets = [64, 32], sizes = [64, 32], strides = [1, 1]} : vector<128x128xbf16> to vector<64x32xbf16>
    %cst_37 = arith.constant dense<0.000000e+00> : vector<64x64xf32>
    %136 = tpu.matmul %133, %134, %cst_37 {dimension_numbers = #tpu.dot_dimension_numbers<[1], [1], [0], [0], [0, 0, 1, 0], [], []>} : vector<64x32xbf16>, vector<64x32xbf16>, vector<64x64xf32> -> vector<64x64xf32>
    %cst_38 = arith.constant -1.000000e+30 : f32
    %137 = vector.broadcast %cst_38 : f32 to vector<64x64xf32>
    %138 = arith.select %36, %136, %137 : vector<64x64xi1>, vector<64x64xf32>
    %cst_39 = arith.constant dense<0xFF800000> : vector<64xf32>
    %139 = vector.multi_reduction <maximumf>, %138, %cst_39 [1] : vector<64x64xf32> to vector<64xf32>
    %140 = vector.shape_cast %139 : vector<64xf32> to vector<64x1xf32>
    %141 = vector.broadcast %140 : vector<64x1xf32> to vector<64x64xf32>
    %142 = arith.subf %138, %141 : vector<64x64xf32>
    %143 = math.exp %142 : vector<64x64xf32>
    %cst_40 = arith.constant dense<0.000000e+00> : vector<64xf32>
    %144 = vector.multi_reduction <add>, %143, %cst_40 [1] : vector<64x64xf32> to vector<64xf32>
    %145 = vector.shape_cast %144 : vector<64xf32> to vector<64x1xf32>
    %146 = arith.truncf %143 : vector<64x64xf32> to vector<64x64xbf16>
    %cst_41 = arith.constant dense<0.000000e+00> : vector<64x32xf32>
    %147 = tpu.matmul %146, %135, %cst_41 {dimension_numbers = #tpu.dot_dimension_numbers<[1], [0], [0], [1], [0, 0, 1, 1], [], []>} : vector<64x64xbf16>, vector<64x32xbf16>, vector<64x32xf32> -> vector<64x32xf32>
    %148 = tpu.reciprocal %145 {approx = true} : vector<64x1xf32> -> vector<64x1xf32>
    %149 = vector.broadcast %148 : vector<64x1xf32> to vector<64x32xf32>
    %150 = arith.mulf %147, %149 : vector<64x32xf32>
    %151 = arith.truncf %150 : vector<64x32xf32> to vector<64x32xbf16>
    %152 = vector.extract_strided_slice %29 {offsets = [64, 64], sizes = [64, 32], strides = [1, 1]} : vector<128x128xbf16> to vector<64x32xbf16>
    %153 = vector.extract_strided_slice %31 {offsets = [64, 64], sizes = [64, 32], strides = [1, 1]} : vector<128x128xbf16> to vector<64x32xbf16>
    %154 = vector.extract_strided_slice %33 {offsets = [64, 64], sizes = [64, 32], strides = [1, 1]} : vector<128x128xbf16> to vector<64x32xbf16>
    %cst_42 = arith.constant dense<0.000000e+00> : vector<64x64xf32>
    %155 = tpu.matmul %152, %153, %cst_42 {dimension_numbers = #tpu.dot_dimension_numbers<[1], [1], [0], [0], [0, 0, 1, 0], [], []>} : vector<64x32xbf16>, vector<64x32xbf16>, vector<64x64xf32> -> vector<64x64xf32>
    %cst_43 = arith.constant -1.000000e+30 : f32
    %156 = vector.broadcast %cst_43 : f32 to vector<64x64xf32>
    %157 = arith.select %36, %155, %156 : vector<64x64xi1>, vector<64x64xf32>
    %cst_44 = arith.constant dense<0xFF800000> : vector<64xf32>
    %158 = vector.multi_reduction <maximumf>, %157, %cst_44 [1] : vector<64x64xf32> to vector<64xf32>
    %159 = vector.shape_cast %158 : vector<64xf32> to vector<64x1xf32>
    %160 = vector.broadcast %159 : vector<64x1xf32> to vector<64x64xf32>
    %161 = arith.subf %157, %160 : vector<64x64xf32>
    %162 = math.exp %161 : vector<64x64xf32>
    %cst_45 = arith.constant dense<0.000000e+00> : vector<64xf32>
    %163 = vector.multi_reduction <add>, %162, %cst_45 [1] : vector<64x64xf32> to vector<64xf32>
    %164 = vector.shape_cast %163 : vector<64xf32> to vector<64x1xf32>
    %165 = arith.truncf %162 : vector<64x64xf32> to vector<64x64xbf16>
    %cst_46 = arith.constant dense<0.000000e+00> : vector<64x32xf32>
    %166 = tpu.matmul %165, %154, %cst_46 {dimension_numbers = #tpu.dot_dimension_numbers<[1], [0], [0], [1], [0, 0, 1, 1], [], []>} : vector<64x64xbf16>, vector<64x32xbf16>, vector<64x32xf32> -> vector<64x32xf32>
    %167 = tpu.reciprocal %164 {approx = true} : vector<64x1xf32> -> vector<64x1xf32>
    %168 = vector.broadcast %167 : vector<64x1xf32> to vector<64x32xf32>
    %169 = arith.mulf %166, %168 : vector<64x32xf32>
    %170 = arith.truncf %169 : vector<64x32xf32> to vector<64x32xbf16>
    %171 = vector.extract_strided_slice %29 {offsets = [64, 96], sizes = [64, 32], strides = [1, 1]} : vector<128x128xbf16> to vector<64x32xbf16>
    %172 = vector.extract_strided_slice %31 {offsets = [64, 96], sizes = [64, 32], strides = [1, 1]} : vector<128x128xbf16> to vector<64x32xbf16>
    %173 = vector.extract_strided_slice %33 {offsets = [64, 96], sizes = [64, 32], strides = [1, 1]} : vector<128x128xbf16> to vector<64x32xbf16>
    %cst_47 = arith.constant dense<0.000000e+00> : vector<64x64xf32>
    %174 = tpu.matmul %171, %172, %cst_47 {dimension_numbers = #tpu.dot_dimension_numbers<[1], [1], [0], [0], [0, 0, 1, 0], [], []>} : vector<64x32xbf16>, vector<64x32xbf16>, vector<64x64xf32> -> vector<64x64xf32>
    %cst_48 = arith.constant -1.000000e+30 : f32
    %175 = vector.broadcast %cst_48 : f32 to vector<64x64xf32>
    %176 = arith.select %36, %174, %175 : vector<64x64xi1>, vector<64x64xf32>
    %cst_49 = arith.constant dense<0xFF800000> : vector<64xf32>
    %177 = vector.multi_reduction <maximumf>, %176, %cst_49 [1] : vector<64x64xf32> to vector<64xf32>
    %178 = vector.shape_cast %177 : vector<64xf32> to vector<64x1xf32>
    %179 = vector.broadcast %178 : vector<64x1xf32> to vector<64x64xf32>
    %180 = arith.subf %176, %179 : vector<64x64xf32>
    %181 = math.exp %180 : vector<64x64xf32>
    %cst_50 = arith.constant dense<0.000000e+00> : vector<64xf32>
    %182 = vector.multi_reduction <add>, %181, %cst_50 [1] : vector<64x64xf32> to vector<64xf32>
    %183 = vector.shape_cast %182 : vector<64xf32> to vector<64x1xf32>
    %184 = arith.truncf %181 : vector<64x64xf32> to vector<64x64xbf16>
    %cst_51 = arith.constant dense<0.000000e+00> : vector<64x32xf32>
    %185 = tpu.matmul %184, %173, %cst_51 {dimension_numbers = #tpu.dot_dimension_numbers<[1], [0], [0], [1], [0, 0, 1, 1], [], []>} : vector<64x64xbf16>, vector<64x32xbf16>, vector<64x32xf32> -> vector<64x32xf32>
    %186 = tpu.reciprocal %183 {approx = true} : vector<64x1xf32> -> vector<64x1xf32>
    %187 = vector.broadcast %186 : vector<64x1xf32> to vector<64x32xf32>
    %188 = arith.mulf %185, %187 : vector<64x32xf32>
    %189 = arith.truncf %188 : vector<64x32xf32> to vector<64x32xbf16>
    %190 = tpu.concatenate %132, %151, %170, %189 in 1 : vector<64x32xbf16>, vector<64x32xbf16>, vector<64x32xbf16>, vector<64x32xbf16> -> vector<64x128xbf16>
    %191 = tpu.concatenate %113, %190 in 0 : vector<64x128xbf16>, vector<64x128xbf16> -> vector<128x128xbf16>
    %c0_52 = arith.constant 0 : index
    %c0_53 = arith.constant 0 : index
    %192 = vector.load %arg5[%c0_52, %c0_53] : memref<128x128xbf16, #tpu.memory_space<vmem>>, vector<128x128xbf16>
    %cst_54 = arith.constant dense<0.000000e+00> : vector<128x128xf32>
    %193 = tpu.matmul %191, %192, %cst_54 {dimension_numbers = #tpu.dot_dimension_numbers<[1], [0], [0], [1], [0, 0, 1, 1], [], []>} : vector<128x128xbf16>, vector<128x128xbf16>, vector<128x128xf32> -> vector<128x128xf32>
    %c0_55 = arith.constant 0 : index
    %c0_56 = arith.constant 0 : index
    %194 = vector.load %arg6[%c0_55, %c0_56] : memref<1x128xf32, #tpu.memory_space<vmem>>, vector<1x128xf32>
    %195 = vector.broadcast %194 : vector<1x128xf32> to vector<128x128xf32>
    %196 = arith.addf %193, %195 : vector<128x128xf32>
    %197 = arith.addf %0, %196 : vector<128x128xf32>
    %cst_57 = arith.constant dense<0.000000e+00> : vector<128xf32>
    %198 = vector.multi_reduction <add>, %197, %cst_57 [1] : vector<128x128xf32> to vector<128xf32>
    %199 = vector.shape_cast %198 : vector<128xf32> to vector<128x1xf32>
    %cst_58 = arith.constant 1.280000e+02 : f32
    %200 = vector.broadcast %cst_58 : f32 to vector<128x1xf32>
    %201 = arith.divf %199, %200 : vector<128x1xf32>
    %202 = arith.mulf %197, %197 : vector<128x128xf32>
    %cst_59 = arith.constant dense<0.000000e+00> : vector<128xf32>
    %203 = vector.multi_reduction <add>, %202, %cst_59 [1] : vector<128x128xf32> to vector<128xf32>
    %204 = vector.shape_cast %203 : vector<128xf32> to vector<128x1xf32>
    %cst_60 = arith.constant 1.280000e+02 : f32
    %205 = vector.broadcast %cst_60 : f32 to vector<128x1xf32>
    %206 = arith.divf %204, %205 : vector<128x1xf32>
    %207 = arith.mulf %201, %201 : vector<128x1xf32>
    %208 = arith.subf %206, %207 : vector<128x1xf32>
    %cst_61 = arith.constant 9.99999974E-6 : f32
    %209 = vector.broadcast %cst_61 : f32 to vector<128x1xf32>
    %210 = arith.addf %208, %209 : vector<128x1xf32>
    %211 = math.rsqrt %210 : vector<128x1xf32>
    %212 = vector.broadcast %201 : vector<128x1xf32> to vector<128x128xf32>
    %213 = arith.subf %197, %212 : vector<128x128xf32>
    %214 = vector.broadcast %211 : vector<128x1xf32> to vector<128x128xf32>
    %215 = arith.mulf %213, %214 : vector<128x128xf32>
    %c0_62 = arith.constant 0 : index
    %c0_63 = arith.constant 0 : index
    %216 = vector.load %arg7[%c0_62, %c0_63] : memref<1x128xf32, #tpu.memory_space<vmem>>, vector<1x128xf32>
    %217 = vector.broadcast %216 : vector<1x128xf32> to vector<128x128xf32>
    %218 = arith.mulf %215, %217 : vector<128x128xf32>
    %c0_64 = arith.constant 0 : index
    %c0_65 = arith.constant 0 : index
    %219 = vector.load %arg8[%c0_64, %c0_65] : memref<1x128xf32, #tpu.memory_space<vmem>>, vector<1x128xf32>
    %220 = vector.broadcast %219 : vector<1x128xf32> to vector<128x128xf32>
    %221 = arith.addf %218, %220 : vector<128x128xf32>
    %222 = arith.truncf %221 : vector<128x128xf32> to vector<128x128xbf16>
    %c0_66 = arith.constant 0 : index
    %c0_67 = arith.constant 0 : index
    %223 = vector.load %arg9[%c0_66, %c0_67] : memref<128x512xbf16, #tpu.memory_space<vmem>>, vector<128x512xbf16>
    %cst_68 = arith.constant dense<0.000000e+00> : vector<128x512xf32>
    %224 = tpu.matmul %222, %223, %cst_68 {dimension_numbers = #tpu.dot_dimension_numbers<[1], [0], [0], [1], [0, 0, 1, 1], [], []>} : vector<128x128xbf16>, vector<128x512xbf16>, vector<128x512xf32> -> vector<128x512xf32>
    %c0_69 = arith.constant 0 : index
    %c0_70 = arith.constant 0 : index
    %225 = vector.load %arg10[%c0_69, %c0_70] : memref<1x512xf32, #tpu.memory_space<vmem>>, vector<1x512xf32>
    %226 = vector.broadcast %225 : vector<1x512xf32> to vector<128x512xf32>
    %227 = arith.addf %224, %226 : vector<128x512xf32>
    %cst_71 = arith.constant 5.000000e-01 : f32
    %228 = vector.broadcast %cst_71 : f32 to vector<128x512xf32>
    %229 = arith.mulf %228, %227 : vector<128x512xf32>
    %230 = arith.mulf %227, %227 : vector<128x512xf32>
    %231 = arith.mulf %230, %227 : vector<128x512xf32>
    %cst_72 = arith.constant 4.471500e-02 : f32
    %232 = vector.broadcast %cst_72 : f32 to vector<128x512xf32>
    %233 = arith.mulf %232, %231 : vector<128x512xf32>
    %234 = arith.addf %227, %233 : vector<128x512xf32>
    %cst_73 = arith.constant 0.797884583 : f32
    %235 = vector.broadcast %cst_73 : f32 to vector<128x512xf32>
    %236 = arith.mulf %235, %234 : vector<128x512xf32>
    %237 = math.tanh %236 : vector<128x512xf32>
    %cst_74 = arith.constant 1.000000e+00 : f32
    %238 = vector.broadcast %cst_74 : f32 to vector<128x512xf32>
    %239 = arith.addf %238, %237 : vector<128x512xf32>
    %240 = arith.mulf %229, %239 : vector<128x512xf32>
    %241 = arith.truncf %240 : vector<128x512xf32> to vector<128x512xbf16>
    %c0_75 = arith.constant 0 : index
    %c0_76 = arith.constant 0 : index
    %242 = vector.load %arg11[%c0_75, %c0_76] : memref<512x128xbf16, #tpu.memory_space<vmem>>, vector<512x128xbf16>
    %cst_77 = arith.constant dense<0.000000e+00> : vector<128x128xf32>
    %243 = tpu.matmul %241, %242, %cst_77 {dimension_numbers = #tpu.dot_dimension_numbers<[1], [0], [0], [1], [0, 0, 1, 1], [], []>} : vector<128x512xbf16>, vector<512x128xbf16>, vector<128x128xf32> -> vector<128x128xf32>
    %c0_78 = arith.constant 0 : index
    %c0_79 = arith.constant 0 : index
    %244 = vector.load %arg12[%c0_78, %c0_79] : memref<1x128xf32, #tpu.memory_space<vmem>>, vector<1x128xf32>
    %245 = vector.broadcast %244 : vector<1x128xf32> to vector<128x128xf32>
    %246 = arith.addf %243, %245 : vector<128x128xf32>
    %247 = arith.addf %197, %246 : vector<128x128xf32>
    %c0_80 = arith.constant 0 : index
    %c0_81 = arith.constant 0 : index
    %248 = vector.load %arg13[%c0_80, %c0_81] : memref<128x128xf32, #tpu.memory_space<vmem>>, vector<128x128xf32>
    tpu.vector_store %arg13[%c0_80, %c0_81], %247 {strides = array<i32>} : memref<128x128xf32, #tpu.memory_space<vmem>>, vector<128x128xf32>,
    return
  }
  func.func @transform_0(%arg0: i32) -> (i32, i32) {
    %c0_i32 = arith.constant 0 : i32
    %c0_i32_0 = arith.constant 0 : i32
    return %arg0, %c0_i32 : i32, i32
  }
  func.func @transform_1(%arg0: i32) -> (i32, i32) {
    %c0_i32 = arith.constant 0 : i32
    %c0_i32_0 = arith.constant 0 : i32
    %c0_i32_1 = arith.constant 0 : i32
    return %c0_i32, %c0_i32_0 : i32, i32
  }
  func.func @transform_2(%arg0: i32) -> (i32, i32) {
    %c0_i32 = arith.constant 0 : i32
    %c0_i32_0 = arith.constant 0 : i32
    %c0_i32_1 = arith.constant 0 : i32
    return %c0_i32, %c0_i32_0 : i32, i32
  }
  func.func @transform_3(%arg0: i32) -> (i32, i32) {
    %c0_i32 = arith.constant 0 : i32
    %c0_i32_0 = arith.constant 0 : i32
    %c0_i32_1 = arith.constant 0 : i32
    return %c0_i32, %c0_i32_0 : i32, i32
  }
  func.func @transform_4(%arg0: i32) -> (i32, i32) {
    %c0_i32 = arith.constant 0 : i32
    %c0_i32_0 = arith.constant 0 : i32
    %c0_i32_1 = arith.constant 0 : i32
    return %c0_i32, %c0_i32_0 : i32, i32
  }
  func.func @transform_5(%arg0: i32) -> (i32, i32) {
    %c0_i32 = arith.constant 0 : i32
    %c0_i32_0 = arith.constant 0 : i32
    %c0_i32_1 = arith.constant 0 : i32
    return %c0_i32, %c0_i32_0 : i32, i32
  }
  func.func @transform_6(%arg0: i32) -> (i32, i32) {
    %c0_i32 = arith.constant 0 : i32
    %c0_i32_0 = arith.constant 0 : i32
    %c0_i32_1 = arith.constant 0 : i32
    return %c0_i32, %c0_i32_0 : i32, i32
  }
  func.func @transform_7(%arg0: i32) -> (i32, i32) {
    %c0_i32 = arith.constant 0 : i32
    %c0_i32_0 = arith.constant 0 : i32
    %c0_i32_1 = arith.constant 0 : i32
    return %c0_i32, %c0_i32_0 : i32, i32
  }
  func.func @transform_8(%arg0: i32) -> (i32, i32) {
    %c0_i32 = arith.constant 0 : i32
    %c0_i32_0 = arith.constant 0 : i32
    %c0_i32_1 = arith.constant 0 : i32
    return %c0_i32, %c0_i32_0 : i32, i32
  }
  func.func @transform_9(%arg0: i32) -> (i32, i32) {
    %c0_i32 = arith.constant 0 : i32
    %c0_i32_0 = arith.constant 0 : i32
    %c0_i32_1 = arith.constant 0 : i32
    return %c0_i32, %c0_i32_0 : i32, i32
  }
  func.func @transform_10(%arg0: i32) -> (i32, i32) {
    %c0_i32 = arith.constant 0 : i32
    %c0_i32_0 = arith.constant 0 : i32
    %c0_i32_1 = arith.constant 0 : i32
    return %c0_i32, %c0_i32_0 : i32, i32
  }
  func.func @transform_11(%arg0: i32) -> (i32, i32) {
    %c0_i32 = arith.constant 0 : i32
    %c0_i32_0 = arith.constant 0 : i32
    %c0_i32_1 = arith.constant 0 : i32
    return %c0_i32, %c0_i32_0 : i32, i32
  }
  func.func @transform_12(%arg0: i32) -> (i32, i32) {
    %c0_i32 = arith.constant 0 : i32
    %c0_i32_0 = arith.constant 0 : i32
    return %arg0, %c0_i32 : i32, i32
  }
}

</mosaic_0001>

<llo_original>
// kernel: tpu_custom_call.1
$region0: #{tpu_custom_call.1}
  #allocation0 [shape = 'u32[]', space=smem, size = 0x4, offset = 0x4, fixed_abs, tag = 'smem constant byte address 0x4 - core index']
  #allocation1 [shape = 'u32[144,128]{1,0:T(1,128)}', space=vmem, size = 0x12000, scoped, tag = 'internal scratch']
  %s0 = inlined_call_operand.hbm [shape: f32[128,128], index: 0, kind: input, shape index: {}]
  %s1 = inlined_call_operand.vmem [shape: f32[1,128], index: 1, kind: input, shape index: {}]
  %s2 = inlined_call_operand.vmem [shape: f32[1,128], index: 2, kind: input, shape index: {}]
  %s3 = inlined_call_operand.hbm [shape: bf16[128,384], index: 3, kind: input, shape index: {}]
  %s4 = inlined_call_operand.hbm [shape: bf16[128,128], index: 4, kind: input, shape index: {}]
  %s5 = inlined_call_operand.vmem [shape: f32[1,128], index: 5, kind: input, shape index: {}]
  %s6 = inlined_call_operand.vmem [shape: f32[1,128], index: 6, kind: input, shape index: {}]
  %s7 = inlined_call_operand.vmem [shape: f32[1,128], index: 7, kind: input, shape index: {}]
  %s8 = inlined_call_operand.hbm [shape: bf16[128,512], index: 8, kind: input, shape index: {}]
  %s9 = inlined_call_operand.vmem [shape: f32[1,512], index: 9, kind: input, shape index: {}]
  %s10 = inlined_call_operand.hbm [shape: bf16[512,128], index: 10, kind: input, shape index: {}]
  %s11 = inlined_call_operand.vmem [shape: f32[1,128], index: 11, kind: input, shape index: {}]
  %s12 = inlined_call_operand.hbm [shape: f32[128,128], index: 12, kind: output, shape index: {}]
  %s13 = sld [smem:[#allocation0]]
  $region78: #{tpu_custom_call.1} parent=0
    _
  %s15 = ssub.s32 1, %s13
  %s16 = scalar_select 0, %s15, %s13
  $region1: #{tpu_custom_call.1} parent=0
    #allocation2 [shape = 'u8[65536]{0}', space=vmem, size = 0x10000, scoped, tag = 'input window, operand 0, single buffered']
    #allocation3 [shape = 's32[1]{0}', space=sflag, size = 0x4, scoped, tag = 'scoped memory for tpu_custom_call.1']
    #allocation4 [shape = 's32[1]{0}', space=sflag, size = 0x4, scoped, tag = 'scoped memory for tpu_custom_call.1']
    #allocation5 [shape = 'u8[98304]{0}', space=vmem, size = 0x18000, scoped, tag = 'input window, operand 3, single buffered']
    #allocation6 [shape = 's32[1]{0}', space=sflag, size = 0x4, scoped, tag = 'scoped memory for tpu_custom_call.1']
    #allocation7 [shape = 'u8[32768]{0}', space=vmem, size = 0x8000, scoped, tag = 'input window, operand 4, single buffered']
    #allocation8 [shape = 'u8[131072]{0}', space=vmem, size = 0x20000, scoped, tag = 'input window, operand 8, single buffered']
    #allocation9 [shape = 's32[1]{0}', space=sflag, size = 0x4, scoped, tag = 'scoped memory for tpu_custom_call.1']
    #allocation10 [shape = 'u8[131072]{0}', space=vmem, size = 0x20000, scoped, tag = 'input window, operand 10, single buffered']
    #allocation11 [shape = 'u8[65536]{0}', space=vmem, size = 0x10000, scoped, tag = 'output window, operand 0, single buffered']
    %17 = vsyncpa [#allocation3], 0
    %18 = vsyncpa [#allocation6], 0
    %19 = vsyncpa [#allocation9], 0
    %20 = vsyncpa [#allocation4], 0
    // Predicated region
    $region2: #{tpu_custom_call.1} parent=1 // pred_check
      _
    $region3: #{tpu_custom_call.1} parent=1 // pred_check_branch
      %22 = sbr.rel (0) target = $region5
    $region4: #{tpu_custom_call.1} parent=1 // pred_region
      %s24 = ssub.s32 2048, 2048
      %25 = vsyncadd [#allocation3], %s24
      %s26 = sshll.u32 [#allocation2], 4
      %s27 = int_to_ptr.vmem [resolvable:$true] %s26
      %32 = dma.hbm_to_vmem [thread:$0]  %s0, 2048, %s27, [#allocation3], 128, 128, 8
    $region5: #{tpu_custom_call.1} parent=1 // pred_fallthru
      _
    // Predicated region
    $region6: #{tpu_custom_call.1} parent=1 // pred_check
      _
    $region7: #{tpu_custom_call.1} parent=1 // pred_check_branch
      %34 = sbr.rel (0) target = $region9
    $region8: #{tpu_custom_call.1} parent=1 // pred_region
      _
    $region9: #{tpu_custom_call.1} parent=1 // pred_fallthru
      _
    // Predicated region
    $region10: #{tpu_custom_call.1} parent=1 // pred_check
      _
    $region11: #{tpu_custom_call.1} parent=1 // pred_check_branch
      %36 = sbr.rel (0) target = $region13
    $region12: #{tpu_custom_call.1} parent=1 // pred_region
      _
    $region13: #{tpu_custom_call.1} parent=1 // pred_fallthru
      _
    // Predicated region
    $region14: #{tpu_custom_call.1} parent=1 // pred_check
      _
    $region15: #{tpu_custom_call.1} parent=1 // pred_check_branch
      %38 = sbr.rel (0) target = $region17
    $region16: #{tpu_custom_call.1} parent=1 // pred_region
      %s40 = ssub.s32 3072, 3072
      %41 = vsyncadd [#allocation6], %s40
      %s42 = sshll.u32 [#allocation5], 4
      %s43 = int_to_ptr.vmem [resolvable:$true] %s42
      %48 = dma.hbm_to_vmem [thread:$0]  %s3, 3072, %s43, [#allocation6], 192, 192, 12
    $region17: #{tpu_custom_call.1} parent=1 // pred_fallthru
      _
    // Predicated region
    $region18: #{tpu_custom_call.1} parent=1 // pred_check
      _
    $region19: #{tpu_custom_call.1} parent=1 // pred_check_branch
      %50 = sbr.rel (0) target = $region21
    $region20: #{tpu_custom_call.1} parent=1 // pred_region
      %s52 = ssub.s32 1024, 1024
      %53 = vsyncadd [#allocation6], %s52
      %s54 = sshll.u32 [#allocation7], 4
      %s55 = int_to_ptr.vmem [resolvable:$true] %s54
      %60 = dma.hbm_to_vmem [thread:$0]  %s4, 1024, %s55, [#allocation6], 64, 64, 4
    $region21: #{tpu_custom_call.1} parent=1 // pred_fallthru
      _
    // Predicated region
    $region22: #{tpu_custom_call.1} parent=1 // pred_check
      _
    $region23: #{tpu_custom_call.1} parent=1 // pred_check_branch
      %62 = sbr.rel (0) target = $region25
    $region24: #{tpu_custom_call.1} parent=1 // pred_region
      _
    $region25: #{tpu_custom_call.1} parent=1 // pred_fallthru
      _
    // Predicated region
    $region26: #{tpu_custom_call.1} parent=1 // pred_check
      _
    $region27: #{tpu_custom_call.1} parent=1 // pred_check_branch
      %64 = sbr.rel (0) target = $region29
    $region28: #{tpu_custom_call.1} parent=1 // pred_region
      _
    $region29: #{tpu_custom_call.1} parent=1 // pred_fallthru
      _
    // Predicated region
    $region30: #{tpu_custom_call.1} parent=1 // pred_check
      _
    $region31: #{tpu_custom_call.1} parent=1 // pred_check_branch
      %66 = sbr.rel (0) target = $region33
    $region32: #{tpu_custom_call.1} parent=1 // pred_region
      _
    $region33: #{tpu_custom_call.1} parent=1 // pred_fallthru
      _
    // Predicated region
    $region34: #{tpu_custom_call.1} parent=1 // pred_check
      _
    $region35: #{tpu_custom_call.1} parent=1 // pred_check_branch
      %68 = sbr.rel (0) target = $region37
    $region36: #{tpu_custom_call.1} parent=1 // pred_region
      %s70 = ssub.s32 4096, 4096
      %71 = vsyncadd [#allocation9], %s70
      %s72 = sshll.u32 [#allocation8], 4
      %s73 = int_to_ptr.vmem [resolvable:$true] %s72
      %78 = dma.hbm_to_vmem [thread:$0]  %s8, 4096, %s73, [#allocation9], 256, 256, 16
    $region37: #{tpu_custom_call.1} parent=1 // pred_fallthru
      _
    // Predicated region
    $region38: #{tpu_custom_call.1} parent=1 // pred_check
      _
    $region39: #{tpu_custom_call.1} parent=1 // pred_check_branch
      %80 = sbr.rel (0) target = $region41
    $region40: #{tpu_custom_call.1} parent=1 // pred_region
      _
    $region41: #{tpu_custom_call.1} parent=1 // pred_fallthru
      _
    // Predicated region
    $region42: #{tpu_custom_call.1} parent=1 // pred_check
      _
    $region43: #{tpu_custom_call.1} parent=1 // pred_check_branch
      %82 = sbr.rel (0) target = $region45
    $region44: #{tpu_custom_call.1} parent=1 // pred_region
      %s84 = ssub.s32 4096, 4096
      %85 = vsyncadd [#allocation9], %s84
      %s86 = sshll.u32 [#allocation10], 4
      %s87 = int_to_ptr.vmem [resolvable:$true] %s86
      %92 = dma.hbm_to_vmem [thread:$0]  %s10, 4096, %s87, [#allocation9], 64, 64, 4
    $region45: #{tpu_custom_call.1} parent=1 // pred_fallthru
      _
    // Predicated region
    $region46: #{tpu_custom_call.1} parent=1 // pred_check
      _
    $region47: #{tpu_custom_call.1} parent=1 // pred_check_branch
      %94 = sbr.rel (0) target = $region49
    $region48: #{tpu_custom_call.1} parent=1 // pred_region
      _
    $region49: #{tpu_custom_call.1} parent=1 // pred_fallthru
      _
    // Predicated region
    $region50: #{tpu_custom_call.1} parent=1 // pred_check
      _
    $region51: #{tpu_custom_call.1} parent=1 // pred_check_branch
      %96 = sbr.rel (0) target = $region53
    $region52: #{tpu_custom_call.1} parent=1 // pred_region
      %97 = dma.done [#allocation3], 2048
    $region53: #{tpu_custom_call.1} parent=1 // pred_fallthru
      _
    // Predicated region
    $region54: #{tpu_custom_call.1} parent=1 // pred_check
      _
    $region55: #{tpu_custom_call.1} parent=1 // pred_check_branch
      %99 = sbr.rel (0) target = $region57
    $region56: #{tpu_custom_call.1} parent=1 // pred_region
      %100 = dma.done [#allocation6], 3072
    $region57: #{tpu_custom_call.1} parent=1 // pred_fallthru
      _
    // Predicated region
    $region58: #{tpu_custom_call.1} parent=1 // pred_check
      _
    $region59: #{tpu_custom_call.1} parent=1 // pred_check_branch
      %102 = sbr.rel (0) target = $region61
    $region60: #{tpu_custom_call.1} parent=1 // pred_region
      %103 = dma.done [#allocation6], 1024
    $region61: #{tpu_custom_call.1} parent=1 // pred_fallthru
      _
    // Predicated region
    $region62: #{tpu_custom_call.1} parent=1 // pred_check
      _
    $region63: #{tpu_custom_call.1} parent=1 // pred_check_branch
      %105 = sbr.rel (0) target = $region65
    $region64: #{tpu_custom_call.1} parent=1 // pred_region
      %106 = dma.done [#allocation9], 4096
    $region65: #{tpu_custom_call.1} parent=1 // pred_fallthru
      _
    // Predicated region
    $region66: #{tpu_custom_call.1} parent=1 // pred_check
      _
    $region67: #{tpu_custom_call.1} parent=1 // pred_check_branch
      %108 = sbr.rel (0) target = $region69
    $region68: #{tpu_custom_call.1} parent=1 // pred_region
      %109 = dma.done [#allocation9], 4096
    $region69: #{tpu_custom_call.1} parent=1 // pred_fallthru
      _
    %v111 = vld [vmem:[#allocation2] sm:$0xff]
    %v112 = vld [vmem:[#allocation2 + $0x8] sm:$0xff]
    %v113 = vld [vmem:[#allocation2 + $0x10] sm:$0xff]
    %v114 = vld [vmem:[#allocation2 + $0x18] sm:$0xff]
    %v115 = vld [vmem:[#allocation2 + $0x20] sm:$0xff]
    %v116 = vld [vmem:[#allocation2 + $0x28] sm:$0xff]
    %v117 = vld [vmem:[#allocation2 + $0x30] sm:$0xff]
    %v118 = vld [vmem:[#allocation2 + $0x38] sm:$0xff]
    %v119 = vld [vmem:[#allocation2 + $0x40] sm:$0xff]
    %v120 = vld [vmem:[#allocation2 + $0x48] sm:$0xff]
    %v121 = vld [vmem:[#allocation2 + $0x50] sm:$0xff]
    %v122 = vld [vmem:[#allocation2 + $0x58] sm:$0xff]
    %v123 = vld [vmem:[#allocation2 + $0x60] sm:$0xff]
    %v124 = vld [vmem:[#allocation2 + $0x68] sm:$0xff]
    %v125 = vld [vmem:[#allocation2 + $0x70] sm:$0xff]
    %v126 = vld [vmem:[#allocation2 + $0x78] sm:$0xff]
    %127 = vadd.xlane.f32.xlu0 %v111
    %v128 = vpop.xlane.xlu0 %127
    %129 = vadd.xlane.f32.xlu0 %v112
    %v130 = vpop.xlane.xlu0 %129
    %131 = vadd.xlane.f32.xlu0 %v113
    %v132 = vpop.xlane.xlu0 %131
    %133 = vadd.xlane.f32.xlu0 %v114
    %v134 = vpop.xlane.xlu0 %133
    %135 = vadd.xlane.f32.xlu0 %v115
    %v136 = vpop.xlane.xlu0 %135
    %137 = vadd.xlane.f32.xlu0 %v116
    %v138 = vpop.xlane.xlu0 %137
    %139 = vadd.xlane.f32.xlu0 %v117
    %v140 = vpop.xlane.xlu0 %139
    %141 = vadd.xlane.f32.xlu0 %v118
    %v142 = vpop.xlane.xlu0 %141
    %143 = vadd.xlane.f32.xlu0 %v119
    %v144 = vpop.xlane.xlu0 %143
    %145 = vadd.xlane.f32.xlu0 %v120
    %v146 = vpop.xlane.xlu0 %145
    %147 = vadd.xlane.f32.xlu0 %v121
    %v148 = vpop.xlane.xlu0 %147
    %149 = vadd.xlane.f32.xlu0 %v122
    %v150 = vpop.xlane.xlu0 %149
    %151 = vadd.xlane.f32.xlu0 %v123
    %v152 = vpop.xlane.xlu0 %151
    %153 = vadd.xlane.f32.xlu0 %v124
    %v154 = vpop.xlane.xlu0 %153
    %155 = vadd.xlane.f32.xlu0 %v125
    %v156 = vpop.xlane.xlu0 %155
    %157 = vadd.xlane.f32.xlu0 %v126
    %v158 = vpop.xlane.xlu0 %157
    %v159 = vrcp.pop 128.0
    %v160 = vmul.f32 %v128, %v159
    %v161 = vmul.f32 %v130, %v159
    %v162 = vmul.f32 %v132, %v159
    %v163 = vmul.f32 %v134, %v159
    %v164 = vmul.f32 %v136, %v159
    %v165 = vmul.f32 %v138, %v159
    %v166 = vmul.f32 %v140, %v159
    %v167 = vmul.f32 %v142, %v159
    %v168 = vmul.f32 %v144, %v159
    %v169 = vmul.f32 %v146, %v159
    %v170 = vmul.f32 %v148, %v159
    %v171 = vmul.f32 %v150, %v159
    %v172 = vmul.f32 %v152, %v159
    %v173 = vmul.f32 %v154, %v159
    %v174 = vmul.f32 %v156, %v159
    %v175 = vmul.f32 %v158, %v159
    %v176 = vmul.f32 %v111, %v111
    %v177 = vmul.f32 %v112, %v112
    %v178 = vmul.f32 %v113, %v113
    %v179 = vmul.f32 %v114, %v114
    %v180 = vmul.f32 %v115, %v115
    %v181 = vmul.f32 %v116, %v116
    %v182 = vmul.f32 %v117, %v117
    %v183 = vmul.f32 %v118, %v118
    %v184 = vmul.f32 %v119, %v119
    %v185 = vmul.f32 %v120, %v120
    %v186 = vmul.f32 %v121, %v121
    %v187 = vmul.f32 %v122, %v122
    %v188 = vmul.f32 %v123, %v123
    %v189 = vmul.f32 %v124, %v124
    %v190 = vmul.f32 %v125, %v125
    %v191 = vmul.f32 %v126, %v126
    %192 = vadd.xlane.f32.xlu0 %v176
    %v193 = vpop.xlane.xlu0 %192
    %194 = vadd.xlane.f32.xlu0 %v177
    %v195 = vpop.xlane.xlu0 %194
    %196 = vadd.xlane.f32.xlu0 %v178
    %v197 = vpop.xlane.xlu0 %196
    %198 = vadd.xlane.f32.xlu0 %v179
    %v199 = vpop.xlane.xlu0 %198
    %200 = vadd.xlane.f32.xlu0 %v180
    %v201 = vpop.xlane.xlu0 %200
    %202 = vadd.xlane.f32.xlu0 %v181
    %v203 = vpop.xlane.xlu0 %202
    %204 = vadd.xlane.f32.xlu0 %v182
    %v205 = vpop.xlane.xlu0 %204
    %206 = vadd.xlane.f32.xlu0 %v183
    %v207 = vpop.xlane.xlu0 %206
    %208 = vadd.xlane.f32.xlu0 %v184
    %v209 = vpop.xlane.xlu0 %208
    %210 = vadd.xlane.f32.xlu0 %v185
    %v211 = vpop.xlane.xlu0 %210
    %212 = vadd.xlane.f32.xlu0 %v186
    %v213 = vpop.xlane.xlu0 %212
    %214 = vadd.xlane.f32.xlu0 %v187
    %v215 = vpop.xlane.xlu0 %214
    %216 = vadd.xlane.f32.xlu0 %v188
    %v217 = vpop.xlane.xlu0 %216
    %218 = vadd.xlane.f32.xlu0 %v189
    %v219 = vpop.xlane.xlu0 %218
    %220 = vadd.xlane.f32.xlu0 %v190
    %v221 = vpop.xlane.xlu0 %220
    %222 = vadd.xlane.f32.xlu0 %v191
    %v223 = vpop.xlane.xlu0 %222
    %v224 = vmul.f32 %v193, %v159
    %v225 = vmul.f32 %v195, %v159
    %v226 = vmul.f32 %v197, %v159
    %v227 = vmul.f32 %v199, %v159
    %v228 = vmul.f32 %v201, %v159
    %v229 = vmul.f32 %v203, %v159
    %v230 = vmul.f32 %v205, %v159
    %v231 = vmul.f32 %v207, %v159
    %v232 = vmul.f32 %v209, %v159
    %v233 = vmul.f32 %v211, %v159
    %v234 = vmul.f32 %v213, %v159
    %v235 = vmul.f32 %v215, %v159
    %v236 = vmul.f32 %v217, %v159
    %v237 = vmul.f32 %v219, %v159
    %v238 = vmul.f32 %v221, %v159
    %v239 = vmul.f32 %v223, %v159
    %v240 = vmul.f32 %v160, %v160
    %v241 = vmul.f32 %v161, %v161
    %v242 = vmul.f32 %v162, %v162
    %v243 = vmul.f32 %v163, %v163
    %v244 = vmul.f32 %v164, %v164
    %v245 = vmul.f32 %v165, %v165
    %v246 = vmul.f32 %v166, %v166
    %v247 = vmul.f32 %v167, %v167
    %v248 = vmul.f32 %v168, %v168
    %v249 = vmul.f32 %v169, %v169
    %v250 = vmul.f32 %v170, %v170
    %v251 = vmul.f32 %v171, %v171
    %v252 = vmul.f32 %v172, %v172
    %v253 = vmul.f32 %v173, %v173
    %v254 = vmul.f32 %v174, %v174
    %v255 = vmul.f32 %v175, %v175
    %v256 = vsub.f32 %v224, %v240
    %v257 = vsub.f32 %v225, %v241
    %v258 = vsub.f32 %v226, %v242
    %v259 = vsub.f32 %v227, %v243
    %v260 = vsub.f32 %v228, %v244
    %v261 = vsub.f32 %v229, %v245
    %v262 = vsub.f32 %v230, %v246
    %v263 = vsub.f32 %v231, %v247
    %v264 = vsub.f32 %v232, %v248
    %v265 = vsub.f32 %v233, %v249
    %v266 = vsub.f32 %v234, %v250
    %v267 = vsub.f32 %v235, %v251
    %v268 = vsub.f32 %v236, %v252
    %v269 = vsub.f32 %v237, %v253
    %v270 = vsub.f32 %v238, %v254
    %v271 = vsub.f32 %v239, %v255
    %v272 = vadd.f32 %v256, 1e-05
    %v273 = vadd.f32 %v257, 1e-05
    %v274 = vadd.f32 %v258, 1e-05
    %v275 = vadd.f32 %v259, 1e-05
    %v276 = vadd.f32 %v260, 1e-05
    %v277 = vadd.f32 %v261, 1e-05
    %v278 = vadd.f32 %v262, 1e-05
    %v279 = vadd.f32 %v263, 1e-05
    %v280 = vadd.f32 %v264, 1e-05
    %v281 = vadd.f32 %v265, 1e-05
    %v282 = vadd.f32 %v266, 1e-05
    %v283 = vadd.f32 %v267, 1e-05
    %v284 = vadd.f32 %v268, 1e-05
    %v285 = vadd.f32 %v269, 1e-05
    %v286 = vadd.f32 %v270, 1e-05
    %v287 = vadd.f32 %v271, 1e-05
    %v288 = vrsqrt.pop %v272
    %v289 = vrsqrt.pop %v273
    %v290 = vrsqrt.pop %v274
    %v291 = vrsqrt.pop %v275
    %v292 = vrsqrt.pop %v276
    %v293 = vrsqrt.pop %v277
    %v294 = vrsqrt.pop %v278
    %v295 = vrsqrt.pop %v279
    %v296 = vrsqrt.pop %v280
    %v297 = vrsqrt.pop %v281
    %v298 = vrsqrt.pop %v282
    %v299 = vrsqrt.pop %v283
    %v300 = vrsqrt.pop %v284
    %v301 = vrsqrt.pop %v285
    %v302 = vrsqrt.pop %v286
    %v303 = vrsqrt.pop %v287
    %v304 = vsub.f32 %v111, %v160
    %v305 = vsub.f32 %v112, %v161
    %v306 = vsub.f32 %v113, %v162
    %v307 = vsub.f32 %v114, %v163
    %v308 = vsub.f32 %v115, %v164
    %v309 = vsub.f32 %v116, %v165
    %v310 = vsub.f32 %v117, %v166
    %v311 = vsub.f32 %v118, %v167
    %v312 = vsub.f32 %v119, %v168
    %v313 = vsub.f32 %v120, %v169
    %v314 = vsub.f32 %v121, %v170
    %v315 = vsub.f32 %v122, %v171
    %v316 = vsub.f32 %v123, %v172
    %v317 = vsub.f32 %v124, %v173
    %v318 = vsub.f32 %v125, %v174
    %v319 = vsub.f32 %v126, %v175
    %v320 = vmul.f32 %v304, %v288
    %v321 = vmul.f32 %v305, %v289
    %v322 = vmul.f32 %v306, %v290
    %v323 = vmul.f32 %v307, %v291
    %v324 = vmul.f32 %v308, %v292
    %v325 = vmul.f32 %v309, %v293
    %v326 = vmul.f32 %v310, %v294
    %v327 = vmul.f32 %v311, %v295
    %v328 = vmul.f32 %v312, %v296
    %v329 = vmul.f32 %v313, %v297
    %v330 = vmul.f32 %v314, %v298
    %v331 = vmul.f32 %v315, %v299
    %v332 = vmul.f32 %v316, %v300
    %v333 = vmul.f32 %v317, %v301
    %v334 = vmul.f32 %v318, %v302
    %v335 = vmul.f32 %v319, %v303
    %v336 = vld [vmem:[%s1] sm:$0x1]
    %v338 = vlaneseq
    %v339 = vshrl.u32 %v338, 7
    %v340 = vsub.s32 0, %v339
    %v341 = vrot.slane %v336, %v340
    %v343 = vmul.f32 %v320, %v341
    %v344 = vmul.f32 %v321, %v341
    %v345 = vmul.f32 %v322, %v341
    %v346 = vmul.f32 %v323, %v341
    %v347 = vmul.f32 %v324, %v341
    %v348 = vmul.f32 %v325, %v341
    %v349 = vmul.f32 %v326, %v341
    %v350 = vmul.f32 %v327, %v341
    %v351 = vmul.f32 %v328, %v341
    %v352 = vmul.f32 %v329, %v341
    %v353 = vmul.f32 %v330, %v341
    %v354 = vmul.f32 %v331, %v341
    %v355 = vmul.f32 %v332, %v341
    %v356 = vmul.f32 %v333, %v341
    %v357 = vmul.f32 %v334, %v341
    %v358 = vmul.f32 %v335, %v341
    %v359 = vld [vmem:[%s2] sm:$0x1]
    %v361 = vlaneseq
    %v362 = vshrl.u32 %v361, 7
    %v363 = vsub.s32 0, %v362
    %v364 = vrot.slane %v359, %v363
    %v366 = vadd.f32 %v343, %v364
    %v367 = vadd.f32 %v344, %v364
    %v368 = vadd.f32 %v345, %v364
    %v369 = vadd.f32 %v346, %v364
    %v370 = vadd.f32 %v347, %v364
    %v371 = vadd.f32 %v348, %v364
    %v372 = vadd.f32 %v349, %v364
    %v373 = vadd.f32 %v350, %v364
    %v374 = vadd.f32 %v351, %v364
    %v375 = vadd.f32 %v352, %v364
    %v376 = vadd.f32 %v353, %v364
    %v377 = vadd.f32 %v354, %v364
    %v378 = vadd.f32 %v355, %v364
    %v379 = vadd.f32 %v356, %v364
    %v380 = vadd.f32 %v357, %v364
    %v381 = vadd.f32 %v358, %v364
    %v382 = vpack.c.bf16 %v367, %v366
    %v383 = vpack.c.bf16 %v369, %v368
    %v384 = vpack.c.bf16 %v371, %v370
    %v385 = vpack.c.bf16 %v373, %v372
    %v386 = vpack.c.bf16 %v375, %v374
    %v387 = vpack.c.bf16 %v377, %v376
    %v388 = vpack.c.bf16 %v379, %v378
    %v389 = vpack.c.bf16 %v381, %v380
    %v390 = vld [vmem:[#allocation5] sm:$0xff]
    %v391 = vld [vmem:[#allocation5 + $0x8] sm:$0xf]
    %v392 = vld [vmem:[#allocation5 + $0xc] sm:$0xff]
    %v393 = vld [vmem:[#allocation5 + $0x14] sm:$0xf]
    %v394 = vld [vmem:[#allocation5 + $0x18] sm:$0xff]
    %v395 = vld [vmem:[#allocation5 + $0x20] sm:$0xf]
    %v396 = vld [vmem:[#allocation5 + $0x24] sm:$0xff]
    %v397 = vld [vmem:[#allocation5 + $0x2c] sm:$0xf]
    %v398 = vld [vmem:[#allocation5 + $0x30] sm:$0xff]
    %v399 = vld [vmem:[#allocation5 + $0x38] sm:$0xf]
    %v400 = vld [vmem:[#allocation5 + $0x3c] sm:$0xff]
    %v401 = vld [vmem:[#allocation5 + $0x44] sm:$0xf]
    %v402 = vld [vmem:[#allocation5 + $0x48] sm:$0xff]
    %v403 = vld [vmem:[#allocation5 + $0x50] sm:$0xf]
    %v404 = vld [vmem:[#allocation5 + $0x54] sm:$0xff]
    %v405 = vld [vmem:[#allocation5 + $0x5c] sm:$0xf]
    %v406 = vld [vmem:[#allocation5 + $0x60] sm:$0xff]
    %v407 = vld [vmem:[#allocation5 + $0x68] sm:$0xf]
    %v408 = vld [vmem:[#allocation5 + $0x6c] sm:$0xff]
    %v409 = vld [vmem:[#allocation5 + $0x74] sm:$0xf]
    %v410 = vld [vmem:[#allocation5 + $0x78] sm:$0xff]
    %v411 = vld [vmem:[#allocation5 + $0x80] sm:$0xf]
    %v412 = vld [vmem:[#allocation5 + $0x84] sm:$0xff]
    %v413 = vld [vmem:[#allocation5 + $0x8c] sm:$0xf]
    %v414 = vld [vmem:[#allocation5 + $0x90] sm:$0xff]
    %v415 = vld [vmem:[#allocation5 + $0x98] sm:$0xf]
    %v416 = vld [vmem:[#allocation5 + $0x9c] sm:$0xff]
    %v417 = vld [vmem:[#allocation5 + $0xa4] sm:$0xf]
    %v418 = vld [vmem:[#allocation5 + $0xa8] sm:$0xff]
    %v419 = vld [vmem:[#allocation5 + $0xb0] sm:$0xf]
    %v420 = vld [vmem:[#allocation5 + $0xb4] sm:$0xff]
    %v421 = vld [vmem:[#allocation5 + $0xbc] sm:$0xf]
    %v454 = vunpack.c.l.b16 %v390
    %v455 = vunpack.c.h.b16 %v390
    %v456 = vunpack.c.l.b16 %v391
    %v457 = vunpack.c.l.b16 %v392
    %v458 = vunpack.c.h.b16 %v392
    %v459 = vunpack.c.l.b16 %v393
    %v460 = vunpack.c.l.b16 %v394
    %v461 = vunpack.c.h.b16 %v394
    %v462 = vunpack.c.l.b16 %v395
    %v463 = vunpack.c.l.b16 %v396
    %v464 = vunpack.c.h.b16 %v396
    %v465 = vunpack.c.l.b16 %v397
    %v466 = vunpack.c.l.b16 %v398
    %v467 = vunpack.c.h.b16 %v398
    %v468 = vunpack.c.l.b16 %v399
    %v469 = vunpack.c.l.b16 %v400
    %v470 = vunpack.c.h.b16 %v400
    %v471 = vunpack.c.l.b16 %v401
    %v472 = vunpack.c.l.b16 %v402
    %v473 = vunpack.c.h.b16 %v402
    %v474 = vunpack.c.l.b16 %v403
    %v475 = vunpack.c.l.b16 %v404
    %v476 = vunpack.c.h.b16 %v404
    %v477 = vunpack.c.l.b16 %v405
    %v478 = vunpack.c.l.b16 %v406
    %v479 = vunpack.c.h.b16 %v406
    %v480 = vunpack.c.l.b16 %v407
    %v481 = vunpack.c.l.b16 %v408
    %v482 = vunpack.c.h.b16 %v408
    %v483 = vunpack.c.l.b16 %v409
    %v484 = vunpack.c.l.b16 %v410
    %v485 = vunpack.c.h.b16 %v410
    %v486 = vunpack.c.l.b16 %v411
    %v487 = vunpack.c.l.b16 %v412
    %v488 = vunpack.c.h.b16 %v412
    %v489 = vunpack.c.l.b16 %v413
    %v490 = vunpack.c.l.b16 %v414
    %v491 = vunpack.c.h.b16 %v414
    %v492 = vunpack.c.l.b16 %v415
    %v493 = vunpack.c.l.b16 %v416
    %v494 = vunpack.c.h.b16 %v416
    %v495 = vunpack.c.l.b16 %v417
    %v496 = vunpack.c.l.b16 %v418
    %v497 = vunpack.c.h.b16 %v418
    %v498 = vunpack.c.l.b16 %v419
    %v499 = vunpack.c.l.b16 %v420
    %v500 = vunpack.c.h.b16 %v420
    %v501 = vunpack.c.l.b16 %v421
    %v502 = vpack.c.b16 %v457, %v454
    %v503 = vpack.c.b16 %v458, %v455
    %v504 = vpack.c.b16 %v459, %v456
    %v505 = vpack.c.b16 %v463, %v460
    %v506 = vpack.c.b16 %v464, %v461
    %v507 = vpack.c.b16 %v465, %v462
    %v508 = vpack.c.b16 %v469, %v466
    %v509 = vpack.c.b16 %v470, %v467
    %v510 = vpack.c.b16 %v471, %v468
    %v511 = vpack.c.b16 %v475, %v472
    %v512 = vpack.c.b16 %v476, %v473
    %v513 = vpack.c.b16 %v477, %v474
    %v514 = vpack.c.b16 %v481, %v478
    %v515 = vpack.c.b16 %v482, %v479
    %v516 = vpack.c.b16 %v483, %v480
    %v517 = vpack.c.b16 %v487, %v484
    %v518 = vpack.c.b16 %v488, %v485
    %v519 = vpack.c.b16 %v489, %v486
    %v520 = vpack.c.b16 %v493, %v490
    %v521 = vpack.c.b16 %v494, %v491
    %v522 = vpack.c.b16 %v495, %v492
    %v523 = vpack.c.b16 %v499, %v496
    %v524 = vpack.c.b16 %v500, %v497
    %v525 = vpack.c.b16 %v501, %v498
    %550 = vmatprep.subr.bf16.mxu0 %v524
    %551 = vmatpush1.bf16.msra.mxu0 %v523
    %552 = vmatprep.subr.bf16.mxu0 %v521
    %553 = vmatpush1.bf16.msra.mxu0 %v520
    %554 = vmatprep.subr.bf16.mxu0 %v518
    %555 = vmatpush1.bf16.msra.mxu0 %v517
    %556 = vmatprep.subr.bf16.mxu0 %v515
    %557 = vmatpush1.bf16.msra.mxu0 %v514
    %558 = vmatprep.subr.bf16.mxu0 %v512
    %559 = vmatpush1.bf16.msra.mxu0 %v511
    %560 = vmatprep.subr.bf16.mxu0 %v509
    %561 = vmatpush1.bf16.msra.mxu0 %v508
    %562 = vmatprep.subr.bf16.mxu0 %v506
    %563 = vmatpush1.bf16.msra.mxu0 %v505
    %564 = vmatprep.subr.bf16.mxu0 %v503
    %565 = vmatpush1.bf16.msra.mxu0 %v502
    %566 = vmatprep.subr.bf16.mxu0 0
    %567 = vmatpush2.bf16.msra.mxu0 0
    %568 = vmatprep.subr.bf16.mxu0 0
    %569 = vmatpush2.bf16.msra.mxu0 0
    %570 = vmatprep.subr.bf16.mxu0 0
    %571 = vmatpush2.bf16.msra.mxu0 0
    %572 = vmatprep.subr.bf16.mxu0 0
    %573 = vmatpush2.bf16.msra.mxu0 0
    %574 = vmatprep.subr.bf16.mxu0 0
    %575 = vmatpush2.bf16.msra.mxu0 0
    %576 = vmatprep.subr.bf16.mxu0 0
    %577 = vmatpush2.bf16.msra.mxu0 0
    %578 = vmatprep.subr.bf16.mxu0 0
    %579 = vmatpush2.bf16.msra.mxu0 0
    %580 = vmatprep.subr.bf16.mxu0 0
    %581 = vmatpush2.bf16.msra.mxu0 0
    %582 = vmatprep.mubr.bf16.mxu0 0
    %583 = vmatmul.mubr.bf16.gmra.mxu0 %v382
    %v584 = vpop.f32.mrf.mxu0
    %v585 = vadd.f32 0.0, %v584
    %v586 = vpop.f32.mrf.mxu0
    %v587 = vadd.f32 0.0, %v586
    %v588 = vpop.f32.mrf.mxu0
    %v589 = vadd.f32 0.0, %v588
    %v590 = vpop.f32.mrf.mxu0
    %v591 = vadd.f32 0.0, %v590
    %592 = vmatprep.mubr.bf16.mxu0 0
    %593 = vmatmul.mubr.bf16.gmra.mxu0 %v383
    %v594 = vpop.f32.mrf.mxu0
    %v595 = vadd.f32 0.0, %v594
    %v596 = vpop.f32.mrf.mxu0
    %v597 = vadd.f32 0.0, %v596
    %v598 = vpop.f32.mrf.mxu0
    %v599 = vadd.f32 0.0, %v598
    %v600 = vpop.f32.mrf.mxu0
    %v601 = vadd.f32 0.0, %v600
    %602 = vmatprep.mubr.bf16.mxu0 0
    %603 = vmatmul.mubr.bf16.gmra.mxu0 %v384
    %v604 = vpop.f32.mrf.mxu0
    %v605 = vadd.f32 0.0, %v604
    %v606 = vpop.f32.mrf.mxu0
    %v607 = vadd.f32 0.0, %v606
    %v608 = vpop.f32.mrf.mxu0
    %v609 = vadd.f32 0.0, %v608
    %v610 = vpop.f32.mrf.mxu0
    %v611 = vadd.f32 0.0, %v610
    %612 = vmatprep.mubr.bf16.mxu0 0
    %613 = vmatmul.mubr.bf16.gmra.mxu0 %v385
    %v614 = vpop.f32.mrf.mxu0
    %v615 = vadd.f32 0.0, %v614
    %v616 = vpop.f32.mrf.mxu0
    %v617 = vadd.f32 0.0, %v616
    %v618 = vpop.f32.mrf.mxu0
    %v619 = vadd.f32 0.0, %v618
    %v620 = vpop.f32.mrf.mxu0
    %v621 = vadd.f32 0.0, %v620
    %622 = vmatprep.mubr.bf16.mxu0 0
    %623 = vmatmul.mubr.bf16.gmra.mxu0 %v386
    %v624 = vpop.f32.mrf.mxu0
    %v625 = vadd.f32 0.0, %v624
    %v626 = vpop.f32.mrf.mxu0
    %v627 = vadd.f32 0.0, %v626
    %v628 = vpop.f32.mrf.mxu0
    %v629 = vadd.f32 0.0, %v628
    %v630 = vpop.f32.mrf.mxu0
    %v631 = vadd.f32 0.0, %v630
    %632 = vmatprep.mubr.bf16.mxu0 0
    %633 = vmatmul.mubr.bf16.gmra.mxu0 %v387
    %v634 = vpop.f32.mrf.mxu0
    %v635 = vadd.f32 0.0, %v634
    %v636 = vpop.f32.mrf.mxu0
    %v637 = vadd.f32 0.0, %v636
    %v638 = vpop.f32.mrf.mxu0
    %v639 = vadd.f32 0.0, %v638
    %v640 = vpop.f32.mrf.mxu0
    %v641 = vadd.f32 0.0, %v640
    %642 = vmatprep.mubr.bf16.mxu0 0
    %643 = vmatmul.mubr.bf16.gmra.mxu0 %v388
    %v644 = vpop.f32.mrf.mxu0
    %v645 = vadd.f32 0.0, %v644
    %v646 = vpop.f32.mrf.mxu0
    %v647 = vadd.f32 0.0, %v646
    %v648 = vpop.f32.mrf.mxu0
    %v649 = vadd.f32 0.0, %v648
    %v650 = vpop.f32.mrf.mxu0
    %v651 = vadd.f32 0.0, %v650
    %652 = vmatprep.mubr.bf16.mxu0 0
    %653 = vmatmul.mubr.bf16.gmra.mxu0 %v389
    %v654 = vpop.f32.mrf.mxu0
    %v655 = vadd.f32 0.0, %v654
    %v656 = vpop.f32.mrf.mxu0
    %v657 = vadd.f32 0.0, %v656
    %v658 = vpop.f32.mrf.mxu0
    %v659 = vadd.f32 0.0, %v658
    %v660 = vpop.f32.mrf.mxu0
    %v661 = vadd.f32 0.0, %v660
    %662 = vdwg.mxu0
    %663 = vmatprep.subr.bf16.mxu0 0
    %664 = vmatpush1.bf16.msra.mxu0 %v525
    %665 = vmatprep.subr.bf16.mxu0 0
    %666 = vmatpush1.bf16.msra.mxu0 %v522
    %667 = vmatprep.subr.bf16.mxu0 0
    %668 = vmatpush1.bf16.msra.mxu0 %v519
    %669 = vmatprep.subr.bf16.mxu0 0
    %670 = vmatpush1.bf16.msra.mxu0 %v516
    %671 = vmatprep.subr.bf16.mxu0 0
    %672 = vmatpush1.bf16.msra.mxu0 %v513
    %673 = vmatprep.subr.bf16.mxu0 0
    %674 = vmatpush1.bf16.msra.mxu0 %v510
    %675 = vmatprep.subr.bf16.mxu0 0
    %676 = vmatpush1.bf16.msra.mxu0 %v507
    %677 = vmatprep.subr.bf16.mxu0 0
    %678 = vmatpush1.bf16.msra.mxu0 %v504
    %679 = vmatprep.subr.bf16.mxu0 0
    %680 = vmatpush2.bf16.msra.mxu0 0
    %681 = vmatprep.subr.bf16.mxu0 0
    %682 = vmatpush2.bf16.msra.mxu0 0
    %683 = vmatprep.subr.bf16.mxu0 0
    %684 = vmatpush2.bf16.msra.mxu0 0
    %685 = vmatprep.subr.bf16.mxu0 0
    %686 = vmatpush2.bf16.msra.mxu0 0
    %687 = vmatprep.subr.bf16.mxu0 0
    %688 = vmatpush2.bf16.msra.mxu0 0
    %689 = vmatprep.subr.bf16.mxu0 0
    %690 = vmatpush2.bf16.msra.mxu0 0
    %691 = vmatprep.subr.bf16.mxu0 0
    %692 = vmatpush2.bf16.msra.mxu0 0
    %693 = vmatprep.subr.bf16.mxu0 0
    %694 = vmatpush2.bf16.msra.mxu0 0
    %695 = vmatprep.mubr.bf16.mxu0 0
    %696 = vmatmul.mubr.bf16.gmra.mxu0 %v382
    %v697 = vpop.f32.mrf.mxu0
    %v698 = vadd.f32 0.0, %v697
    %v699 = vpop.f32.mrf.mxu0
    %v700 = vpop.f32.mrf.mxu0
    %v701 = vadd.f32 0.0, %v700
    %v702 = vpop.f32.mrf.mxu0
    %703 = vmatprep.mubr.bf16.mxu0 0
    %704 = vmatmul.mubr.bf16.gmra.mxu0 %v383
    %v705 = vpop.f32.mrf.mxu0
    %v706 = vadd.f32 0.0, %v705
    %v707 = vpop.f32.mrf.mxu0
    %v708 = vpop.f32.mrf.mxu0
    %v709 = vadd.f32 0.0, %v708
    %v710 = vpop.f32.mrf.mxu0
    %711 = vmatprep.mubr.bf16.mxu0 0
    %712 = vmatmul.mubr.bf16.gmra.mxu0 %v384
    %v713 = vpop.f32.mrf.mxu0
    %v714 = vadd.f32 0.0, %v713
    %v715 = vpop.f32.mrf.mxu0
    %v716 = vpop.f32.mrf.mxu0
    %v717 = vadd.f32 0.0, %v716
    %v718 = vpop.f32.mrf.mxu0
    %719 = vmatprep.mubr.bf16.mxu0 0
    %720 = vmatmul.mubr.bf16.gmra.mxu0 %v385
    %v721 = vpop.f32.mrf.mxu0
    %v722 = vadd.f32 0.0, %v721
    %v723 = vpop.f32.mrf.mxu0
    %v724 = vpop.f32.mrf.mxu0
    %v725 = vadd.f32 0.0, %v724
    %v726 = vpop.f32.mrf.mxu0
    %727 = vmatprep.mubr.bf16.mxu0 0
    %728 = vmatmul.mubr.bf16.gmra.mxu0 %v386
    %v729 = vpop.f32.mrf.mxu0
    %v730 = vadd.f32 0.0, %v729
    %v731 = vpop.f32.mrf.mxu0
    %v732 = vpop.f32.mrf.mxu0
    %v733 = vadd.f32 0.0, %v732
    %v734 = vpop.f32.mrf.mxu0
    %735 = vmatprep.mubr.bf16.mxu0 0
    %736 = vmatmul.mubr.bf16.gmra.mxu0 %v387
    %v737 = vpop.f32.mrf.mxu0
    %v738 = vadd.f32 0.0, %v737
    %v739 = vpop.f32.mrf.mxu0
    %v740 = vpop.f32.mrf.mxu0
    %v741 = vadd.f32 0.0, %v740
    %v742 = vpop.f32.mrf.mxu0
    %743 = vmatprep.mubr.bf16.mxu0 0
    %744 = vmatmul.mubr.bf16.gmra.mxu0 %v388
    %v745 = vpop.f32.mrf.mxu0
    %v746 = vadd.f32 0.0, %v745
    %v747 = vpop.f32.mrf.mxu0
    %v748 = vpop.f32.mrf.mxu0
    %v749 = vadd.f32 0.0, %v748
    %v750 = vpop.f32.mrf.mxu0
    %751 = vmatprep.mubr.bf16.mxu0 0
    %752 = vmatmul.mubr.bf16.gmra.mxu0 %v389
    %v753 = vpop.f32.mrf.mxu0
    %v754 = vadd.f32 0.0, %v753
    %v755 = vpop.f32.mrf.mxu0
    %v756 = vpop.f32.mrf.mxu0
    %v757 = vadd.f32 0.0, %v756
    %v758 = vpop.f32.mrf.mxu0
    %759 = vdwg.mxu0
    %v760 = vpack.c.bf16 %v589, %v585
    %v761 = vpack.c.bf16 %v599, %v595
    %v762 = vpack.c.bf16 %v609, %v605
    %v763 = vpack.c.bf16 %v619, %v615
    %v764 = vpack.c.bf16 %v629, %v625
    %v765 = vpack.c.bf16 %v639, %v635
    %v766 = vpack.c.bf16 %v649, %v645
    %v767 = vpack.c.bf16 %v659, %v655
    %v768 = vpack.c.bf16 %v591, %v587
    %v769 = vpack.c.bf16 %v601, %v597
    %v770 = vpack.c.bf16 %v611, %v607
    %v771 = vpack.c.bf16 %v621, %v617
    %v772 = vpack.c.bf16 %v631, %v627
    %v773 = vpack.c.bf16 %v641, %v637
    %v774 = vpack.c.bf16 %v651, %v647
    %v775 = vpack.c.bf16 %v661, %v657
    %v776 = vpack.c.bf16 %v701, %v698
    %v777 = vpack.c.bf16 %v709, %v706
    %v778 = vpack.c.bf16 %v717, %v714
    %v779 = vpack.c.bf16 %v725, %v722
    %v780 = vpack.c.bf16 %v733, %v730
    %v781 = vpack.c.bf16 %v741, %v738
    %v782 = vpack.c.bf16 %v749, %v746
    %v783 = vpack.c.bf16 %v757, %v754
    %v784 = vlaneseq
    %v785 = vshrl.u32 %v784, 7
    %v786 = vadd.s32 %v785, 8
    %v787 = vadd.s32 %v785, 16
    %v788 = vadd.s32 %v785, 24
    %v789 = vadd.s32 %v785, 32
    %v790 = vadd.s32 %v785, 40
    %v791 = vadd.s32 %v785, 48
    %v792 = vadd.s32 %v785, 56
    %v793 = vlaneseq
    %v794 = vand.u32 %v793, 127
    %vm795 = vcmp.le.s32.totalorder %v794, %v785
    %vm796 = vcmp.le.s32.totalorder %v794, %v786
    %vm797 = vcmp.le.s32.totalorder %v794, %v787
    %vm798 = vcmp.le.s32.totalorder %v794, %v788
    %vm799 = vcmp.le.s32.totalorder %v794, %v789
    %vm800 = vcmp.le.s32.totalorder %v794, %v790
    %vm801 = vcmp.le.s32.totalorder %v794, %v791
    %vm802 = vcmp.le.s32.totalorder %v794, %v792
    %vm803 = vcmask 261120
    %v805 = vsel %vm803, %v760, 0
    %v808 = vsel %vm803, %v761, 0
    %v811 = vsel %vm803, %v762, 0
    %v814 = vsel %vm803, %v763, 0
    %v817 = vsel %vm803, %v768, 0
    %v820 = vsel %vm803, %v769, 0
    %v823 = vsel %vm803, %v770, 0
    %v826 = vsel %vm803, %v771, 0
    %828 = vmatprep.subr.bf16.mxu0 0
    %829 = vmatpush1.bf16.xpose.msra.mxu0 0
    %830 = vmatprep.subr.bf16.mxu0 0
    %831 = vmatpush1.bf16.xpose.msra.mxu0 0
    %832 = vmatprep.subr.bf16.mxu0 0
    %833 = vmatpush1.bf16.xpose.msra.mxu0 0
    %834 = vmatprep.subr.bf16.mxu0 0
    %835 = vmatpush1.bf16.xpose.msra.mxu0 0
    %836 = vmatprep.subr.bf16.mxu0 0
    %837 = vmatpush1.bf16.xpose.msra.mxu0 %v826
    %838 = vmatprep.subr.bf16.mxu0 0
    %839 = vmatpush1.bf16.xpose.msra.mxu0 %v823
    %840 = vmatprep.subr.bf16.mxu0 0
    %841 = vmatpush1.bf16.xpose.msra.mxu0 %v820
    %842 = vmatprep.subr.bf16.mxu0 0
    %843 = vmatpush1.bf16.xpose.msra.mxu0 %v817
    %844 = vmatprep.subr.bf16.mxu0 0
    %845 = vmatpush2.bf16.xpose.msra.mxu0 0
    %846 = vmatprep.subr.bf16.mxu0 0
    %847 = vmatpush2.bf16.xpose.msra.mxu0 0
    %848 = vmatprep.subr.bf16.mxu0 0
    %849 = vmatpush2.bf16.xpose.msra.mxu0 0
    %850 = vmatprep.subr.bf16.mxu0 0
    %851 = vmatpush2.bf16.xpose.msra.mxu0 0
    %852 = vmatprep.subr.bf16.mxu0 0
    %853 = vmatpush2.bf16.xpose.msra.mxu0 0
    %854 = vmatprep.subr.bf16.mxu0 0
    %855 = vmatpush2.bf16.xpose.msra.mxu0 0
    %856 = vmatprep.subr.bf16.mxu0 0
    %857 = vmatpush2.bf16.xpose.msra.mxu0 0
    %858 = vmatprep.subr.bf16.mxu0 0
    %859 = vmatpush2.bf16.xpose.msra.mxu0 0
    %860 = vmatprep.mubr.bf16.mxu0 0
    %861 = vmatmul.mubr.bf16.gmra.mxu0 %v805
    %v862 = vpop.f32.mrf.mxu0
    %v863 = vadd.f32 0.0, %v862
    %v864 = vpop.f32.mrf.mxu0
    %v865 = vpop.f32.mrf.mxu0
    %v866 = vadd.f32 0.0, %v865
    %v867 = vpop.f32.mrf.mxu0
    %868 = vmatprep.mubr.bf16.mxu0 0
    %869 = vmatmul.mubr.bf16.gmra.mxu0 %v808
    %v870 = vpop.f32.mrf.mxu0
    %v871 = vadd.f32 0.0, %v870
    %v872 = vpop.f32.mrf.mxu0
    %v873 = vpop.f32.mrf.mxu0
    %v874 = vadd.f32 0.0, %v873
    %v875 = vpop.f32.mrf.mxu0
    %876 = vmatprep.mubr.bf16.mxu0 0
    %877 = vmatmul.mubr.bf16.gmra.mxu0 %v811
    %v878 = vpop.f32.mrf.mxu0
    %v879 = vadd.f32 0.0, %v878
    %v880 = vpop.f32.mrf.mxu0
    %v881 = vpop.f32.mrf.mxu0
    %v882 = vadd.f32 0.0, %v881
    %v883 = vpop.f32.mrf.mxu0
    %884 = vmatprep.mubr.bf16.mxu0 0
    %885 = vmatmul.mubr.bf16.gmra.mxu0 %v814
    %v886 = vpop.f32.mrf.mxu0
    %v887 = vadd.f32 0.0, %v886
    %v888 = vpop.f32.mrf.mxu0
    %v889 = vpop.f32.mrf.mxu0
    %v890 = vadd.f32 0.0, %v889
    %v891 = vpop.f32.mrf.mxu0
    %892 = vdwg.mxu0
    %v893 = vsel %vm795, %v863, -1e+30
    %v894 = vsel %vm796, %v866, -1e+30
    %v895 = vsel %vm797, %v871, -1e+30
    %v896 = vsel %vm798, %v874, -1e+30
    %v897 = vsel %vm799, %v879, -1e+30
    %v898 = vsel %vm800, %v882, -1e+30
    %v899 = vsel %vm801, %v887, -1e+30
    %v900 = vsel %vm802, %v890, -1e+30
    %vm901 = vcmask 523264
    %v902 = vsel %vm901, %v893, -inf
    %903 = vmax.xlane.f32.xlu0 %v902
    %v904 = vpop.xlane.xlu0 %903
    %v905 = vsel %vm901, %v894, -inf
    %906 = vmax.xlane.f32.xlu0 %v905
    %v907 = vpop.xlane.xlu0 %906
    %v908 = vsel %vm901, %v895, -inf
    %909 = vmax.xlane.f32.xlu0 %v908
    %v910 = vpop.xlane.xlu0 %909
    %v911 = vsel %vm901, %v896, -inf
    %912 = vmax.xlane.f32.xlu0 %v911
    %v913 = vpop.xlane.xlu0 %912
    %v914 = vsel %vm901, %v897, -inf
    %915 = vmax.xlane.f32.xlu0 %v914
    %v916 = vpop.xlane.xlu0 %915
    %v917 = vsel %vm901, %v898, -inf
    %918 = vmax.xlane.f32.xlu0 %v917
    %v919 = vpop.xlane.xlu0 %918
    %v920 = vsel %vm901, %v899, -inf
    %921 = vmax.xlane.f32.xlu0 %v920
    %v922 = vpop.xlane.xlu0 %921
    %v923 = vsel %vm901, %v900, -inf
    %924 = vmax.xlane.f32.xlu0 %v923
    %v925 = vpop.xlane.xlu0 %924
    %v926 = vsub.f32 %v893, %v904
    %v927 = vsub.f32 %v894, %v907
    %v928 = vsub.f32 %v895, %v910
    %v929 = vsub.f32 %v896, %v913
    %v930 = vsub.f32 %v897, %v916
    %v931 = vsub.f32 %v898, %v919
    %v932 = vsub.f32 %v899, %v922
    %v933 = vsub.f32 %v900, %v925
    %v934 = vmul.f32 %v926, 1.442695
    %v935 = vpow.pop %v934
    %v936 = vmul.f32 %v927, 1.442695
    %v937 = vpow.pop %v936
    %v938 = vmul.f32 %v928, 1.442695
    %v939 = vpow.pop %v938
    %v940 = vmul.f32 %v929, 1.442695
    %v941 = vpow.pop %v940
    %v942 = vmul.f32 %v930, 1.442695
    %v943 = vpow.pop %v942
    %v944 = vmul.f32 %v931, 1.442695
    %v945 = vpow.pop %v944
    %v946 = vmul.f32 %v932, 1.442695
    %v947 = vpow.pop %v946
    %v948 = vmul.f32 %v933, 1.442695
    %v949 = vpow.pop %v948
    %v950 = vsel %vm901, %v935, 0.0
    %951 = vadd.xlane.f32.xlu0 %v950
    %v952 = vpop.xlane.xlu0 %951
    %v953 = vsel %vm901, %v937, 0.0
    %954 = vadd.xlane.f32.xlu0 %v953
    %v955 = vpop.xlane.xlu0 %954
    %v956 = vsel %vm901, %v939, 0.0
    %957 = vadd.xlane.f32.xlu0 %v956
    %v958 = vpop.xlane.xlu0 %957
    %v959 = vsel %vm901, %v941, 0.0
    %960 = vadd.xlane.f32.xlu0 %v959
    %v961 = vpop.xlane.xlu0 %960
    %v962 = vsel %vm901, %v943, 0.0
    %963 = vadd.xlane.f32.xlu0 %v962
    %v964 = vpop.xlane.xlu0 %963
    %v965 = vsel %vm901, %v945, 0.0
    %966 = vadd.xlane.f32.xlu0 %v965
    %v967 = vpop.xlane.xlu0 %966
    %v968 = vsel %vm901, %v947, 0.0
    %969 = vadd.xlane.f32.xlu0 %v968
    %v970 = vpop.xlane.xlu0 %969
    %v971 = vsel %vm901, %v949, 0.0
    %972 = vadd.xlane.f32.xlu0 %v971
    %v973 = vpop.xlane.xlu0 %972
    %v974 = vpack.c.bf16 %v937, %v935
    %v975 = vpack.c.bf16 %v941, %v939
    %v976 = vpack.c.bf16 %v945, %v943
    %v977 = vpack.c.bf16 %v949, %v947
    %v979 = vsel %vm901, %v974, 0
    %v982 = vsel %vm901, %v975, 0
    %v985 = vsel %vm901, %v976, 0
    %v988 = vsel %vm901, %v977, 0
    %990 = vmatprep.subr.bf16.mxu0 0
    %991 = vmatpush1.bf16.msra.mxu0 0
    %992 = vmatprep.subr.bf16.mxu0 0
    %993 = vmatpush1.bf16.msra.mxu0 0
    %994 = vmatprep.subr.bf16.mxu0 0
    %995 = vmatpush1.bf16.msra.mxu0 0
    %996 = vmatprep.subr.bf16.mxu0 0
    %997 = vmatpush1.bf16.msra.mxu0 0
    %998 = vmatprep.subr.bf16.mxu0 0
    %999 = vmatpush1.bf16.msra.mxu0 %v779
    %1000 = vmatprep.subr.bf16.mxu0 0
    %1001 = vmatpush1.bf16.msra.mxu0 %v778
    %1002 = vmatprep.subr.bf16.mxu0 0
    %1003 = vmatpush1.bf16.msra.mxu0 %v777
    %1004 = vmatprep.subr.bf16.mxu0 0
    %1005 = vmatpush1.bf16.msra.mxu0 %v776
    %1006 = vmatprep.subr.bf16.mxu0 0
    %1007 = vmatpush2.bf16.msra.mxu0 0
    %1008 = vmatprep.subr.bf16.mxu0 0
    %1009 = vmatpush2.bf16.msra.mxu0 0
    %1010 = vmatprep.subr.bf16.mxu0 0
    %1011 = vmatpush2.bf16.msra.mxu0 0
    %1012 = vmatprep.subr.bf16.mxu0 0
    %1013 = vmatpush2.bf16.msra.mxu0 0
    %1014 = vmatprep.subr.bf16.mxu0 0
    %1015 = vmatpush2.bf16.msra.mxu0 0
    %1016 = vmatprep.subr.bf16.mxu0 0
    %1017 = vmatpush2.bf16.msra.mxu0 0
    %1018 = vmatprep.subr.bf16.mxu0 0
    %1019 = vmatpush2.bf16.msra.mxu0 0
    %1020 = vmatprep.subr.bf16.mxu0 0
    %1021 = vmatpush2.bf16.msra.mxu0 0
    %1022 = vmatprep.mubr.bf16.mxu0 0
    %1023 = vmatmul.mubr.bf16.gmra.mxu0 %v979
    %v1024 = vpop.f32.mrf.mxu0
    %v1025 = vadd.f32 0.0, %v1024
    %v1026 = vpop.f32.mrf.mxu0
    %v1027 = vpop.f32.mrf.mxu0
    %v1028 = vadd.f32 0.0, %v1027
    %v1029 = vpop.f32.mrf.mxu0
    %1030 = vmatprep.mubr.bf16.mxu0 0
    %1031 = vmatmul.mubr.bf16.gmra.mxu0 %v982
    %v1032 = vpop.f32.mrf.mxu0
    %v1033 = vadd.f32 0.0, %v1032
    %v1034 = vpop.f32.mrf.mxu0
    %v1035 = vpop.f32.mrf.mxu0
    %v1036 = vadd.f32 0.0, %v1035
    %v1037 = vpop.f32.mrf.mxu0
    %1038 = vmatprep.mubr.bf16.mxu0 0
    %1039 = vmatmul.mubr.bf16.gmra.mxu0 %v985
    %v1040 = vpop.f32.mrf.mxu0
    %v1041 = vadd.f32 0.0, %v1040
    %v1042 = vpop.f32.mrf.mxu0
    %v1043 = vpop.f32.mrf.mxu0
    %v1044 = vadd.f32 0.0, %v1043
    %v1045 = vpop.f32.mrf.mxu0
    %1046 = vmatprep.mubr.bf16.mxu0 0
    %1047 = vmatmul.mubr.bf16.gmra.mxu0 %v988
    %v1048 = vpop.f32.mrf.mxu0
    %v1049 = vadd.f32 0.0, %v1048
    %v1050 = vpop.f32.mrf.mxu0
    %v1051 = vpop.f32.mrf.mxu0
    %v1052 = vadd.f32 0.0, %v1051
    %v1053 = vpop.f32.mrf.mxu0
    %1054 = vdwg.mxu0
    %v1055 = vrcp.pop %v952
    %v1056 = vrcp.pop %v955
    %v1057 = vrcp.pop %v958
    %v1058 = vrcp.pop %v961
    %v1059 = vrcp.pop %v964
    %v1060 = vrcp.pop %v967
    %v1061 = vrcp.pop %v970
    %v1062 = vrcp.pop %v973
    %v1063 = vmul.f32 %v1025, %v1055
    %v1064 = vmul.f32 %v1028, %v1056
    %v1065 = vmul.f32 %v1033, %v1057
    %v1066 = vmul.f32 %v1036, %v1058
    %v1067 = vmul.f32 %v1041, %v1059
    %v1068 = vmul.f32 %v1044, %v1060
    %v1069 = vmul.f32 %v1049, %v1061
    %v1070 = vmul.f32 %v1052, %v1062
    %v1071 = vpack.c.bf16 %v1064, %v1063
    %v1072 = vpack.c.bf16 %v1066, %v1065
    %v1073 = vpack.c.bf16 %v1068, %v1067
    %v1074 = vpack.c.bf16 %v1070, %v1069
    %1079 = vrot.lane.b32.xlu0 %v760, 96
    %v1080 = vpop.permute.xlu0 %1079
    %1081 = vrot.lane.b32.xlu0 %v761, 96
    %v1082 = vpop.permute.xlu0 %1081
    %1083 = vrot.lane.b32.xlu0 %v762, 96
    %v1084 = vpop.permute.xlu0 %1083
    %1085 = vrot.lane.b32.xlu0 %v763, 96
    %v1086 = vpop.permute.xlu0 %1085
    %1091 = vrot.lane.b32.xlu0 %v768, 96
    %v1092 = vpop.permute.xlu0 %1091
    %1093 = vrot.lane.b32.xlu0 %v769, 96
    %v1094 = vpop.permute.xlu0 %1093
    %1095 = vrot.lane.b32.xlu0 %v770, 96
    %v1096 = vpop.permute.xlu0 %1095
    %1097 = vrot.lane.b32.xlu0 %v771, 96
    %v1098 = vpop.permute.xlu0 %1097
    %v1100 = vsel %vm803, %v1080, 0
    %v1103 = vsel %vm803, %v1082, 0
    %v1106 = vsel %vm803, %v1084, 0
    %v1109 = vsel %vm803, %v1086, 0
    %v1112 = vsel %vm803, %v1092, 0
    %v1115 = vsel %vm803, %v1094, 0
    %v1118 = vsel %vm803, %v1096, 0
    %v1121 = vsel %vm803, %v1098, 0
    %1123 = vmatprep.subr.bf16.mxu0 0
    %1124 = vmatpush1.bf16.xpose.msra.mxu0 0
    %1125 = vmatprep.subr.bf16.mxu0 0
    %1126 = vmatpush1.bf16.xpose.msra.mxu0 0
    %1127 = vmatprep.subr.bf16.mxu0 0
    %1128 = vmatpush1.bf16.xpose.msra.mxu0 0
    %1129 = vmatprep.subr.bf16.mxu0 0
    %1130 = vmatpush1.bf16.xpose.msra.mxu0 0
    %1131 = vmatprep.subr.bf16.mxu0 0
    %1132 = vmatpush1.bf16.xpose.msra.mxu0 %v1121
    %1133 = vmatprep.subr.bf16.mxu0 0
    %1134 = vmatpush1.bf16.xpose.msra.mxu0 %v1118
    %1135 = vmatprep.subr.bf16.mxu0 0
    %1136 = vmatpush1.bf16.xpose.msra.mxu0 %v1115
    %1137 = vmatprep.subr.bf16.mxu0 0
    %1138 = vmatpush1.bf16.xpose.msra.mxu0 %v1112
    %1139 = vmatprep.subr.bf16.mxu0 0
    %1140 = vmatpush2.bf16.xpose.msra.mxu0 0
    %1141 = vmatprep.subr.bf16.mxu0 0
    %1142 = vmatpush2.bf16.xpose.msra.mxu0 0
    %1143 = vmatprep.subr.bf16.mxu0 0
    %1144 = vmatpush2.bf16.xpose.msra.mxu0 0
    %1145 = vmatprep.subr.bf16.mxu0 0
    %1146 = vmatpush2.bf16.xpose.msra.mxu0 0
    %1147 = vmatprep.subr.bf16.mxu0 0
    %1148 = vmatpush2.bf16.xpose.msra.mxu0 0
    %1149 = vmatprep.subr.bf16.mxu0 0
    %1150 = vmatpush2.bf16.xpose.msra.mxu0 0
    %1151 = vmatprep.subr.bf16.mxu0 0
    %1152 = vmatpush2.bf16.xpose.msra.mxu0 0
    %1153 = vmatprep.subr.bf16.mxu0 0
    %1154 = vmatpush2.bf16.xpose.msra.mxu0 0
    %1155 = vmatprep.mubr.bf16.mxu0 0
    %1156 = vmatmul.mubr.bf16.gmra.mxu0 %v1100
    %v1157 = vpop.f32.mrf.mxu0
    %v1158 = vadd.f32 0.0, %v1157
    %v1159 = vpop.f32.mrf.mxu0
    %v1160 = vpop.f32.mrf.mxu0
    %v1161 = vadd.f32 0.0, %v1160
    %v1162 = vpop.f32.mrf.mxu0
    %1163 = vmatprep.mubr.bf16.mxu0 0
    %1164 = vmatmul.mubr.bf16.gmra.mxu0 %v1103
    %v1165 = vpop.f32.mrf.mxu0
    %v1166 = vadd.f32 0.0, %v1165
    %v1167 = vpop.f32.mrf.mxu0
    %v1168 = vpop.f32.mrf.mxu0
    %v1169 = vadd.f32 0.0, %v1168
    %v1170 = vpop.f32.mrf.mxu0
    %1171 = vmatprep.mubr.bf16.mxu0 0
    %1172 = vmatmul.mubr.bf16.gmra.mxu0 %v1106
    %v1173 = vpop.f32.mrf.mxu0
    %v1174 = vadd.f32 0.0, %v1173
    %v1175 = vpop.f32.mrf.mxu0
    %v1176 = vpop.f32.mrf.mxu0
    %v1177 = vadd.f32 0.0, %v1176
    %v1178 = vpop.f32.mrf.mxu0
    %1179 = vmatprep.mubr.bf16.mxu0 0
    %1180 = vmatmul.mubr.bf16.gmra.mxu0 %v1109
    %v1181 = vpop.f32.mrf.mxu0
    %v1182 = vadd.f32 0.0, %v1181
    %v1183 = vpop.f32.mrf.mxu0
    %v1184 = vpop.f32.mrf.mxu0
    %v1185 = vadd.f32 0.0, %v1184
    %v1186 = vpop.f32.mrf.mxu0
    %1187 = vdwg.mxu0
    %v1188 = vsel %vm795, %v1158, -1e+30
    %v1189 = vsel %vm796, %v1161, -1e+30
    %v1190 = vsel %vm797, %v1166, -1e+30
    %v1191 = vsel %vm798, %v1169, -1e+30
    %v1192 = vsel %vm799, %v1174, -1e+30
    %v1193 = vsel %vm800, %v1177, -1e+30
    %v1194 = vsel %vm801, %v1182, -1e+30
    %v1195 = vsel %vm802, %v1185, -1e+30
    %v1196 = vsel %vm901, %v1188, -inf
    %1197 = vmax.xlane.f32.xlu0 %v1196
    %v1198 = vpop.xlane.xlu0 %1197
    %v1199 = vsel %vm901, %v1189, -inf
    %1200 = vmax.xlane.f32.xlu0 %v1199
    %v1201 = vpop.xlane.xlu0 %1200
    %v1202 = vsel %vm901, %v1190, -inf
    %1203 = vmax.xlane.f32.xlu0 %v1202
    %v1204 = vpop.xlane.xlu0 %1203
    %v1205 = vsel %vm901, %v1191, -inf
    %1206 = vmax.xlane.f32.xlu0 %v1205
    %v1207 = vpop.xlane.xlu0 %1206
    %v1208 = vsel %vm901, %v1192, -inf
    %1209 = vmax.xlane.f32.xlu0 %v1208
    %v1210 = vpop.xlane.xlu0 %1209
    %v1211 = vsel %vm901, %v1193, -inf
    %1212 = vmax.xlane.f32.xlu0 %v1211
    %v1213 = vpop.xlane.xlu0 %1212
    %v1214 = vsel %vm901, %v1194, -inf
    %1215 = vmax.xlane.f32.xlu0 %v1214
    %v1216 = vpop.xlane.xlu0 %1215
    %v1217 = vsel %vm901, %v1195, -inf
    %1218 = vmax.xlane.f32.xlu0 %v1217
    %v1219 = vpop.xlane.xlu0 %1218
    %v1220 = vsub.f32 %v1188, %v1198
    %v1221 = vsub.f32 %v1189, %v1201
    %v1222 = vsub.f32 %v1190, %v1204
    %v1223 = vsub.f32 %v1191, %v1207
    %v1224 = vsub.f32 %v1192, %v1210
    %v1225 = vsub.f32 %v1193, %v1213
    %v1226 = vsub.f32 %v1194, %v1216
    %v1227 = vsub.f32 %v1195, %v1219
    %v1228 = vmul.f32 %v1220, 1.442695
    %v1229 = vpow.pop %v1228
    %v1230 = vmul.f32 %v1221, 1.442695
    %v1231 = vpow.pop %v1230
    %v1232 = vmul.f32 %v1222, 1.442695
    %v1233 = vpow.pop %v1232
    %v1234 = vmul.f32 %v1223, 1.442695
    %v1235 = vpow.pop %v1234
    %v1236 = vmul.f32 %v1224, 1.442695
    %v1237 = vpow.pop %v1236
    %v1238 = vmul.f32 %v1225, 1.442695
    %v1239 = vpow.pop %v1238
    %v1240 = vmul.f32 %v1226, 1.442695
    %v1241 = vpow.pop %v1240
    %v1242 = vmul.f32 %v1227, 1.442695
    %v1243 = vpow.pop %v1242
    %v1244 = vsel %vm901, %v1229, 0.0
    %1245 = vadd.xlane.f32.xlu0 %v1244
    %v1246 = vpop.xlane.xlu0 %1245
    %v1247 = vsel %vm901, %v1231, 0.0
    %1248 = vadd.xlane.f32.xlu0 %v1247
    %v1249 = vpop.xlane.xlu0 %1248
    %v1250 = vsel %vm901, %v1233, 0.0
    %1251 = vadd.xlane.f32.xlu0 %v1250
    %v1252 = vpop.xlane.xlu0 %1251
    %v1253 = vsel %vm901, %v1235, 0.0
    %1254 = vadd.xlane.f32.xlu0 %v1253
    %v1255 = vpop.xlane.xlu0 %1254
    %v1256 = vsel %vm901, %v1237, 0.0
    %1257 = vadd.xlane.f32.xlu0 %v1256
    %v1258 = vpop.xlane.xlu0 %1257
    %v1259 = vsel %vm901, %v1239, 0.0
    %1260 = vadd.xlane.f32.xlu0 %v1259
    %v1261 = vpop.xlane.xlu0 %1260
    %v1262 = vsel %vm901, %v1241, 0.0
    %1263 = vadd.xlane.f32.xlu0 %v1262
    %v1264 = vpop.xlane.xlu0 %1263
    %v1265 = vsel %vm901, %v1243, 0.0
    %1266 = vadd.xlane.f32.xlu0 %v1265
    %v1267 = vpop.xlane.xlu0 %1266
    %v1268 = vpack.c.bf16 %v1231, %v1229
    %v1269 = vpack.c.bf16 %v1235, %v1233
    %v1270 = vpack.c.bf16 %v1239, %v1237
    %v1271 = vpack.c.bf16 %v1243, %v1241
    %1276 = vrot.lane.b32.xlu0 %v776, 96
    %v1277 = vpop.permute.xlu0 %1276
    %1278 = vrot.lane.b32.xlu0 %v777, 96
    %v1279 = vpop.permute.xlu0 %1278
    %1280 = vrot.lane.b32.xlu0 %v778, 96
    %v1281 = vpop.permute.xlu0 %1280
    %1282 = vrot.lane.b32.xlu0 %v779, 96
    %v1283 = vpop.permute.xlu0 %1282
    %v1289 = vsel %vm901, %v1268, 0
    %v1292 = vsel %vm901, %v1269, 0
    %v1295 = vsel %vm901, %v1270, 0
    %v1298 = vsel %vm901, %v1271, 0
    %1300 = vmatprep.subr.bf16.mxu0 0
    %1301 = vmatpush1.bf16.msra.mxu0 0
    %1302 = vmatprep.subr.bf16.mxu0 0
    %1303 = vmatpush1.bf16.msra.mxu0 0
    %1304 = vmatprep.subr.bf16.mxu0 0
    %1305 = vmatpush1.bf16.msra.mxu0 0
    %1306 = vmatprep.subr.bf16.mxu0 0
    %1307 = vmatpush1.bf16.msra.mxu0 0
    %1308 = vmatprep.subr.bf16.mxu0 0
    %1309 = vmatpush1.bf16.msra.mxu0 %v1283
    %1310 = vmatprep.subr.bf16.mxu0 0
    %1311 = vmatpush1.bf16.msra.mxu0 %v1281
    %1312 = vmatprep.subr.bf16.mxu0 0
    %1313 = vmatpush1.bf16.msra.mxu0 %v1279
    %1314 = vmatprep.subr.bf16.mxu0 0
    %1315 = vmatpush1.bf16.msra.mxu0 %v1277
    %1316 = vmatprep.subr.bf16.mxu0 0
    %1317 = vmatpush2.bf16.msra.mxu0 0
    %1318 = vmatprep.subr.bf16.mxu0 0
    %1319 = vmatpush2.bf16.msra.mxu0 0
    %1320 = vmatprep.subr.bf16.mxu0 0
    %1321 = vmatpush2.bf16.msra.mxu0 0
    %1322 = vmatprep.subr.bf16.mxu0 0
    %1323 = vmatpush2.bf16.msra.mxu0 0
    %1324 = vmatprep.subr.bf16.mxu0 0
    %1325 = vmatpush2.bf16.msra.mxu0 0
    %1326 = vmatprep.subr.bf16.mxu0 0
    %1327 = vmatpush2.bf16.msra.mxu0 0
    %1328 = vmatprep.subr.bf16.mxu0 0
    %1329 = vmatpush2.bf16.msra.mxu0 0
    %1330 = vmatprep.subr.bf16.mxu0 0
    %1331 = vmatpush2.bf16.msra.mxu0 0
    %1332 = vmatprep.mubr.bf16.mxu0 0
    %1333 = vmatmul.mubr.bf16.gmra.mxu0 %v1289
    %v1334 = vpop.f32.mrf.mxu0
    %v1335 = vadd.f32 0.0, %v1334
    %v1336 = vpop.f32.mrf.mxu0
    %v1337 = vpop.f32.mrf.mxu0
    %v1338 = vadd.f32 0.0, %v1337
    %v1339 = vpop.f32.mrf.mxu0
    %1340 = vmatprep.mubr.bf16.mxu0 0
    %1341 = vmatmul.mubr.bf16.gmra.mxu0 %v1292
    %v1342 = vpop.f32.mrf.mxu0
    %v1343 = vadd.f32 0.0, %v1342
    %v1344 = vpop.f32.mrf.mxu0
    %v1345 = vpop.f32.mrf.mxu0
    %v1346 = vadd.f32 0.0, %v1345
    %v1347 = vpop.f32.mrf.mxu0
    %1348 = vmatprep.mubr.bf16.mxu0 0
    %1349 = vmatmul.mubr.bf16.gmra.mxu0 %v1295
    %v1350 = vpop.f32.mrf.mxu0
    %v1351 = vadd.f32 0.0, %v1350
    %v1352 = vpop.f32.mrf.mxu0
    %v1353 = vpop.f32.mrf.mxu0
    %v1354 = vadd.f32 0.0, %v1353
    %v1355 = vpop.f32.mrf.mxu0
    %1356 = vmatprep.mubr.bf16.mxu0 0
    %1357 = vmatmul.mubr.bf16.gmra.mxu0 %v1298
    %v1358 = vpop.f32.mrf.mxu0
    %v1359 = vadd.f32 0.0, %v1358
    %v1360 = vpop.f32.mrf.mxu0
    %v1361 = vpop.f32.mrf.mxu0
    %v1362 = vadd.f32 0.0, %v1361
    %v1363 = vpop.f32.mrf.mxu0
    %1364 = vdwg.mxu0
    %v1365 = vrcp.pop %v1246
    %v1366 = vrcp.pop %v1249
    %v1367 = vrcp.pop %v1252
    %v1368 = vrcp.pop %v1255
    %v1369 = vrcp.pop %v1258
    %v1370 = vrcp.pop %v1261
    %v1371 = vrcp.pop %v1264
    %v1372 = vrcp.pop %v1267
    %v1373 = vmul.f32 %v1335, %v1365
    %v1374 = vmul.f32 %v1338, %v1366
    %v1375 = vmul.f32 %v1343, %v1367
    %v1376 = vmul.f32 %v1346, %v1368
    %v1377 = vmul.f32 %v1351, %v1369
    %v1378 = vmul.f32 %v1354, %v1370
    %v1379 = vmul.f32 %v1359, %v1371
    %v1380 = vmul.f32 %v1362, %v1372
    %v1381 = vpack.c.bf16 %v1374, %v1373
    %v1382 = vpack.c.bf16 %v1376, %v1375
    %v1383 = vpack.c.bf16 %v1378, %v1377
    %v1384 = vpack.c.bf16 %v1380, %v1379
    %1385 = vrot.lane.b32.xlu0 %v760, 64
    %v1386 = vpop.permute.xlu0 %1385
    %1387 = vrot.lane.b32.xlu0 %v761, 64
    %v1388 = vpop.permute.xlu0 %1387
    %1389 = vrot.lane.b32.xlu0 %v762, 64
    %v1390 = vpop.permute.xlu0 %1389
    %1391 = vrot.lane.b32.xlu0 %v763, 64
    %v1392 = vpop.permute.xlu0 %1391
    %1393 = vrot.lane.b32.xlu0 %v768, 64
    %v1394 = vpop.permute.xlu0 %1393
    %1395 = vrot.lane.b32.xlu0 %v769, 64
    %v1396 = vpop.permute.xlu0 %1395
    %1397 = vrot.lane.b32.xlu0 %v770, 64
    %v1398 = vpop.permute.xlu0 %1397
    %1399 = vrot.lane.b32.xlu0 %v771, 64
    %v1400 = vpop.permute.xlu0 %1399
    %v1402 = vsel %vm803, %v1386, 0
    %v1405 = vsel %vm803, %v1388, 0
    %v1408 = vsel %vm803, %v1390, 0
    %v1411 = vsel %vm803, %v1392, 0
    %v1414 = vsel %vm803, %v1394, 0
    %v1417 = vsel %vm803, %v1396, 0
    %v1420 = vsel %vm803, %v1398, 0
    %v1423 = vsel %vm803, %v1400, 0
    %1425 = vmatprep.subr.bf16.mxu0 0
    %1426 = vmatpush1.bf16.xpose.msra.mxu0 0
    %1427 = vmatprep.subr.bf16.mxu0 0
    %1428 = vmatpush1.bf16.xpose.msra.mxu0 0
    %1429 = vmatprep.subr.bf16.mxu0 0
    %1430 = vmatpush1.bf16.xpose.msra.mxu0 0
    %1431 = vmatprep.subr.bf16.mxu0 0
    %1432 = vmatpush1.bf16.xpose.msra.mxu0 0
    %1433 = vmatprep.subr.bf16.mxu0 0
    %1434 = vmatpush1.bf16.xpose.msra.mxu0 %v1423
    %1435 = vmatprep.subr.bf16.mxu0 0
    %1436 = vmatpush1.bf16.xpose.msra.mxu0 %v1420
    %1437 = vmatprep.subr.bf16.mxu0 0
    %1438 = vmatpush1.bf16.xpose.msra.mxu0 %v1417
    %1439 = vmatprep.subr.bf16.mxu0 0
    %1440 = vmatpush1.bf16.xpose.msra.mxu0 %v1414
    %1441 = vmatprep.subr.bf16.mxu0 0
    %1442 = vmatpush2.bf16.xpose.msra.mxu0 0
    %1443 = vmatprep.subr.bf16.mxu0 0
    %1444 = vmatpush2.bf16.xpose.msra.mxu0 0
    %1445 = vmatprep.subr.bf16.mxu0 0
    %1446 = vmatpush2.bf16.xpose.msra.mxu0 0
    %1447 = vmatprep.subr.bf16.mxu0 0
    %1448 = vmatpush2.bf16.xpose.msra.mxu0 0
    %1449 = vmatprep.subr.bf16.mxu0 0
    %1450 = vmatpush2.bf16.xpose.msra.mxu0 0
    %1451 = vmatprep.subr.bf16.mxu0 0
    %1452 = vmatpush2.bf16.xpose.msra.mxu0 0
    %1453 = vmatprep.subr.bf16.mxu0 0
    %1454 = vmatpush2.bf16.xpose.msra.mxu0 0
    %1455 = vmatprep.subr.bf16.mxu0 0
    %1456 = vmatpush2.bf16.xpose.msra.mxu0 0
    %1457 = vmatprep.mubr.bf16.mxu0 0
    %1458 = vmatmul.mubr.bf16.gmra.mxu0 %v1402
    %v1459 = vpop.f32.mrf.mxu0
    %v1460 = vadd.f32 0.0, %v1459
    %v1461 = vpop.f32.mrf.mxu0
    %v1462 = vpop.f32.mrf.mxu0
    %v1463 = vadd.f32 0.0, %v1462
    %v1464 = vpop.f32.mrf.mxu0
    %1465 = vmatprep.mubr.bf16.mxu0 0
    %1466 = vmatmul.mubr.bf16.gmra.mxu0 %v1405
    %v1467 = vpop.f32.mrf.mxu0
    %v1468 = vadd.f32 0.0, %v1467
    %v1469 = vpop.f32.mrf.mxu0
    %v1470 = vpop.f32.mrf.mxu0
    %v1471 = vadd.f32 0.0, %v1470
    %v1472 = vpop.f32.mrf.mxu0
    %1473 = vmatprep.mubr.bf16.mxu0 0
    %1474 = vmatmul.mubr.bf16.gmra.mxu0 %v1408
    %v1475 = vpop.f32.mrf.mxu0
    %v1476 = vadd.f32 0.0, %v1475
    %v1477 = vpop.f32.mrf.mxu0
    %v1478 = vpop.f32.mrf.mxu0
    %v1479 = vadd.f32 0.0, %v1478
    %v1480 = vpop.f32.mrf.mxu0
    %1481 = vmatprep.mubr.bf16.mxu0 0
    %1482 = vmatmul.mubr.bf16.gmra.mxu0 %v1411
    %v1483 = vpop.f32.mrf.mxu0
    %v1484 = vadd.f32 0.0, %v1483
    %v1485 = vpop.f32.mrf.mxu0
    %v1486 = vpop.f32.mrf.mxu0
    %v1487 = vadd.f32 0.0, %v1486
    %v1488 = vpop.f32.mrf.mxu0
    %1489 = vdwg.mxu0
    %v1490 = vsel %vm795, %v1460, -1e+30
    %v1491 = vsel %vm796, %v1463, -1e+30
    %v1492 = vsel %vm797, %v1468, -1e+30
    %v1493 = vsel %vm798, %v1471, -1e+30
    %v1494 = vsel %vm799, %v1476, -1e+30
    %v1495 = vsel %vm800, %v1479, -1e+30
    %v1496 = vsel %vm801, %v1484, -1e+30
    %v1497 = vsel %vm802, %v1487, -1e+30
    %v1498 = vsel %vm901, %v1490, -inf
    %1499 = vmax.xlane.f32.xlu0 %v1498
    %v1500 = vpop.xlane.xlu0 %1499
    %v1501 = vsel %vm901, %v1491, -inf
    %1502 = vmax.xlane.f32.xlu0 %v1501
    %v1503 = vpop.xlane.xlu0 %1502
    %v1504 = vsel %vm901, %v1492, -inf
    %1505 = vmax.xlane.f32.xlu0 %v1504
    %v1506 = vpop.xlane.xlu0 %1505
    %v1507 = vsel %vm901, %v1493, -inf
    %1508 = vmax.xlane.f32.xlu0 %v1507
    %v1509 = vpop.xlane.xlu0 %1508
    %v1510 = vsel %vm901, %v1494, -inf
    %1511 = vmax.xlane.f32.xlu0 %v1510
    %v1512 = vpop.xlane.xlu0 %1511
    %v1513 = vsel %vm901, %v1495, -inf
    %1514 = vmax.xlane.f32.xlu0 %v1513
    %v1515 = vpop.xlane.xlu0 %1514
    %v1516 = vsel %vm901, %v1496, -inf
    %1517 = vmax.xlane.f32.xlu0 %v1516
    %v1518 = vpop.xlane.xlu0 %1517
    %v1519 = vsel %vm901, %v1497, -inf
    %1520 = vmax.xlane.f32.xlu0 %v1519
    %v1521 = vpop.xlane.xlu0 %1520
    %v1522 = vsub.f32 %v1490, %v1500
    %v1523 = vsub.f32 %v1491, %v1503
    %v1524 = vsub.f32 %v1492, %v1506
    %v1525 = vsub.f32 %v1493, %v1509
    %v1526 = vsub.f32 %v1494, %v1512
    %v1527 = vsub.f32 %v1495, %v1515
    %v1528 = vsub.f32 %v1496, %v1518
    %v1529 = vsub.f32 %v1497, %v1521
    %v1530 = vmul.f32 %v1522, 1.442695
    %v1531 = vpow.pop %v1530
    %v1532 = vmul.f32 %v1523, 1.442695
    %v1533 = vpow.pop %v1532
    %v1534 = vmul.f32 %v1524, 1.442695
    %v1535 = vpow.pop %v1534
    %v1536 = vmul.f32 %v1525, 1.442695
    %v1537 = vpow.pop %v1536
    %v1538 = vmul.f32 %v1526, 1.442695
    %v1539 = vpow.pop %v1538
    %v1540 = vmul.f32 %v1527, 1.442695
    %v1541 = vpow.pop %v1540
    %v1542 = vmul.f32 %v1528, 1.442695
    %v1543 = vpow.pop %v1542
    %v1544 = vmul.f32 %v1529, 1.442695
    %v1545 = vpow.pop %v1544
    %v1546 = vsel %vm901, %v1531, 0.0
    %1547 = vadd.xlane.f32.xlu0 %v1546
    %v1548 = vpop.xlane.xlu0 %1547
    %v1549 = vsel %vm901, %v1533, 0.0
    %1550 = vadd.xlane.f32.xlu0 %v1549
    %v1551 = vpop.xlane.xlu0 %1550
    %v1552 = vsel %vm901, %v1535, 0.0
    %1553 = vadd.xlane.f32.xlu0 %v1552
    %v1554 = vpop.xlane.xlu0 %1553
    %v1555 = vsel %vm901, %v1537, 0.0
    %1556 = vadd.xlane.f32.xlu0 %v1555
    %v1557 = vpop.xlane.xlu0 %1556
    %v1558 = vsel %vm901, %v1539, 0.0
    %1559 = vadd.xlane.f32.xlu0 %v1558
    %v1560 = vpop.xlane.xlu0 %1559
    %v1561 = vsel %vm901, %v1541, 0.0
    %1562 = vadd.xlane.f32.xlu0 %v1561
    %v1563 = vpop.xlane.xlu0 %1562
    %v1564 = vsel %vm901, %v1543, 0.0
    %1565 = vadd.xlane.f32.xlu0 %v1564
    %v1566 = vpop.xlane.xlu0 %1565
    %v1567 = vsel %vm901, %v1545, 0.0
    %1568 = vadd.xlane.f32.xlu0 %v1567
    %v1569 = vpop.xlane.xlu0 %1568
    %v1570 = vpack.c.bf16 %v1533, %v1531
    %v1571 = vpack.c.bf16 %v1537, %v1535
    %v1572 = vpack.c.bf16 %v1541, %v1539
    %v1573 = vpack.c.bf16 %v1545, %v1543
    %1574 = vrot.lane.b32.xlu0 %v776, 64
    %v1575 = vpop.permute.xlu0 %1574
    %1576 = vrot.lane.b32.xlu0 %v777, 64
    %v1577 = vpop.permute.xlu0 %1576
    %1578 = vrot.lane.b32.xlu0 %v778, 64
    %v1579 = vpop.permute.xlu0 %1578
    %1580 = vrot.lane.b32.xlu0 %v779, 64
    %v1581 = vpop.permute.xlu0 %1580
    %v1587 = vsel %vm901, %v1570, 0
    %v1590 = vsel %vm901, %v1571, 0
    %v1593 = vsel %vm901, %v1572, 0
    %v1596 = vsel %vm901, %v1573, 0
    %1598 = vmatprep.subr.bf16.mxu0 0
    %1599 = vmatpush1.bf16.msra.mxu0 0
    %1600 = vmatprep.subr.bf16.mxu0 0
    %1601 = vmatpush1.bf16.msra.mxu0 0
    %1602 = vmatprep.subr.bf16.mxu0 0
    %1603 = vmatpush1.bf16.msra.mxu0 0
    %1604 = vmatprep.subr.bf16.mxu0 0
    %1605 = vmatpush1.bf16.msra.mxu0 0
    %1606 = vmatprep.subr.bf16.mxu0 0
    %1607 = vmatpush1.bf16.msra.mxu0 %v1581
    %1608 = vmatprep.subr.bf16.mxu0 0
    %1609 = vmatpush1.bf16.msra.mxu0 %v1579
    %1610 = vmatprep.subr.bf16.mxu0 0
    %1611 = vmatpush1.bf16.msra.mxu0 %v1577
    %1612 = vmatprep.subr.bf16.mxu0 0
    %1613 = vmatpush1.bf16.msra.mxu0 %v1575
    %1614 = vmatprep.subr.bf16.mxu0 0
    %1615 = vmatpush2.bf16.msra.mxu0 0
    %1616 = vmatprep.subr.bf16.mxu0 0
    %1617 = vmatpush2.bf16.msra.mxu0 0
    %1618 = vmatprep.subr.bf16.mxu0 0
    %1619 = vmatpush2.bf16.msra.mxu0 0
    %1620 = vmatprep.subr.bf16.mxu0 0
    %1621 = vmatpush2.bf16.msra.mxu0 0
    %1622 = vmatprep.subr.bf16.mxu0 0
    %1623 = vmatpush2.bf16.msra.mxu0 0
    %1624 = vmatprep.subr.bf16.mxu0 0
    %1625 = vmatpush2.bf16.msra.mxu0 0
    %1626 = vmatprep.subr.bf16.mxu0 0
    %1627 = vmatpush2.bf16.msra.mxu0 0
    %1628 = vmatprep.subr.bf16.mxu0 0
    %1629 = vmatpush2.bf16.msra.mxu0 0
    %1630 = vmatprep.mubr.bf16.mxu0 0
    %1631 = vmatmul.mubr.bf16.gmra.mxu0 %v1587
    %v1632 = vpop.f32.mrf.mxu0
    %v1633 = vadd.f32 0.0, %v1632
    %v1634 = vpop.f32.mrf.mxu0
    %v1635 = vpop.f32.mrf.mxu0
    %v1636 = vadd.f32 0.0, %v1635
    %v1637 = vpop.f32.mrf.mxu0
    %1638 = vmatprep.mubr.bf16.mxu0 0
    %1639 = vmatmul.mubr.bf16.gmra.mxu0 %v1590
    %v1640 = vpop.f32.mrf.mxu0
    %v1641 = vadd.f32 0.0, %v1640
    %v1642 = vpop.f32.mrf.mxu0
    %v1643 = vpop.f32.mrf.mxu0
    %v1644 = vadd.f32 0.0, %v1643
    %v1645 = vpop.f32.mrf.mxu0
    %1646 = vmatprep.mubr.bf16.mxu0 0
    %1647 = vmatmul.mubr.bf16.gmra.mxu0 %v1593
    %v1648 = vpop.f32.mrf.mxu0
    %v1649 = vadd.f32 0.0, %v1648
    %v1650 = vpop.f32.mrf.mxu0
    %v1651 = vpop.f32.mrf.mxu0
    %v1652 = vadd.f32 0.0, %v1651
    %v1653 = vpop.f32.mrf.mxu0
    %1654 = vmatprep.mubr.bf16.mxu0 0
    %1655 = vmatmul.mubr.bf16.gmra.mxu0 %v1596
    %v1656 = vpop.f32.mrf.mxu0
    %v1657 = vadd.f32 0.0, %v1656
    %v1658 = vpop.f32.mrf.mxu0
    %v1659 = vpop.f32.mrf.mxu0
    %v1660 = vadd.f32 0.0, %v1659
    %v1661 = vpop.f32.mrf.mxu0
    %1662 = vdwg.mxu0
    %v1663 = vrcp.pop %v1548
    %v1664 = vrcp.pop %v1551
    %v1665 = vrcp.pop %v1554
    %v1666 = vrcp.pop %v1557
    %v1667 = vrcp.pop %v1560
    %v1668 = vrcp.pop %v1563
    %v1669 = vrcp.pop %v1566
    %v1670 = vrcp.pop %v1569
    %v1671 = vmul.f32 %v1633, %v1663
    %v1672 = vmul.f32 %v1636, %v1664
    %v1673 = vmul.f32 %v1641, %v1665
    %v1674 = vmul.f32 %v1644, %v1666
    %v1675 = vmul.f32 %v1649, %v1667
    %v1676 = vmul.f32 %v1652, %v1668
    %v1677 = vmul.f32 %v1657, %v1669
    %v1678 = vmul.f32 %v1660, %v1670
    %v1679 = vpack.c.bf16 %v1672, %v1671
    %v1680 = vpack.c.bf16 %v1674, %v1673
    %v1681 = vpack.c.bf16 %v1676, %v1675
    %v1682 = vpack.c.bf16 %v1678, %v1677
    %1683 = vrot.lane.b32.xlu0 %v760, 32
    %v1684 = vpop.permute.xlu0 %1683
    %1685 = vrot.lane.b32.xlu0 %v761, 32
    %v1686 = vpop.permute.xlu0 %1685
    %1687 = vrot.lane.b32.xlu0 %v762, 32
    %v1688 = vpop.permute.xlu0 %1687
    %1689 = vrot.lane.b32.xlu0 %v763, 32
    %v1690 = vpop.permute.xlu0 %1689
    %1691 = vrot.lane.b32.xlu0 %v768, 32
    %v1692 = vpop.permute.xlu0 %1691
    %1693 = vrot.lane.b32.xlu0 %v769, 32
    %v1694 = vpop.permute.xlu0 %1693
    %1695 = vrot.lane.b32.xlu0 %v770, 32
    %v1696 = vpop.permute.xlu0 %1695
    %1697 = vrot.lane.b32.xlu0 %v771, 32
    %v1698 = vpop.permute.xlu0 %1697
    %v1700 = vsel %vm803, %v1684, 0
    %v1703 = vsel %vm803, %v1686, 0
    %v1706 = vsel %vm803, %v1688, 0
    %v1709 = vsel %vm803, %v1690, 0
    %v1712 = vsel %vm803, %v1692, 0
    %v1715 = vsel %vm803, %v1694, 0
    %v1718 = vsel %vm803, %v1696, 0
    %v1721 = vsel %vm803, %v1698, 0
    %1723 = vmatprep.subr.bf16.mxu0 0
    %1724 = vmatpush1.bf16.xpose.msra.mxu0 0
    %1725 = vmatprep.subr.bf16.mxu0 0
    %1726 = vmatpush1.bf16.xpose.msra.mxu0 0
    %1727 = vmatprep.subr.bf16.mxu0 0
    %1728 = vmatpush1.bf16.xpose.msra.mxu0 0
    %1729 = vmatprep.subr.bf16.mxu0 0
    %1730 = vmatpush1.bf16.xpose.msra.mxu0 0
    %1731 = vmatprep.subr.bf16.mxu0 0
    %1732 = vmatpush1.bf16.xpose.msra.mxu0 %v1721
    %1733 = vmatprep.subr.bf16.mxu0 0
    %1734 = vmatpush1.bf16.xpose.msra.mxu0 %v1718
    %1735 = vmatprep.subr.bf16.mxu0 0
    %1736 = vmatpush1.bf16.xpose.msra.mxu0 %v1715
    %1737 = vmatprep.subr.bf16.mxu0 0
    %1738 = vmatpush1.bf16.xpose.msra.mxu0 %v1712
    %1739 = vmatprep.subr.bf16.mxu0 0
    %1740 = vmatpush2.bf16.xpose.msra.mxu0 0
    %1741 = vmatprep.subr.bf16.mxu0 0
    %1742 = vmatpush2.bf16.xpose.msra.mxu0 0
    %1743 = vmatprep.subr.bf16.mxu0 0
    %1744 = vmatpush2.bf16.xpose.msra.mxu0 0
    %1745 = vmatprep.subr.bf16.mxu0 0
    %1746 = vmatpush2.bf16.xpose.msra.mxu0 0
    %1747 = vmatprep.subr.bf16.mxu0 0
    %1748 = vmatpush2.bf16.xpose.msra.mxu0 0
    %1749 = vmatprep.subr.bf16.mxu0 0
    %1750 = vmatpush2.bf16.xpose.msra.mxu0 0
    %1751 = vmatprep.subr.bf16.mxu0 0
    %1752 = vmatpush2.bf16.xpose.msra.mxu0 0
    %1753 = vmatprep.subr.bf16.mxu0 0
    %1754 = vmatpush2.bf16.xpose.msra.mxu0 0
    %1755 = vmatprep.mubr.bf16.mxu0 0
    %1756 = vmatmul.mubr.bf16.gmra.mxu0 %v1700
    %v1757 = vpop.f32.mrf.mxu0
    %v1758 = vadd.f32 0.0, %v1757
    %v1759 = vpop.f32.mrf.mxu0
    %v1760 = vpop.f32.mrf.mxu0
    %v1761 = vadd.f32 0.0, %v1760
    %v1762 = vpop.f32.mrf.mxu0
    %1763 = vmatprep.mubr.bf16.mxu0 0
    %1764 = vmatmul.mubr.bf16.gmra.mxu0 %v1703
    %v1765 = vpop.f32.mrf.mxu0
    %v1766 = vadd.f32 0.0, %v1765
    %v1767 = vpop.f32.mrf.mxu0
    %v1768 = vpop.f32.mrf.mxu0
    %v1769 = vadd.f32 0.0, %v1768
    %v1770 = vpop.f32.mrf.mxu0
    %1771 = vmatprep.mubr.bf16.mxu0 0
    %1772 = vmatmul.mubr.bf16.gmra.mxu0 %v1706
    %v1773 = vpop.f32.mrf.mxu0
    %v1774 = vadd.f32 0.0, %v1773
    %v1775 = vpop.f32.mrf.mxu0
    %v1776 = vpop.f32.mrf.mxu0
    %v1777 = vadd.f32 0.0, %v1776
    %v1778 = vpop.f32.mrf.mxu0
    %1779 = vmatprep.mubr.bf16.mxu0 0
    %1780 = vmatmul.mubr.bf16.gmra.mxu0 %v1709
    %v1781 = vpop.f32.mrf.mxu0
    %v1782 = vadd.f32 0.0, %v1781
    %v1783 = vpop.f32.mrf.mxu0
    %v1784 = vpop.f32.mrf.mxu0
    %v1785 = vadd.f32 0.0, %v1784
    %v1786 = vpop.f32.mrf.mxu0
    %1787 = vdwg.mxu0
    %v1788 = vsel %vm795, %v1758, -1e+30
    %v1789 = vsel %vm796, %v1761, -1e+30
    %v1790 = vsel %vm797, %v1766, -1e+30
    %v1791 = vsel %vm798, %v1769, -1e+30
    %v1792 = vsel %vm799, %v1774, -1e+30
    %v1793 = vsel %vm800, %v1777, -1e+30
    %v1794 = vsel %vm801, %v1782, -1e+30
    %v1795 = vsel %vm802, %v1785, -1e+30
    %v1796 = vsel %vm901, %v1788, -inf
    %1797 = vmax.xlane.f32.xlu0 %v1796
    %v1798 = vpop.xlane.xlu0 %1797
    %v1799 = vsel %vm901, %v1789, -inf
    %1800 = vmax.xlane.f32.xlu0 %v1799
    %v1801 = vpop.xlane.xlu0 %1800
    %v1802 = vsel %vm901, %v1790, -inf
    %1803 = vmax.xlane.f32.xlu0 %v1802
    %v1804 = vpop.xlane.xlu0 %1803
    %v1805 = vsel %vm901, %v1791, -inf
    %1806 = vmax.xlane.f32.xlu0 %v1805
    %v1807 = vpop.xlane.xlu0 %1806
    %v1808 = vsel %vm901, %v1792, -inf
    %1809 = vmax.xlane.f32.xlu0 %v1808
    %v1810 = vpop.xlane.xlu0 %1809
    %v1811 = vsel %vm901, %v1793, -inf
    %1812 = vmax.xlane.f32.xlu0 %v1811
    %v1813 = vpop.xlane.xlu0 %1812
    %v1814 = vsel %vm901, %v1794, -inf
    %1815 = vmax.xlane.f32.xlu0 %v1814
    %v1816 = vpop.xlane.xlu0 %1815
    %v1817 = vsel %vm901, %v1795, -inf
    %1818 = vmax.xlane.f32.xlu0 %v1817
    %v1819 = vpop.xlane.xlu0 %1818
    %v1820 = vsub.f32 %v1788, %v1798
    %v1821 = vsub.f32 %v1789, %v1801
    %v1822 = vsub.f32 %v1790, %v1804
    %v1823 = vsub.f32 %v1791, %v1807
    %v1824 = vsub.f32 %v1792, %v1810
    %v1825 = vsub.f32 %v1793, %v1813
    %v1826 = vsub.f32 %v1794, %v1816
    %v1827 = vsub.f32 %v1795, %v1819
    %v1828 = vmul.f32 %v1820, 1.442695
    %v1829 = vpow.pop %v1828
    %v1830 = vmul.f32 %v1821, 1.442695
    %v1831 = vpow.pop %v1830
    %v1832 = vmul.f32 %v1822, 1.442695
    %v1833 = vpow.pop %v1832
    %v1834 = vmul.f32 %v1823, 1.442695
    %v1835 = vpow.pop %v1834
    %v1836 = vmul.f32 %v1824, 1.442695
    %v1837 = vpow.pop %v1836
    %v1838 = vmul.f32 %v1825, 1.442695
    %v1839 = vpow.pop %v1838
    %v1840 = vmul.f32 %v1826, 1.442695
    %v1841 = vpow.pop %v1840
    %v1842 = vmul.f32 %v1827, 1.442695
    %v1843 = vpow.pop %v1842
    %v1844 = vsel %vm901, %v1829, 0.0
    %1845 = vadd.xlane.f32.xlu0 %v1844
    %v1846 = vpop.xlane.xlu0 %1845
    %v1847 = vsel %vm901, %v1831, 0.0
    %1848 = vadd.xlane.f32.xlu0 %v1847
    %v1849 = vpop.xlane.xlu0 %1848
    %v1850 = vsel %vm901, %v1833, 0.0
    %1851 = vadd.xlane.f32.xlu0 %v1850
    %v1852 = vpop.xlane.xlu0 %1851
    %v1853 = vsel %vm901, %v1835, 0.0
    %1854 = vadd.xlane.f32.xlu0 %v1853
    %v1855 = vpop.xlane.xlu0 %1854
    %v1856 = vsel %vm901, %v1837, 0.0
    %1857 = vadd.xlane.f32.xlu0 %v1856
    %v1858 = vpop.xlane.xlu0 %1857
    %v1859 = vsel %vm901, %v1839, 0.0
    %1860 = vadd.xlane.f32.xlu0 %v1859
    %v1861 = vpop.xlane.xlu0 %1860
    %v1862 = vsel %vm901, %v1841, 0.0
    %1863 = vadd.xlane.f32.xlu0 %v1862
    %v1864 = vpop.xlane.xlu0 %1863
    %v1865 = vsel %vm901, %v1843, 0.0
    %1866 = vadd.xlane.f32.xlu0 %v1865
    %v1867 = vpop.xlane.xlu0 %1866
    %v1868 = vpack.c.bf16 %v1831, %v1829
    %v1869 = vpack.c.bf16 %v1835, %v1833
    %v1870 = vpack.c.bf16 %v1839, %v1837
    %v1871 = vpack.c.bf16 %v1843, %v1841
    %1872 = vrot.lane.b32.xlu0 %v776, 32
    %v1873 = vpop.permute.xlu0 %1872
    %1874 = vrot.lane.b32.xlu0 %v777, 32
    %v1875 = vpop.permute.xlu0 %1874
    %1876 = vrot.lane.b32.xlu0 %v778, 32
    %v1877 = vpop.permute.xlu0 %1876
    %1878 = vrot.lane.b32.xlu0 %v779, 32
    %v1879 = vpop.permute.xlu0 %1878
    %v1885 = vsel %vm901, %v1868, 0
    %v1888 = vsel %vm901, %v1869, 0
    %v1891 = vsel %vm901, %v1870, 0
    %v1894 = vsel %vm901, %v1871, 0
    %1896 = vmatprep.subr.bf16.mxu0 0
    %1897 = vmatpush1.bf16.msra.mxu0 0
    %1898 = vmatprep.subr.bf16.mxu0 0
    %1899 = vmatpush1.bf16.msra.mxu0 0
    %1900 = vmatprep.subr.bf16.mxu0 0
    %1901 = vmatpush1.bf16.msra.mxu0 0
    %1902 = vmatprep.subr.bf16.mxu0 0
    %1903 = vmatpush1.bf16.msra.mxu0 0
    %1904 = vmatprep.subr.bf16.mxu0 0
    %1905 = vmatpush1.bf16.msra.mxu0 %v1879
    %1906 = vmatprep.subr.bf16.mxu0 0
    %1907 = vmatpush1.bf16.msra.mxu0 %v1877
    %1908 = vmatprep.subr.bf16.mxu0 0
    %1909 = vmatpush1.bf16.msra.mxu0 %v1875
    %1910 = vmatprep.subr.bf16.mxu0 0
    %1911 = vmatpush1.bf16.msra.mxu0 %v1873
    %1912 = vmatprep.subr.bf16.mxu0 0
    %1913 = vmatpush2.bf16.msra.mxu0 0
    %1914 = vmatprep.subr.bf16.mxu0 0
    %1915 = vmatpush2.bf16.msra.mxu0 0
    %1916 = vmatprep.subr.bf16.mxu0 0
    %1917 = vmatpush2.bf16.msra.mxu0 0
    %1918 = vmatprep.subr.bf16.mxu0 0
    %1919 = vmatpush2.bf16.msra.mxu0 0
    %1920 = vmatprep.subr.bf16.mxu0 0
    %1921 = vmatpush2.bf16.msra.mxu0 0
    %1922 = vmatprep.subr.bf16.mxu0 0
    %1923 = vmatpush2.bf16.msra.mxu0 0
    %1924 = vmatprep.subr.bf16.mxu0 0
    %1925 = vmatpush2.bf16.msra.mxu0 0
    %1926 = vmatprep.subr.bf16.mxu0 0
    %1927 = vmatpush2.bf16.msra.mxu0 0
    %1928 = vmatprep.mubr.bf16.mxu0 0
    %1929 = vmatmul.mubr.bf16.gmra.mxu0 %v1885
    %v1930 = vpop.f32.mrf.mxu0
    %v1931 = vadd.f32 0.0, %v1930
    %v1932 = vpop.f32.mrf.mxu0
    %v1933 = vpop.f32.mrf.mxu0
    %v1934 = vadd.f32 0.0, %v1933
    %v1935 = vpop.f32.mrf.mxu0
    %1936 = vmatprep.mubr.bf16.mxu0 0
    %1937 = vmatmul.mubr.bf16.gmra.mxu0 %v1888
    %v1938 = vpop.f32.mrf.mxu0
    %v1939 = vadd.f32 0.0, %v1938
    %v1940 = vpop.f32.mrf.mxu0
    %v1941 = vpop.f32.mrf.mxu0
    %v1942 = vadd.f32 0.0, %v1941
    %v1943 = vpop.f32.mrf.mxu0
    %1944 = vmatprep.mubr.bf16.mxu0 0
    %1945 = vmatmul.mubr.bf16.gmra.mxu0 %v1891
    %v1946 = vpop.f32.mrf.mxu0
    %v1947 = vadd.f32 0.0, %v1946
    %v1948 = vpop.f32.mrf.mxu0
    %v1949 = vpop.f32.mrf.mxu0
    %v1950 = vadd.f32 0.0, %v1949
    %v1951 = vpop.f32.mrf.mxu0
    %1952 = vmatprep.mubr.bf16.mxu0 0
    %1953 = vmatmul.mubr.bf16.gmra.mxu0 %v1894
    %v1954 = vpop.f32.mrf.mxu0
    %v1955 = vadd.f32 0.0, %v1954
    %v1956 = vpop.f32.mrf.mxu0
    %v1957 = vpop.f32.mrf.mxu0
    %v1958 = vadd.f32 0.0, %v1957
    %v1959 = vpop.f32.mrf.mxu0
    %1960 = vdwg.mxu0
    %v1961 = vrcp.pop %v1846
    %v1962 = vrcp.pop %v1849
    %v1963 = vrcp.pop %v1852
    %v1964 = vrcp.pop %v1855
    %v1965 = vrcp.pop %v1858
    %v1966 = vrcp.pop %v1861
    %v1967 = vrcp.pop %v1864
    %v1968 = vrcp.pop %v1867
    %v1969 = vmul.f32 %v1931, %v1961
    %v1970 = vmul.f32 %v1934, %v1962
    %v1971 = vmul.f32 %v1939, %v1963
    %v1972 = vmul.f32 %v1942, %v1964
    %v1973 = vmul.f32 %v1947, %v1965
    %v1974 = vmul.f32 %v1950, %v1966
    %v1975 = vmul.f32 %v1955, %v1967
    %v1976 = vmul.f32 %v1958, %v1968
    %v1977 = vpack.c.bf16 %v1970, %v1969
    %v1978 = vpack.c.bf16 %v1972, %v1971
    %v1979 = vpack.c.bf16 %v1974, %v1973
    %v1980 = vpack.c.bf16 %v1976, %v1975
    %1985 = vrot.lane.b32.xlu0 %v1381, 32
    %v1986 = vpop.permute.xlu0 %1985
    %1987 = vrot.lane.b32.xlu0 %v1382, 32
    %v1988 = vpop.permute.xlu0 %1987
    %1989 = vrot.lane.b32.xlu0 %v1383, 32
    %v1990 = vpop.permute.xlu0 %1989
    %1991 = vrot.lane.b32.xlu0 %v1384, 32
    %v1992 = vpop.permute.xlu0 %1991
    %1997 = vrot.lane.b32.xlu0 %v1679, 64
    %v1998 = vpop.permute.xlu0 %1997
    %1999 = vrot.lane.b32.xlu0 %v1680, 64
    %v2000 = vpop.permute.xlu0 %1999
    %2001 = vrot.lane.b32.xlu0 %v1681, 64
    %v2002 = vpop.permute.xlu0 %2001
    %2003 = vrot.lane.b32.xlu0 %v1682, 64
    %v2004 = vpop.permute.xlu0 %2003
    %2009 = vrot.lane.b32.xlu0 %v1977, 96
    %v2010 = vpop.permute.xlu0 %2009
    %2011 = vrot.lane.b32.xlu0 %v1978, 96
    %v2012 = vpop.permute.xlu0 %2011
    %2013 = vrot.lane.b32.xlu0 %v1979, 96
    %v2014 = vpop.permute.xlu0 %2013
    %2015 = vrot.lane.b32.xlu0 %v1980, 96
    %v2016 = vpop.permute.xlu0 %2015
    %v2019 = vsel %vm803, %v1071, %v1986
    %v2022 = vsel %vm803, %v1072, %v1988
    %v2025 = vsel %vm803, %v1073, %v1990
    %v2028 = vsel %vm803, %v1074, %v1992
    %v2030 = vsel %vm901, %v2019, %v1998
    %v2032 = vsel %vm901, %v2022, %v2000
    %v2034 = vsel %vm901, %v2025, %v2002
    %v2036 = vsel %vm901, %v2028, %v2004
    %vm2037 = vcmask 785408
    %v2039 = vsel %vm2037, %v2030, %v2010
    %v2042 = vsel %vm2037, %v2032, %v2012
    %v2045 = vsel %vm2037, %v2034, %v2014
    %v2048 = vsel %vm2037, %v2036, %v2016
    %v2051 = vsel %vm803, %v764, 0
    %v2054 = vsel %vm803, %v765, 0
    %v2057 = vsel %vm803, %v766, 0
    %v2060 = vsel %vm803, %v767, 0
    %v2063 = vsel %vm803, %v772, 0
    %v2066 = vsel %vm803, %v773, 0
    %v2069 = vsel %vm803, %v774, 0
    %v2072 = vsel %vm803, %v775, 0
    %2074 = vmatprep.subr.bf16.mxu0 0
    %2075 = vmatpush1.bf16.xpose.msra.mxu0 0
    %2076 = vmatprep.subr.bf16.mxu0 0
    %2077 = vmatpush1.bf16.xpose.msra.mxu0 0
    %2078 = vmatprep.subr.bf16.mxu0 0
    %2079 = vmatpush1.bf16.xpose.msra.mxu0 0
    %2080 = vmatprep.subr.bf16.mxu0 0
    %2081 = vmatpush1.bf16.xpose.msra.mxu0 0
    %2082 = vmatprep.subr.bf16.mxu0 0
    %2083 = vmatpush1.bf16.xpose.msra.mxu0 %v2072
    %2084 = vmatprep.subr.bf16.mxu0 0
    %2085 = vmatpush1.bf16.xpose.msra.mxu0 %v2069
    %2086 = vmatprep.subr.bf16.mxu0 0
    %2087 = vmatpush1.bf16.xpose.msra.mxu0 %v2066
    %2088 = vmatprep.subr.bf16.mxu0 0
    %2089 = vmatpush1.bf16.xpose.msra.mxu0 %v2063
    %2090 = vmatprep.subr.bf16.mxu0 0
    %2091 = vmatpush2.bf16.xpose.msra.mxu0 0
    %2092 = vmatprep.subr.bf16.mxu0 0
    %2093 = vmatpush2.bf16.xpose.msra.mxu0 0
    %2094 = vmatprep.subr.bf16.mxu0 0
    %2095 = vmatpush2.bf16.xpose.msra.mxu0 0
    %2096 = vmatprep.subr.bf16.mxu0 0
    %2097 = vmatpush2.bf16.xpose.msra.mxu0 0
    %2098 = vmatprep.subr.bf16.mxu0 0
    %2099 = vmatpush2.bf16.xpose.msra.mxu0 0
    %2100 = vmatprep.subr.bf16.mxu0 0
    %2101 = vmatpush2.bf16.xpose.msra.mxu0 0
    %2102 = vmatprep.subr.bf16.mxu0 0
    %2103 = vmatpush2.bf16.xpose.msra.mxu0 0
    %2104 = vmatprep.subr.bf16.mxu0 0
    %2105 = vmatpush2.bf16.xpose.msra.mxu0 0
    %2106 = vmatprep.mubr.bf16.mxu0 0
    %2107 = vmatmul.mubr.bf16.gmra.mxu0 %v2051
    %v2108 = vpop.f32.mrf.mxu0
    %v2109 = vadd.f32 0.0, %v2108
    %v2110 = vpop.f32.mrf.mxu0
    %v2111 = vpop.f32.mrf.mxu0
    %v2112 = vadd.f32 0.0, %v2111
    %v2113 = vpop.f32.mrf.mxu0
    %2114 = vmatprep.mubr.bf16.mxu0 0
    %2115 = vmatmul.mubr.bf16.gmra.mxu0 %v2054
    %v2116 = vpop.f32.mrf.mxu0
    %v2117 = vadd.f32 0.0, %v2116
    %v2118 = vpop.f32.mrf.mxu0
    %v2119 = vpop.f32.mrf.mxu0
    %v2120 = vadd.f32 0.0, %v2119
    %v2121 = vpop.f32.mrf.mxu0
    %2122 = vmatprep.mubr.bf16.mxu0 0
    %2123 = vmatmul.mubr.bf16.gmra.mxu0 %v2057
    %v2124 = vpop.f32.mrf.mxu0
    %v2125 = vadd.f32 0.0, %v2124
    %v2126 = vpop.f32.mrf.mxu0
    %v2127 = vpop.f32.mrf.mxu0
    %v2128 = vadd.f32 0.0, %v2127
    %v2129 = vpop.f32.mrf.mxu0
    %2130 = vmatprep.mubr.bf16.mxu0 0
    %2131 = vmatmul.mubr.bf16.gmra.mxu0 %v2060
    %v2132 = vpop.f32.mrf.mxu0
    %v2133 = vadd.f32 0.0, %v2132
    %v2134 = vpop.f32.mrf.mxu0
    %v2135 = vpop.f32.mrf.mxu0
    %v2136 = vadd.f32 0.0, %v2135
    %v2137 = vpop.f32.mrf.mxu0
    %2138 = vdwg.mxu0
    %v2139 = vsel %vm795, %v2109, -1e+30
    %v2140 = vsel %vm796, %v2112, -1e+30
    %v2141 = vsel %vm797, %v2117, -1e+30
    %v2142 = vsel %vm798, %v2120, -1e+30
    %v2143 = vsel %vm799, %v2125, -1e+30
    %v2144 = vsel %vm800, %v2128, -1e+30
    %v2145 = vsel %vm801, %v2133, -1e+30
    %v2146 = vsel %vm802, %v2136, -1e+30
    %v2147 = vsel %vm901, %v2139, -inf
    %2148 = vmax.xlane.f32.xlu0 %v2147
    %v2149 = vpop.xlane.xlu0 %2148
    %v2150 = vsel %vm901, %v2140, -inf
    %2151 = vmax.xlane.f32.xlu0 %v2150
    %v2152 = vpop.xlane.xlu0 %2151
    %v2153 = vsel %vm901, %v2141, -inf
    %2154 = vmax.xlane.f32.xlu0 %v2153
    %v2155 = vpop.xlane.xlu0 %2154
    %v2156 = vsel %vm901, %v2142, -inf
    %2157 = vmax.xlane.f32.xlu0 %v2156
    %v2158 = vpop.xlane.xlu0 %2157
    %v2159 = vsel %vm901, %v2143, -inf
    %2160 = vmax.xlane.f32.xlu0 %v2159
    %v2161 = vpop.xlane.xlu0 %2160
    %v2162 = vsel %vm901, %v2144, -inf
    %2163 = vmax.xlane.f32.xlu0 %v2162
    %v2164 = vpop.xlane.xlu0 %2163
    %v2165 = vsel %vm901, %v2145, -inf
    %2166 = vmax.xlane.f32.xlu0 %v2165
    %v2167 = vpop.xlane.xlu0 %2166
    %v2168 = vsel %vm901, %v2146, -inf
    %2169 = vmax.xlane.f32.xlu0 %v2168
    %v2170 = vpop.xlane.xlu0 %2169
    %v2171 = vsub.f32 %v2139, %v2149
    %v2172 = vsub.f32 %v2140, %v2152
    %v2173 = vsub.f32 %v2141, %v2155
    %v2174 = vsub.f32 %v2142, %v2158
    %v2175 = vsub.f32 %v2143, %v2161
    %v2176 = vsub.f32 %v2144, %v2164
    %v2177 = vsub.f32 %v2145, %v2167
    %v2178 = vsub.f32 %v2146, %v2170
    %v2179 = vmul.f32 %v2171, 1.442695
    %v2180 = vpow.pop %v2179
    %v2181 = vmul.f32 %v2172, 1.442695
    %v2182 = vpow.pop %v2181
    %v2183 = vmul.f32 %v2173, 1.442695
    %v2184 = vpow.pop %v2183
    %v2185 = vmul.f32 %v2174, 1.442695
    %v2186 = vpow.pop %v2185
    %v2187 = vmul.f32 %v2175, 1.442695
    %v2188 = vpow.pop %v2187
    %v2189 = vmul.f32 %v2176, 1.442695
    %v2190 = vpow.pop %v2189
    %v2191 = vmul.f32 %v2177, 1.442695
    %v2192 = vpow.pop %v2191
    %v2193 = vmul.f32 %v2178, 1.442695
    %v2194 = vpow.pop %v2193
    %v2195 = vsel %vm901, %v2180, 0.0
    %2196 = vadd.xlane.f32.xlu0 %v2195
    %v2197 = vpop.xlane.xlu0 %2196
    %v2198 = vsel %vm901, %v2182, 0.0
    %2199 = vadd.xlane.f32.xlu0 %v2198
    %v2200 = vpop.xlane.xlu0 %2199
    %v2201 = vsel %vm901, %v2184, 0.0
    %2202 = vadd.xlane.f32.xlu0 %v2201
    %v2203 = vpop.xlane.xlu0 %2202
    %v2204 = vsel %vm901, %v2186, 0.0
    %2205 = vadd.xlane.f32.xlu0 %v2204
    %v2206 = vpop.xlane.xlu0 %2205
    %v2207 = vsel %vm901, %v2188, 0.0
    %2208 = vadd.xlane.f32.xlu0 %v2207
    %v2209 = vpop.xlane.xlu0 %2208
    %v2210 = vsel %vm901, %v2190, 0.0
    %2211 = vadd.xlane.f32.xlu0 %v2210
    %v2212 = vpop.xlane.xlu0 %2211
    %v2213 = vsel %vm901, %v2192, 0.0
    %2214 = vadd.xlane.f32.xlu0 %v2213
    %v2215 = vpop.xlane.xlu0 %2214
    %v2216 = vsel %vm901, %v2194, 0.0
    %2217 = vadd.xlane.f32.xlu0 %v2216
    %v2218 = vpop.xlane.xlu0 %2217
    %v2219 = vpack.c.bf16 %v2182, %v2180
    %v2220 = vpack.c.bf16 %v2186, %v2184
    %v2221 = vpack.c.bf16 %v2190, %v2188
    %v2222 = vpack.c.bf16 %v2194, %v2192
    %v2224 = vsel %vm901, %v2219, 0
    %v2227 = vsel %vm901, %v2220, 0
    %v2230 = vsel %vm901, %v2221, 0
    %v2233 = vsel %vm901, %v2222, 0
    %2235 = vmatprep.subr.bf16.mxu0 0
    %2236 = vmatpush1.bf16.msra.mxu0 0
    %2237 = vmatprep.subr.bf16.mxu0 0
    %2238 = vmatpush1.bf16.msra.mxu0 0
    %2239 = vmatprep.subr.bf16.mxu0 0
    %2240 = vmatpush1.bf16.msra.mxu0 0
    %2241 = vmatprep.subr.bf16.mxu0 0
    %2242 = vmatpush1.bf16.msra.mxu0 0
    %2243 = vmatprep.subr.bf16.mxu0 0
    %2244 = vmatpush1.bf16.msra.mxu0 %v783
    %2245 = vmatprep.subr.bf16.mxu0 0
    %2246 = vmatpush1.bf16.msra.mxu0 %v782
    %2247 = vmatprep.subr.bf16.mxu0 0
    %2248 = vmatpush1.bf16.msra.mxu0 %v781
    %2249 = vmatprep.subr.bf16.mxu0 0
    %2250 = vmatpush1.bf16.msra.mxu0 %v780
    %2251 = vmatprep.subr.bf16.mxu0 0
    %2252 = vmatpush2.bf16.msra.mxu0 0
    %2253 = vmatprep.subr.bf16.mxu0 0
    %2254 = vmatpush2.bf16.msra.mxu0 0
    %2255 = vmatprep.subr.bf16.mxu0 0
    %2256 = vmatpush2.bf16.msra.mxu0 0
    %2257 = vmatprep.subr.bf16.mxu0 0
    %2258 = vmatpush2.bf16.msra.mxu0 0
    %2259 = vmatprep.subr.bf16.mxu0 0
    %2260 = vmatpush2.bf16.msra.mxu0 0
    %2261 = vmatprep.subr.bf16.mxu0 0
    %2262 = vmatpush2.bf16.msra.mxu0 0
    %2263 = vmatprep.subr.bf16.mxu0 0
    %2264 = vmatpush2.bf16.msra.mxu0 0
    %2265 = vmatprep.subr.bf16.mxu0 0
    %2266 = vmatpush2.bf16.msra.mxu0 0
    %2267 = vmatprep.mubr.bf16.mxu0 0
    %2268 = vmatmul.mubr.bf16.gmra.mxu0 %v2224
    %v2269 = vpop.f32.mrf.mxu0
    %v2270 = vadd.f32 0.0, %v2269
    %v2271 = vpop.f32.mrf.mxu0
    %v2272 = vpop.f32.mrf.mxu0
    %v2273 = vadd.f32 0.0, %v2272
    %v2274 = vpop.f32.mrf.mxu0
    %2275 = vmatprep.mubr.bf16.mxu0 0
    %2276 = vmatmul.mubr.bf16.gmra.mxu0 %v2227
    %v2277 = vpop.f32.mrf.mxu0
    %v2278 = vadd.f32 0.0, %v2277
    %v2279 = vpop.f32.mrf.mxu0
    %v2280 = vpop.f32.mrf.mxu0
    %v2281 = vadd.f32 0.0, %v2280
    %v2282 = vpop.f32.mrf.mxu0
    %2283 = vmatprep.mubr.bf16.mxu0 0
    %2284 = vmatmul.mubr.bf16.gmra.mxu0 %v2230
    %v2285 = vpop.f32.mrf.mxu0
    %v2286 = vadd.f32 0.0, %v2285
    %v2287 = vpop.f32.mrf.mxu0
    %v2288 = vpop.f32.mrf.mxu0
    %v2289 = vadd.f32 0.0, %v2288
    %v2290 = vpop.f32.mrf.mxu0
    %2291 = vmatprep.mubr.bf16.mxu0 0
    %2292 = vmatmul.mubr.bf16.gmra.mxu0 %v2233
    %v2293 = vpop.f32.mrf.mxu0
    %v2294 = vadd.f32 0.0, %v2293
    %v2295 = vpop.f32.mrf.mxu0
    %v2296 = vpop.f32.mrf.mxu0
    %v2297 = vadd.f32 0.0, %v2296
    %v2298 = vpop.f32.mrf.mxu0
    %2299 = vdwg.mxu0
    %v2300 = vrcp.pop %v2197
    %v2301 = vrcp.pop %v2200
    %v2302 = vrcp.pop %v2203
    %v2303 = vrcp.pop %v2206
    %v2304 = vrcp.pop %v2209
    %v2305 = vrcp.pop %v2212
    %v2306 = vrcp.pop %v2215
    %v2307 = vrcp.pop %v2218
    %v2308 = vmul.f32 %v2270, %v2300
    %v2309 = vmul.f32 %v2273, %v2301
    %v2310 = vmul.f32 %v2278, %v2302
    %v2311 = vmul.f32 %v2281, %v2303
    %v2312 = vmul.f32 %v2286, %v2304
    %v2313 = vmul.f32 %v2289, %v2305
    %v2314 = vmul.f32 %v2294, %v2306
    %v2315 = vmul.f32 %v2297, %v2307
    %v2316 = vpack.c.bf16 %v2309, %v2308
    %v2317 = vpack.c.bf16 %v2311, %v2310
    %v2318 = vpack.c.bf16 %v2313, %v2312
    %v2319 = vpack.c.bf16 %v2315, %v2314
    %2324 = vrot.lane.b32.xlu0 %v764, 96
    %v2325 = vpop.permute.xlu0 %2324
    %2326 = vrot.lane.b32.xlu0 %v765, 96
    %v2327 = vpop.permute.xlu0 %2326
    %2328 = vrot.lane.b32.xlu0 %v766, 96
    %v2329 = vpop.permute.xlu0 %2328
    %2330 = vrot.lane.b32.xlu0 %v767, 96
    %v2331 = vpop.permute.xlu0 %2330
    %2336 = vrot.lane.b32.xlu0 %v772, 96
    %v2337 = vpop.permute.xlu0 %2336
    %2338 = vrot.lane.b32.xlu0 %v773, 96
    %v2339 = vpop.permute.xlu0 %2338
    %2340 = vrot.lane.b32.xlu0 %v774, 96
    %v2341 = vpop.permute.xlu0 %2340
    %2342 = vrot.lane.b32.xlu0 %v775, 96
    %v2343 = vpop.permute.xlu0 %2342
    %v2345 = vsel %vm803, %v2325, 0
    %v2348 = vsel %vm803, %v2327, 0
    %v2351 = vsel %vm803, %v2329, 0
    %v2354 = vsel %vm803, %v2331, 0
    %v2357 = vsel %vm803, %v2337, 0
    %v2360 = vsel %vm803, %v2339, 0
    %v2363 = vsel %vm803, %v2341, 0
    %v2366 = vsel %vm803, %v2343, 0
    %2368 = vmatprep.subr.bf16.mxu0 0
    %2369 = vmatpush1.bf16.xpose.msra.mxu0 0
    %2370 = vmatprep.subr.bf16.mxu0 0
    %2371 = vmatpush1.bf16.xpose.msra.mxu0 0
    %2372 = vmatprep.subr.bf16.mxu0 0
    %2373 = vmatpush1.bf16.xpose.msra.mxu0 0
    %2374 = vmatprep.subr.bf16.mxu0 0
    %2375 = vmatpush1.bf16.xpose.msra.mxu0 0
    %2376 = vmatprep.subr.bf16.mxu0 0
    %2377 = vmatpush1.bf16.xpose.msra.mxu0 %v2366
    %2378 = vmatprep.subr.bf16.mxu0 0
    %2379 = vmatpush1.bf16.xpose.msra.mxu0 %v2363
    %2380 = vmatprep.subr.bf16.mxu0 0
    %2381 = vmatpush1.bf16.xpose.msra.mxu0 %v2360
    %2382 = vmatprep.subr.bf16.mxu0 0
    %2383 = vmatpush1.bf16.xpose.msra.mxu0 %v2357
    %2384 = vmatprep.subr.bf16.mxu0 0
    %2385 = vmatpush2.bf16.xpose.msra.mxu0 0
    %2386 = vmatprep.subr.bf16.mxu0 0
    %2387 = vmatpush2.bf16.xpose.msra.mxu0 0
    %2388 = vmatprep.subr.bf16.mxu0 0
    %2389 = vmatpush2.bf16.xpose.msra.mxu0 0
    %2390 = vmatprep.subr.bf16.mxu0 0
    %2391 = vmatpush2.bf16.xpose.msra.mxu0 0
    %2392 = vmatprep.subr.bf16.mxu0 0
    %2393 = vmatpush2.bf16.xpose.msra.mxu0 0
    %2394 = vmatprep.subr.bf16.mxu0 0
    %2395 = vmatpush2.bf16.xpose.msra.mxu0 0
    %2396 = vmatprep.subr.bf16.mxu0 0
    %2397 = vmatpush2.bf16.xpose.msra.mxu0 0
    %2398 = vmatprep.subr.bf16.mxu0 0
    %2399 = vmatpush2.bf16.xpose.msra.mxu0 0
    %2400 = vmatprep.mubr.bf16.mxu0 0
    %2401 = vmatmul.mubr.bf16.gmra.mxu0 %v2345
    %v2402 = vpop.f32.mrf.mxu0
    %v2403 = vadd.f32 0.0, %v2402
    %v2404 = vpop.f32.mrf.mxu0
    %v2405 = vpop.f32.mrf.mxu0
    %v2406 = vadd.f32 0.0, %v2405
    %v2407 = vpop.f32.mrf.mxu0
    %2408 = vmatprep.mubr.bf16.mxu0 0
    %2409 = vmatmul.mubr.bf16.gmra.mxu0 %v2348
    %v2410 = vpop.f32.mrf.mxu0
    %v2411 = vadd.f32 0.0, %v2410
    %v2412 = vpop.f32.mrf.mxu0
    %v2413 = vpop.f32.mrf.mxu0
    %v2414 = vadd.f32 0.0, %v2413
    %v2415 = vpop.f32.mrf.mxu0
    %2416 = vmatprep.mubr.bf16.mxu0 0
    %2417 = vmatmul.mubr.bf16.gmra.mxu0 %v2351
    %v2418 = vpop.f32.mrf.mxu0
    %v2419 = vadd.f32 0.0, %v2418
    %v2420 = vpop.f32.mrf.mxu0
    %v2421 = vpop.f32.mrf.mxu0
    %v2422 = vadd.f32 0.0, %v2421
    %v2423 = vpop.f32.mrf.mxu0
    %2424 = vmatprep.mubr.bf16.mxu0 0
    %2425 = vmatmul.mubr.bf16.gmra.mxu0 %v2354
    %v2426 = vpop.f32.mrf.mxu0
    %v2427 = vadd.f32 0.0, %v2426
    %v2428 = vpop.f32.mrf.mxu0
    %v2429 = vpop.f32.mrf.mxu0
    %v2430 = vadd.f32 0.0, %v2429
    %v2431 = vpop.f32.mrf.mxu0
    %2432 = vdwg.mxu0
    %v2433 = vsel %vm795, %v2403, -1e+30
    %v2434 = vsel %vm796, %v2406, -1e+30
    %v2435 = vsel %vm797, %v2411, -1e+30
    %v2436 = vsel %vm798, %v2414, -1e+30
    %v2437 = vsel %vm799, %v2419, -1e+30
    %v2438 = vsel %vm800, %v2422, -1e+30
    %v2439 = vsel %vm801, %v2427, -1e+30
    %v2440 = vsel %vm802, %v2430, -1e+30
    %v2441 = vsel %vm901, %v2433, -inf
    %2442 = vmax.xlane.f32.xlu0 %v2441
    %v2443 = vpop.xlane.xlu0 %2442
    %v2444 = vsel %vm901, %v2434, -inf
    %2445 = vmax.xlane.f32.xlu0 %v2444
    %v2446 = vpop.xlane.xlu0 %2445
    %v2447 = vsel %vm901, %v2435, -inf
    %2448 = vmax.xlane.f32.xlu0 %v2447
    %v2449 = vpop.xlane.xlu0 %2448
    %v2450 = vsel %vm901, %v2436, -inf
    %2451 = vmax.xlane.f32.xlu0 %v2450
    %v2452 = vpop.xlane.xlu0 %2451
    %v2453 = vsel %vm901, %v2437, -inf
    %2454 = vmax.xlane.f32.xlu0 %v2453
    %v2455 = vpop.xlane.xlu0 %2454
    %v2456 = vsel %vm901, %v2438, -inf
    %2457 = vmax.xlane.f32.xlu0 %v2456
    %v2458 = vpop.xlane.xlu0 %2457
    %v2459 = vsel %vm901, %v2439, -inf
    %2460 = vmax.xlane.f32.xlu0 %v2459
    %v2461 = vpop.xlane.xlu0 %2460
    %v2462 = vsel %vm901, %v2440, -inf
    %2463 = vmax.xlane.f32.xlu0 %v2462
    %v2464 = vpop.xlane.xlu0 %2463
    %v2465 = vsub.f32 %v2433, %v2443
    %v2466 = vsub.f32 %v2434, %v2446
    %v2467 = vsub.f32 %v2435, %v2449
    %v2468 = vsub.f32 %v2436, %v2452
    %v2469 = vsub.f32 %v2437, %v2455
    %v2470 = vsub.f32 %v2438, %v2458
    %v2471 = vsub.f32 %v2439, %v2461
    %v2472 = vsub.f32 %v2440, %v2464
    %v2473 = vmul.f32 %v2465, 1.442695
    %v2474 = vpow.pop %v2473
    %v2475 = vmul.f32 %v2466, 1.442695
    %v2476 = vpow.pop %v2475
    %v2477 = vmul.f32 %v2467, 1.442695
    %v2478 = vpow.pop %v2477
    %v2479 = vmul.f32 %v2468, 1.442695
    %v2480 = vpow.pop %v2479
    %v2481 = vmul.f32 %v2469, 1.442695
    %v2482 = vpow.pop %v2481
    %v2483 = vmul.f32 %v2470, 1.442695
    %v2484 = vpow.pop %v2483
    %v2485 = vmul.f32 %v2471, 1.442695
    %v2486 = vpow.pop %v2485
    %v2487 = vmul.f32 %v2472, 1.442695
    %v2488 = vpow.pop %v2487
    %v2489 = vsel %vm901, %v2474, 0.0
    %2490 = vadd.xlane.f32.xlu0 %v2489
    %v2491 = vpop.xlane.xlu0 %2490
    %v2492 = vsel %vm901, %v2476, 0.0
    %2493 = vadd.xlane.f32.xlu0 %v2492
    %v2494 = vpop.xlane.xlu0 %2493
    %v2495 = vsel %vm901, %v2478, 0.0
    %2496 = vadd.xlane.f32.xlu0 %v2495
    %v2497 = vpop.xlane.xlu0 %2496
    %v2498 = vsel %vm901, %v2480, 0.0
    %2499 = vadd.xlane.f32.xlu0 %v2498
    %v2500 = vpop.xlane.xlu0 %2499
    %v2501 = vsel %vm901, %v2482, 0.0
    %2502 = vadd.xlane.f32.xlu0 %v2501
    %v2503 = vpop.xlane.xlu0 %2502
    %v2504 = vsel %vm901, %v2484, 0.0
    %2505 = vadd.xlane.f32.xlu0 %v2504
    %v2506 = vpop.xlane.xlu0 %2505
    %v2507 = vsel %vm901, %v2486, 0.0
    %2508 = vadd.xlane.f32.xlu0 %v2507
    %v2509 = vpop.xlane.xlu0 %2508
    %v2510 = vsel %vm901, %v2488, 0.0
    %2511 = vadd.xlane.f32.xlu0 %v2510
    %v2512 = vpop.xlane.xlu0 %2511
    %v2513 = vpack.c.bf16 %v2476, %v2474
    %v2514 = vpack.c.bf16 %v2480, %v2478
    %v2515 = vpack.c.bf16 %v2484, %v2482
    %v2516 = vpack.c.bf16 %v2488, %v2486
    %2521 = vrot.lane.b32.xlu0 %v780, 96
    %v2522 = vpop.permute.xlu0 %2521
    %2523 = vrot.lane.b32.xlu0 %v781, 96
    %v2524 = vpop.permute.xlu0 %2523
    %2525 = vrot.lane.b32.xlu0 %v782, 96
    %v2526 = vpop.permute.xlu0 %2525
    %2527 = vrot.lane.b32.xlu0 %v783, 96
    %v2528 = vpop.permute.xlu0 %2527
    %v2534 = vsel %vm901, %v2513, 0
    %v2537 = vsel %vm901, %v2514, 0
    %v2540 = vsel %vm901, %v2515, 0
    %v2543 = vsel %vm901, %v2516, 0
    %2545 = vmatprep.subr.bf16.mxu0 0
    %2546 = vmatpush1.bf16.msra.mxu0 0
    %2547 = vmatprep.subr.bf16.mxu0 0
    %2548 = vmatpush1.bf16.msra.mxu0 0
    %2549 = vmatprep.subr.bf16.mxu0 0
    %2550 = vmatpush1.bf16.msra.mxu0 0
    %2551 = vmatprep.subr.bf16.mxu0 0
    %2552 = vmatpush1.bf16.msra.mxu0 0
    %2553 = vmatprep.subr.bf16.mxu0 0
    %2554 = vmatpush1.bf16.msra.mxu0 %v2528
    %2555 = vmatprep.subr.bf16.mxu0 0
    %2556 = vmatpush1.bf16.msra.mxu0 %v2526
    %2557 = vmatprep.subr.bf16.mxu0 0
    %2558 = vmatpush1.bf16.msra.mxu0 %v2524
    %2559 = vmatprep.subr.bf16.mxu0 0
    %2560 = vmatpush1.bf16.msra.mxu0 %v2522
    %2561 = vmatprep.subr.bf16.mxu0 0
    %2562 = vmatpush2.bf16.msra.mxu0 0
    %2563 = vmatprep.subr.bf16.mxu0 0
    %2564 = vmatpush2.bf16.msra.mxu0 0
    %2565 = vmatprep.subr.bf16.mxu0 0
    %2566 = vmatpush2.bf16.msra.mxu0 0
    %2567 = vmatprep.subr.bf16.mxu0 0
    %2568 = vmatpush2.bf16.msra.mxu0 0
    %2569 = vmatprep.subr.bf16.mxu0 0
    %2570 = vmatpush2.bf16.msra.mxu0 0
    %2571 = vmatprep.subr.bf16.mxu0 0
    %2572 = vmatpush2.bf16.msra.mxu0 0
    %2573 = vmatprep.subr.bf16.mxu0 0
    %2574 = vmatpush2.bf16.msra.mxu0 0
    %2575 = vmatprep.subr.bf16.mxu0 0
    %2576 = vmatpush2.bf16.msra.mxu0 0
    %2577 = vmatprep.mubr.bf16.mxu0 0
    %2578 = vmatmul.mubr.bf16.gmra.mxu0 %v2534
    %v2579 = vpop.f32.mrf.mxu0
    %v2580 = vadd.f32 0.0, %v2579
    %v2581 = vpop.f32.mrf.mxu0
    %v2582 = vpop.f32.mrf.mxu0
    %v2583 = vadd.f32 0.0, %v2582
    %v2584 = vpop.f32.mrf.mxu0
    %2585 = vmatprep.mubr.bf16.mxu0 0
    %2586 = vmatmul.mubr.bf16.gmra.mxu0 %v2537
    %v2587 = vpop.f32.mrf.mxu0
    %v2588 = vadd.f32 0.0, %v2587
    %v2589 = vpop.f32.mrf.mxu0
    %v2590 = vpop.f32.mrf.mxu0
    %v2591 = vadd.f32 0.0, %v2590
    %v2592 = vpop.f32.mrf.mxu0
    %2593 = vmatprep.mubr.bf16.mxu0 0
    %2594 = vmatmul.mubr.bf16.gmra.mxu0 %v2540
    %v2595 = vpop.f32.mrf.mxu0
    %v2596 = vadd.f32 0.0, %v2595
    %v2597 = vpop.f32.mrf.mxu0
    %v2598 = vpop.f32.mrf.mxu0
    %v2599 = vadd.f32 0.0, %v2598
    %v2600 = vpop.f32.mrf.mxu0
    %2601 = vmatprep.mubr.bf16.mxu0 0
    %2602 = vmatmul.mubr.bf16.gmra.mxu0 %v2543
    %v2603 = vpop.f32.mrf.mxu0
    %v2604 = vadd.f32 0.0, %v2603
    %v2605 = vpop.f32.mrf.mxu0
    %v2606 = vpop.f32.mrf.mxu0
    %v2607 = vadd.f32 0.0, %v2606
    %v2608 = vpop.f32.mrf.mxu0
    %2609 = vdwg.mxu0
    %v2610 = vrcp.pop %v2491
    %v2611 = vrcp.pop %v2494
    %v2612 = vrcp.pop %v2497
    %v2613 = vrcp.pop %v2500
    %v2614 = vrcp.pop %v2503
    %v2615 = vrcp.pop %v2506
    %v2616 = vrcp.pop %v2509
    %v2617 = vrcp.pop %v2512
    %v2618 = vmul.f32 %v2580, %v2610
    %v2619 = vmul.f32 %v2583, %v2611
    %v2620 = vmul.f32 %v2588, %v2612
    %v2621 = vmul.f32 %v2591, %v2613
    %v2622 = vmul.f32 %v2596, %v2614
    %v2623 = vmul.f32 %v2599, %v2615
    %v2624 = vmul.f32 %v2604, %v2616
    %v2625 = vmul.f32 %v2607, %v2617
    %v2626 = vpack.c.bf16 %v2619, %v2618
    %v2627 = vpack.c.bf16 %v2621, %v2620
    %v2628 = vpack.c.bf16 %v2623, %v2622
    %v2629 = vpack.c.bf16 %v2625, %v2624
    %2630 = vrot.lane.b32.xlu0 %v764, 64
    %v2631 = vpop.permute.xlu0 %2630
    %2632 = vrot.lane.b32.xlu0 %v765, 64
    %v2633 = vpop.permute.xlu0 %2632
    %2634 = vrot.lane.b32.xlu0 %v766, 64
    %v2635 = vpop.permute.xlu0 %2634
    %2636 = vrot.lane.b32.xlu0 %v767, 64
    %v2637 = vpop.permute.xlu0 %2636
    %2638 = vrot.lane.b32.xlu0 %v772, 64
    %v2639 = vpop.permute.xlu0 %2638
    %2640 = vrot.lane.b32.xlu0 %v773, 64
    %v2641 = vpop.permute.xlu0 %2640
    %2642 = vrot.lane.b32.xlu0 %v774, 64
    %v2643 = vpop.permute.xlu0 %2642
    %2644 = vrot.lane.b32.xlu0 %v775, 64
    %v2645 = vpop.permute.xlu0 %2644
    %v2647 = vsel %vm803, %v2631, 0
    %v2650 = vsel %vm803, %v2633, 0
    %v2653 = vsel %vm803, %v2635, 0
    %v2656 = vsel %vm803, %v2637, 0
    %v2659 = vsel %vm803, %v2639, 0
    %v2662 = vsel %vm803, %v2641, 0
    %v2665 = vsel %vm803, %v2643, 0
    %v2668 = vsel %vm803, %v2645, 0
    %2670 = vmatprep.subr.bf16.mxu0 0
    %2671 = vmatpush1.bf16.xpose.msra.mxu0 0
    %2672 = vmatprep.subr.bf16.mxu0 0
    %2673 = vmatpush1.bf16.xpose.msra.mxu0 0
    %2674 = vmatprep.subr.bf16.mxu0 0
    %2675 = vmatpush1.bf16.xpose.msra.mxu0 0
    %2676 = vmatprep.subr.bf16.mxu0 0
    %2677 = vmatpush1.bf16.xpose.msra.mxu0 0
    %2678 = vmatprep.subr.bf16.mxu0 0
    %2679 = vmatpush1.bf16.xpose.msra.mxu0 %v2668
    %2680 = vmatprep.subr.bf16.mxu0 0
    %2681 = vmatpush1.bf16.xpose.msra.mxu0 %v2665
    %2682 = vmatprep.subr.bf16.mxu0 0
    %2683 = vmatpush1.bf16.xpose.msra.mxu0 %v2662
    %2684 = vmatprep.subr.bf16.mxu0 0
    %2685 = vmatpush1.bf16.xpose.msra.mxu0 %v2659
    %2686 = vmatprep.subr.bf16.mxu0 0
    %2687 = vmatpush2.bf16.xpose.msra.mxu0 0
    %2688 = vmatprep.subr.bf16.mxu0 0
    %2689 = vmatpush2.bf16.xpose.msra.mxu0 0
    %2690 = vmatprep.subr.bf16.mxu0 0
    %2691 = vmatpush2.bf16.xpose.msra.mxu0 0
    %2692 = vmatprep.subr.bf16.mxu0 0
    %2693 = vmatpush2.bf16.xpose.msra.mxu0 0
    %2694 = vmatprep.subr.bf16.mxu0 0
    %2695 = vmatpush2.bf16.xpose.msra.mxu0 0
    %2696 = vmatprep.subr.bf16.mxu0 0
    %2697 = vmatpush2.bf16.xpose.msra.mxu0 0
    %2698 = vmatprep.subr.bf16.mxu0 0
    %2699 = vmatpush2.bf16.xpose.msra.mxu0 0
    %2700 = vmatprep.subr.bf16.mxu0 0
    %2701 = vmatpush2.bf16.xpose.msra.mxu0 0
    %2702 = vmatprep.mubr.bf16.mxu0 0
    %2703 = vmatmul.mubr.bf16.gmra.mxu0 %v2647
    %v2704 = vpop.f32.mrf.mxu0
    %v2705 = vadd.f32 0.0, %v2704
    %v2706 = vpop.f32.mrf.mxu0
    %v2707 = vpop.f32.mrf.mxu0
    %v2708 = vadd.f32 0.0, %v2707
    %v2709 = vpop.f32.mrf.mxu0
    %2710 = vmatprep.mubr.bf16.mxu0 0
    %2711 = vmatmul.mubr.bf16.gmra.mxu0 %v2650
    %v2712 = vpop.f32.mrf.mxu0
    %v2713 = vadd.f32 0.0, %v2712
    %v2714 = vpop.f32.mrf.mxu0
    %v2715 = vpop.f32.mrf.mxu0
    %v2716 = vadd.f32 0.0, %v2715
    %v2717 = vpop.f32.mrf.mxu0
    %2718 = vmatprep.mubr.bf16.mxu0 0
    %2719 = vmatmul.mubr.bf16.gmra.mxu0 %v2653
    %v2720 = vpop.f32.mrf.mxu0
    %v2721 = vadd.f32 0.0, %v2720
    %v2722 = vpop.f32.mrf.mxu0
    %v2723 = vpop.f32.mrf.mxu0
    %v2724 = vadd.f32 0.0, %v2723
    %v2725 = vpop.f32.mrf.mxu0
    %2726 = vmatprep.mubr.bf16.mxu0 0
    %2727 = vmatmul.mubr.bf16.gmra.mxu0 %v2656
    %v2728 = vpop.f32.mrf.mxu0
    %v2729 = vadd.f32 0.0, %v2728
    %v2730 = vpop.f32.mrf.mxu0
    %v2731 = vpop.f32.mrf.mxu0
    %v2732 = vadd.f32 0.0, %v2731
    %v2733 = vpop.f32.mrf.mxu0
    %2734 = vdwg.mxu0
    %v2735 = vsel %vm795, %v2705, -1e+30
    %v2736 = vsel %vm796, %v2708, -1e+30
    %v2737 = vsel %vm797, %v2713, -1e+30
    %v2738 = vsel %vm798, %v2716, -1e+30
    %v2739 = vsel %vm799, %v2721, -1e+30
    %v2740 = vsel %vm800, %v2724, -1e+30
    %v2741 = vsel %vm801, %v2729, -1e+30
    %v2742 = vsel %vm802, %v2732, -1e+30
    %v2743 = vsel %vm901, %v2735, -inf
    %2744 = vmax.xlane.f32.xlu0 %v2743
    %v2745 = vpop.xlane.xlu0 %2744
    %v2746 = vsel %vm901, %v2736, -inf
    %2747 = vmax.xlane.f32.xlu0 %v2746
    %v2748 = vpop.xlane.xlu0 %2747
    %v2749 = vsel %vm901, %v2737, -inf
    %2750 = vmax.xlane.f32.xlu0 %v2749
    %v2751 = vpop.xlane.xlu0 %2750
    %v2752 = vsel %vm901, %v2738, -inf
    %2753 = vmax.xlane.f32.xlu0 %v2752
    %v2754 = vpop.xlane.xlu0 %2753
    %v2755 = vsel %vm901, %v2739, -inf
    %2756 = vmax.xlane.f32.xlu0 %v2755
    %v2757 = vpop.xlane.xlu0 %2756
    %v2758 = vsel %vm901, %v2740, -inf
    %2759 = vmax.xlane.f32.xlu0 %v2758
    %v2760 = vpop.xlane.xlu0 %2759
    %v2761 = vsel %vm901, %v2741, -inf
    %2762 = vmax.xlane.f32.xlu0 %v2761
    %v2763 = vpop.xlane.xlu0 %2762
    %v2764 = vsel %vm901, %v2742, -inf
    %2765 = vmax.xlane.f32.xlu0 %v2764
    %v2766 = vpop.xlane.xlu0 %2765
    %v2767 = vsub.f32 %v2735, %v2745
    %v2768 = vsub.f32 %v2736, %v2748
    %v2769 = vsub.f32 %v2737, %v2751
    %v2770 = vsub.f32 %v2738, %v2754
    %v2771 = vsub.f32 %v2739, %v2757
    %v2772 = vsub.f32 %v2740, %v2760
    %v2773 = vsub.f32 %v2741, %v2763
    %v2774 = vsub.f32 %v2742, %v2766
    %v2775 = vmul.f32 %v2767, 1.442695
    %v2776 = vpow.pop %v2775
    %v2777 = vmul.f32 %v2768, 1.442695
    %v2778 = vpow.pop %v2777
    %v2779 = vmul.f32 %v2769, 1.442695
    %v2780 = vpow.pop %v2779
    %v2781 = vmul.f32 %v2770, 1.442695
    %v2782 = vpow.pop %v2781
    %v2783 = vmul.f32 %v2771, 1.442695
    %v2784 = vpow.pop %v2783
    %v2785 = vmul.f32 %v2772, 1.442695
    %v2786 = vpow.pop %v2785
    %v2787 = vmul.f32 %v2773, 1.442695
    %v2788 = vpow.pop %v2787
    %v2789 = vmul.f32 %v2774, 1.442695
    %v2790 = vpow.pop %v2789
    %v2791 = vsel %vm901, %v2776, 0.0
    %2792 = vadd.xlane.f32.xlu0 %v2791
    %v2793 = vpop.xlane.xlu0 %2792
    %v2794 = vsel %vm901, %v2778, 0.0
    %2795 = vadd.xlane.f32.xlu0 %v2794
    %v2796 = vpop.xlane.xlu0 %2795
    %v2797 = vsel %vm901, %v2780, 0.0
    %2798 = vadd.xlane.f32.xlu0 %v2797
    %v2799 = vpop.xlane.xlu0 %2798
    %v2800 = vsel %vm901, %v2782, 0.0
    %2801 = vadd.xlane.f32.xlu0 %v2800
    %v2802 = vpop.xlane.xlu0 %2801
    %v2803 = vsel %vm901, %v2784, 0.0
    %2804 = vadd.xlane.f32.xlu0 %v2803
    %v2805 = vpop.xlane.xlu0 %2804
    %v2806 = vsel %vm901, %v2786, 0.0
    %2807 = vadd.xlane.f32.xlu0 %v2806
    %v2808 = vpop.xlane.xlu0 %2807
    %v2809 = vsel %vm901, %v2788, 0.0
    %2810 = vadd.xlane.f32.xlu0 %v2809
    %v2811 = vpop.xlane.xlu0 %2810
    %v2812 = vsel %vm901, %v2790, 0.0
    %2813 = vadd.xlane.f32.xlu0 %v2812
    %v2814 = vpop.xlane.xlu0 %2813
    %v2815 = vpack.c.bf16 %v2778, %v2776
    %v2816 = vpack.c.bf16 %v2782, %v2780
    %v2817 = vpack.c.bf16 %v2786, %v2784
    %v2818 = vpack.c.bf16 %v2790, %v2788
    %2819 = vrot.lane.b32.xlu0 %v780, 64
    %v2820 = vpop.permute.xlu0 %2819
    %2821 = vrot.lane.b32.xlu0 %v781, 64
    %v2822 = vpop.permute.xlu0 %2821
    %2823 = vrot.lane.b32.xlu0 %v782, 64
    %v2824 = vpop.permute.xlu0 %2823
    %2825 = vrot.lane.b32.xlu0 %v783, 64
    %v2826 = vpop.permute.xlu0 %2825
    %v2832 = vsel %vm901, %v2815, 0
    %v2835 = vsel %vm901, %v2816, 0
    %v2838 = vsel %vm901, %v2817, 0
    %v2841 = vsel %vm901, %v2818, 0
    %2843 = vmatprep.subr.bf16.mxu0 0
    %2844 = vmatpush1.bf16.msra.mxu0 0
    %2845 = vmatprep.subr.bf16.mxu0 0
    %2846 = vmatpush1.bf16.msra.mxu0 0
    %2847 = vmatprep.subr.bf16.mxu0 0
    %2848 = vmatpush1.bf16.msra.mxu0 0
    %2849 = vmatprep.subr.bf16.mxu0 0
    %2850 = vmatpush1.bf16.msra.mxu0 0
    %2851 = vmatprep.subr.bf16.mxu0 0
    %2852 = vmatpush1.bf16.msra.mxu0 %v2826
    %2853 = vmatprep.subr.bf16.mxu0 0
    %2854 = vmatpush1.bf16.msra.mxu0 %v2824
    %2855 = vmatprep.subr.bf16.mxu0 0
    %2856 = vmatpush1.bf16.msra.mxu0 %v2822
    %2857 = vmatprep.subr.bf16.mxu0 0
    %2858 = vmatpush1.bf16.msra.mxu0 %v2820
    %2859 = vmatprep.subr.bf16.mxu0 0
    %2860 = vmatpush2.bf16.msra.mxu0 0
    %2861 = vmatprep.subr.bf16.mxu0 0
    %2862 = vmatpush2.bf16.msra.mxu0 0
    %2863 = vmatprep.subr.bf16.mxu0 0
    %2864 = vmatpush2.bf16.msra.mxu0 0
    %2865 = vmatprep.subr.bf16.mxu0 0
    %2866 = vmatpush2.bf16.msra.mxu0 0
    %2867 = vmatprep.subr.bf16.mxu0 0
    %2868 = vmatpush2.bf16.msra.mxu0 0
    %2869 = vmatprep.subr.bf16.mxu0 0
    %2870 = vmatpush2.bf16.msra.mxu0 0
    %2871 = vmatprep.subr.bf16.mxu0 0
    %2872 = vmatpush2.bf16.msra.mxu0 0
    %2873 = vmatprep.subr.bf16.mxu0 0
    %2874 = vmatpush2.bf16.msra.mxu0 0
    %2875 = vmatprep.mubr.bf16.mxu0 0
    %2876 = vmatmul.mubr.bf16.gmra.mxu0 %v2832
    %v2877 = vpop.f32.mrf.mxu0
    %v2878 = vadd.f32 0.0, %v2877
    %v2879 = vpop.f32.mrf.mxu0
    %v2880 = vpop.f32.mrf.mxu0
    %v2881 = vadd.f32 0.0, %v2880
    %v2882 = vpop.f32.mrf.mxu0
    %2883 = vmatprep.mubr.bf16.mxu0 0
    %2884 = vmatmul.mubr.bf16.gmra.mxu0 %v2835
    %v2885 = vpop.f32.mrf.mxu0
    %v2886 = vadd.f32 0.0, %v2885
    %v2887 = vpop.f32.mrf.mxu0
    %v2888 = vpop.f32.mrf.mxu0
    %v2889 = vadd.f32 0.0, %v2888
    %v2890 = vpop.f32.mrf.mxu0
    %2891 = vmatprep.mubr.bf16.mxu0 0
    %2892 = vmatmul.mubr.bf16.gmra.mxu0 %v2838
    %v2893 = vpop.f32.mrf.mxu0
    %v2894 = vadd.f32 0.0, %v2893
    %v2895 = vpop.f32.mrf.mxu0
    %v2896 = vpop.f32.mrf.mxu0
    %v2897 = vadd.f32 0.0, %v2896
    %v2898 = vpop.f32.mrf.mxu0
    %2899 = vmatprep.mubr.bf16.mxu0 0
    %2900 = vmatmul.mubr.bf16.gmra.mxu0 %v2841
    %v2901 = vpop.f32.mrf.mxu0
    %v2902 = vadd.f32 0.0, %v2901
    %v2903 = vpop.f32.mrf.mxu0
    %v2904 = vpop.f32.mrf.mxu0
    %v2905 = vadd.f32 0.0, %v2904
    %v2906 = vpop.f32.mrf.mxu0
    %2907 = vdwg.mxu0
    %v2908 = vrcp.pop %v2793
    %v2909 = vrcp.pop %v2796
    %v2910 = vrcp.pop %v2799
    %v2911 = vrcp.pop %v2802
    %v2912 = vrcp.pop %v2805
    %v2913 = vrcp.pop %v2808
    %v2914 = vrcp.pop %v2811
    %v2915 = vrcp.pop %v2814
    %v2916 = vmul.f32 %v2878, %v2908
    %v2917 = vmul.f32 %v2881, %v2909
    %v2918 = vmul.f32 %v2886, %v2910
    %v2919 = vmul.f32 %v2889, %v2911
    %v2920 = vmul.f32 %v2894, %v2912
    %v2921 = vmul.f32 %v2897, %v2913
    %v2922 = vmul.f32 %v2902, %v2914
    %v2923 = vmul.f32 %v2905, %v2915
    %v2924 = vpack.c.bf16 %v2917, %v2916
    %v2925 = vpack.c.bf16 %v2919, %v2918
    %v2926 = vpack.c.bf16 %v2921, %v2920
    %v2927 = vpack.c.bf16 %v2923, %v2922
    %2928 = vrot.lane.b32.xlu0 %v764, 32
    %v2929 = vpop.permute.xlu0 %2928
    %2930 = vrot.lane.b32.xlu0 %v765, 32
    %v2931 = vpop.permute.xlu0 %2930
    %2932 = vrot.lane.b32.xlu0 %v766, 32
    %v2933 = vpop.permute.xlu0 %2932
    %2934 = vrot.lane.b32.xlu0 %v767, 32
    %v2935 = vpop.permute.xlu0 %2934
    %2936 = vrot.lane.b32.xlu0 %v772, 32
    %v2937 = vpop.permute.xlu0 %2936
    %2938 = vrot.lane.b32.xlu0 %v773, 32
    %v2939 = vpop.permute.xlu0 %2938
    %2940 = vrot.lane.b32.xlu0 %v774, 32
    %v2941 = vpop.permute.xlu0 %2940
    %2942 = vrot.lane.b32.xlu0 %v775, 32
    %v2943 = vpop.permute.xlu0 %2942
    %v2945 = vsel %vm803, %v2929, 0
    %v2948 = vsel %vm803, %v2931, 0
    %v2951 = vsel %vm803, %v2933, 0
    %v2954 = vsel %vm803, %v2935, 0
    %v2957 = vsel %vm803, %v2937, 0
    %v2960 = vsel %vm803, %v2939, 0
    %v2963 = vsel %vm803, %v2941, 0
    %v2966 = vsel %vm803, %v2943, 0
    %2968 = vmatprep.subr.bf16.mxu0 0
    %2969 = vmatpush1.bf16.xpose.msra.mxu0 0
    %2970 = vmatprep.subr.bf16.mxu0 0
    %2971 = vmatpush1.bf16.xpose.msra.mxu0 0
    %2972 = vmatprep.subr.bf16.mxu0 0
    %2973 = vmatpush1.bf16.xpose.msra.mxu0 0
    %2974 = vmatprep.subr.bf16.mxu0 0
    %2975 = vmatpush1.bf16.xpose.msra.mxu0 0
    %2976 = vmatprep.subr.bf16.mxu0 0
    %2977 = vmatpush1.bf16.xpose.msra.mxu0 %v2966
    %2978 = vmatprep.subr.bf16.mxu0 0
    %2979 = vmatpush1.bf16.xpose.msra.mxu0 %v2963
    %2980 = vmatprep.subr.bf16.mxu0 0
    %2981 = vmatpush1.bf16.xpose.msra.mxu0 %v2960
    %2982 = vmatprep.subr.bf16.mxu0 0
    %2983 = vmatpush1.bf16.xpose.msra.mxu0 %v2957
    %2984 = vmatprep.subr.bf16.mxu0 0
    %2985 = vmatpush2.bf16.xpose.msra.mxu0 0
    %2986 = vmatprep.subr.bf16.mxu0 0
    %2987 = vmatpush2.bf16.xpose.msra.mxu0 0
    %2988 = vmatprep.subr.bf16.mxu0 0
    %2989 = vmatpush2.bf16.xpose.msra.mxu0 0
    %2990 = vmatprep.subr.bf16.mxu0 0
    %2991 = vmatpush2.bf16.xpose.msra.mxu0 0
    %2992 = vmatprep.subr.bf16.mxu0 0
    %2993 = vmatpush2.bf16.xpose.msra.mxu0 0
    %2994 = vmatprep.subr.bf16.mxu0 0
    %2995 = vmatpush2.bf16.xpose.msra.mxu0 0
    %2996 = vmatprep.subr.bf16.mxu0 0
    %2997 = vmatpush2.bf16.xpose.msra.mxu0 0
    %2998 = vmatprep.subr.bf16.mxu0 0
    %2999 = vmatpush2.bf16.xpose.msra.mxu0 0
    %3000 = vmatprep.mubr.bf16.mxu0 0
    %3001 = vmatmul.mubr.bf16.gmra.mxu0 %v2945
    %v3002 = vpop.f32.mrf.mxu0
    %v3003 = vadd.f32 0.0, %v3002
    %v3004 = vpop.f32.mrf.mxu0
    %v3005 = vpop.f32.mrf.mxu0
    %v3006 = vadd.f32 0.0, %v3005
    %v3007 = vpop.f32.mrf.mxu0
    %3008 = vmatprep.mubr.bf16.mxu0 0
    %3009 = vmatmul.mubr.bf16.gmra.mxu0 %v2948
    %v3010 = vpop.f32.mrf.mxu0
    %v3011 = vadd.f32 0.0, %v3010
    %v3012 = vpop.f32.mrf.mxu0
    %v3013 = vpop.f32.mrf.mxu0
    %v3014 = vadd.f32 0.0, %v3013
    %v3015 = vpop.f32.mrf.mxu0
    %3016 = vmatprep.mubr.bf16.mxu0 0
    %3017 = vmatmul.mubr.bf16.gmra.mxu0 %v2951
    %v3018 = vpop.f32.mrf.mxu0
    %v3019 = vadd.f32 0.0, %v3018
    %v3020 = vpop.f32.mrf.mxu0
    %v3021 = vpop.f32.mrf.mxu0
    %v3022 = vadd.f32 0.0, %v3021
    %v3023 = vpop.f32.mrf.mxu0
    %3024 = vmatprep.mubr.bf16.mxu0 0
    %3025 = vmatmul.mubr.bf16.gmra.mxu0 %v2954
    %v3026 = vpop.f32.mrf.mxu0
    %v3027 = vadd.f32 0.0, %v3026
    %v3028 = vpop.f32.mrf.mxu0
    %v3029 = vpop.f32.mrf.mxu0
    %v3030 = vadd.f32 0.0, %v3029
    %v3031 = vpop.f32.mrf.mxu0
    %3032 = vdwg.mxu0
    %v3033 = vsel %vm795, %v3003, -1e+30
    %v3034 = vsel %vm796, %v3006, -1e+30
    %v3035 = vsel %vm797, %v3011, -1e+30
    %v3036 = vsel %vm798, %v3014, -1e+30
    %v3037 = vsel %vm799, %v3019, -1e+30
    %v3038 = vsel %vm800, %v3022, -1e+30
    %v3039 = vsel %vm801, %v3027, -1e+30
    %v3040 = vsel %vm802, %v3030, -1e+30
    %v3041 = vsel %vm901, %v3033, -inf
    %3042 = vmax.xlane.f32.xlu0 %v3041
    %v3043 = vpop.xlane.xlu0 %3042
    %v3044 = vsel %vm901, %v3034, -inf
    %3045 = vmax.xlane.f32.xlu0 %v3044
    %v3046 = vpop.xlane.xlu0 %3045
    %v3047 = vsel %vm901, %v3035, -inf
    %3048 = vmax.xlane.f32.xlu0 %v3047
    %v3049 = vpop.xlane.xlu0 %3048
    %v3050 = vsel %vm901, %v3036, -inf
    %3051 = vmax.xlane.f32.xlu0 %v3050
    %v3052 = vpop.xlane.xlu0 %3051
    %v3053 = vsel %vm901, %v3037, -inf
    %3054 = vmax.xlane.f32.xlu0 %v3053
    %v3055 = vpop.xlane.xlu0 %3054
    %v3056 = vsel %vm901, %v3038, -inf
    %3057 = vmax.xlane.f32.xlu0 %v3056
    %v3058 = vpop.xlane.xlu0 %3057
    %v3059 = vsel %vm901, %v3039, -inf
    %3060 = vmax.xlane.f32.xlu0 %v3059
    %v3061 = vpop.xlane.xlu0 %3060
    %v3062 = vsel %vm901, %v3040, -inf
    %3063 = vmax.xlane.f32.xlu0 %v3062
    %v3064 = vpop.xlane.xlu0 %3063
    %v3065 = vsub.f32 %v3033, %v3043
    %v3066 = vsub.f32 %v3034, %v3046
    %v3067 = vsub.f32 %v3035, %v3049
    %v3068 = vsub.f32 %v3036, %v3052
    %v3069 = vsub.f32 %v3037, %v3055
    %v3070 = vsub.f32 %v3038, %v3058
    %v3071 = vsub.f32 %v3039, %v3061
    %v3072 = vsub.f32 %v3040, %v3064
    %v3073 = vmul.f32 %v3065, 1.442695
    %v3074 = vpow.pop %v3073
    %v3075 = vmul.f32 %v3066, 1.442695
    %v3076 = vpow.pop %v3075
    %v3077 = vmul.f32 %v3067, 1.442695
    %v3078 = vpow.pop %v3077
    %v3079 = vmul.f32 %v3068, 1.442695
    %v3080 = vpow.pop %v3079
    %v3081 = vmul.f32 %v3069, 1.442695
    %v3082 = vpow.pop %v3081
    %v3083 = vmul.f32 %v3070, 1.442695
    %v3084 = vpow.pop %v3083
    %v3085 = vmul.f32 %v3071, 1.442695
    %v3086 = vpow.pop %v3085
    %v3087 = vmul.f32 %v3072, 1.442695
    %v3088 = vpow.pop %v3087
    %v3089 = vsel %vm901, %v3074, 0.0
    %3090 = vadd.xlane.f32.xlu0 %v3089
    %v3091 = vpop.xlane.xlu0 %3090
    %v3092 = vsel %vm901, %v3076, 0.0
    %3093 = vadd.xlane.f32.xlu0 %v3092
    %v3094 = vpop.xlane.xlu0 %3093
    %v3095 = vsel %vm901, %v3078, 0.0
    %3096 = vadd.xlane.f32.xlu0 %v3095
    %v3097 = vpop.xlane.xlu0 %3096
    %v3098 = vsel %vm901, %v3080, 0.0
    %3099 = vadd.xlane.f32.xlu0 %v3098
    %v3100 = vpop.xlane.xlu0 %3099
    %v3101 = vsel %vm901, %v3082, 0.0
    %3102 = vadd.xlane.f32.xlu0 %v3101
    %v3103 = vpop.xlane.xlu0 %3102
    %v3104 = vsel %vm901, %v3084, 0.0
    %3105 = vadd.xlane.f32.xlu0 %v3104
    %v3106 = vpop.xlane.xlu0 %3105
    %v3107 = vsel %vm901, %v3086, 0.0
    %3108 = vadd.xlane.f32.xlu0 %v3107
    %v3109 = vpop.xlane.xlu0 %3108
    %v3110 = vsel %vm901, %v3088, 0.0
    %3111 = vadd.xlane.f32.xlu0 %v3110
    %v3112 = vpop.xlane.xlu0 %3111
    %v3113 = vpack.c.bf16 %v3076, %v3074
    %v3114 = vpack.c.bf16 %v3080, %v3078
    %v3115 = vpack.c.bf16 %v3084, %v3082
    %v3116 = vpack.c.bf16 %v3088, %v3086
    %3117 = vrot.lane.b32.xlu0 %v780, 32
    %v3118 = vpop.permute.xlu0 %3117
    %3119 = vrot.lane.b32.xlu0 %v781, 32
    %v3120 = vpop.permute.xlu0 %3119
    %3121 = vrot.lane.b32.xlu0 %v782, 32
    %v3122 = vpop.permute.xlu0 %3121
    %3123 = vrot.lane.b32.xlu0 %v783, 32
    %v3124 = vpop.permute.xlu0 %3123
    %v3130 = vsel %vm901, %v3113, 0
    %v3133 = vsel %vm901, %v3114, 0
    %v3136 = vsel %vm901, %v3115, 0
    %v3139 = vsel %vm901, %v3116, 0
    %3141 = vmatprep.subr.bf16.mxu0 0
    %3142 = vmatpush1.bf16.msra.mxu0 0
    %3143 = vmatprep.subr.bf16.mxu0 0
    %3144 = vmatpush1.bf16.msra.mxu0 0
    %3145 = vmatprep.subr.bf16.mxu0 0
    %3146 = vmatpush1.bf16.msra.mxu0 0
    %3147 = vmatprep.subr.bf16.mxu0 0
    %3148 = vmatpush1.bf16.msra.mxu0 0
    %3149 = vmatprep.subr.bf16.mxu0 0
    %3150 = vmatpush1.bf16.msra.mxu0 %v3124
    %3151 = vmatprep.subr.bf16.mxu0 0
    %3152 = vmatpush1.bf16.msra.mxu0 %v3122
    %3153 = vmatprep.subr.bf16.mxu0 0
    %3154 = vmatpush1.bf16.msra.mxu0 %v3120
    %3155 = vmatprep.subr.bf16.mxu0 0
    %3156 = vmatpush1.bf16.msra.mxu0 %v3118
    %3157 = vmatprep.subr.bf16.mxu0 0
    %3158 = vmatpush2.bf16.msra.mxu0 0
    %3159 = vmatprep.subr.bf16.mxu0 0
    %3160 = vmatpush2.bf16.msra.mxu0 0
    %3161 = vmatprep.subr.bf16.mxu0 0
    %3162 = vmatpush2.bf16.msra.mxu0 0
    %3163 = vmatprep.subr.bf16.mxu0 0
    %3164 = vmatpush2.bf16.msra.mxu0 0
    %3165 = vmatprep.subr.bf16.mxu0 0
    %3166 = vmatpush2.bf16.msra.mxu0 0
    %3167 = vmatprep.subr.bf16.mxu0 0
    %3168 = vmatpush2.bf16.msra.mxu0 0
    %3169 = vmatprep.subr.bf16.mxu0 0
    %3170 = vmatpush2.bf16.msra.mxu0 0
    %3171 = vmatprep.subr.bf16.mxu0 0
    %3172 = vmatpush2.bf16.msra.mxu0 0
    %3173 = vmatprep.mubr.bf16.mxu0 0
    %3174 = vmatmul.mubr.bf16.gmra.mxu0 %v3130
    %v3175 = vpop.f32.mrf.mxu0
    %v3176 = vadd.f32 0.0, %v3175
    %v3177 = vpop.f32.mrf.mxu0
    %v3178 = vpop.f32.mrf.mxu0
    %v3179 = vadd.f32 0.0, %v3178
    %v3180 = vpop.f32.mrf.mxu0
    %3181 = vmatprep.mubr.bf16.mxu0 0
    %3182 = vmatmul.mubr.bf16.gmra.mxu0 %v3133
    %v3183 = vpop.f32.mrf.mxu0
    %v3184 = vadd.f32 0.0, %v3183
    %v3185 = vpop.f32.mrf.mxu0
    %v3186 = vpop.f32.mrf.mxu0
    %v3187 = vadd.f32 0.0, %v3186
    %v3188 = vpop.f32.mrf.mxu0
    %3189 = vmatprep.mubr.bf16.mxu0 0
    %3190 = vmatmul.mubr.bf16.gmra.mxu0 %v3136
    %v3191 = vpop.f32.mrf.mxu0
    %v3192 = vadd.f32 0.0, %v3191
    %v3193 = vpop.f32.mrf.mxu0
    %v3194 = vpop.f32.mrf.mxu0
    %v3195 = vadd.f32 0.0, %v3194
    %v3196 = vpop.f32.mrf.mxu0
    %3197 = vmatprep.mubr.bf16.mxu0 0
    %3198 = vmatmul.mubr.bf16.gmra.mxu0 %v3139
    %v3199 = vpop.f32.mrf.mxu0
    %v3200 = vadd.f32 0.0, %v3199
    %v3201 = vpop.f32.mrf.mxu0
    %v3202 = vpop.f32.mrf.mxu0
    %v3203 = vadd.f32 0.0, %v3202
    %v3204 = vpop.f32.mrf.mxu0
    %3205 = vdwg.mxu0
    %v3206 = vrcp.pop %v3091
    %v3207 = vrcp.pop %v3094
    %v3208 = vrcp.pop %v3097
    %v3209 = vrcp.pop %v3100
    %v3210 = vrcp.pop %v3103
    %v3211 = vrcp.pop %v3106
    %v3212 = vrcp.pop %v3109
    %v3213 = vrcp.pop %v3112
    %v3214 = vmul.f32 %v3176, %v3206
    %v3215 = vmul.f32 %v3179, %v3207
    %v3216 = vmul.f32 %v3184, %v3208
    %v3217 = vmul.f32 %v3187, %v3209
    %v3218 = vmul.f32 %v3192, %v3210
    %v3219 = vmul.f32 %v3195, %v3211
    %v3220 = vmul.f32 %v3200, %v3212
    %v3221 = vmul.f32 %v3203, %v3213
    %v3222 = vpack.c.bf16 %v3215, %v3214
    %v3223 = vpack.c.bf16 %v3217, %v3216
    %v3224 = vpack.c.bf16 %v3219, %v3218
    %v3225 = vpack.c.bf16 %v3221, %v3220
    %3230 = vrot.lane.b32.xlu0 %v2626, 32
    %v3231 = vpop.permute.xlu0 %3230
    %3232 = vrot.lane.b32.xlu0 %v2627, 32
    %v3233 = vpop.permute.xlu0 %3232
    %3234 = vrot.lane.b32.xlu0 %v2628, 32
    %v3235 = vpop.permute.xlu0 %3234
    %3236 = vrot.lane.b32.xlu0 %v2629, 32
    %v3237 = vpop.permute.xlu0 %3236
    %3242 = vrot.lane.b32.xlu0 %v2924, 64
    %v3243 = vpop.permute.xlu0 %3242
    %3244 = vrot.lane.b32.xlu0 %v2925, 64
    %v3245 = vpop.permute.xlu0 %3244
    %3246 = vrot.lane.b32.xlu0 %v2926, 64
    %v3247 = vpop.permute.xlu0 %3246
    %3248 = vrot.lane.b32.xlu0 %v2927, 64
    %v3249 = vpop.permute.xlu0 %3248
    %3254 = vrot.lane.b32.xlu0 %v3222, 96
    %v3255 = vpop.permute.xlu0 %3254
    %3256 = vrot.lane.b32.xlu0 %v3223, 96
    %v3257 = vpop.permute.xlu0 %3256
    %3258 = vrot.lane.b32.xlu0 %v3224, 96
    %v3259 = vpop.permute.xlu0 %3258
    %3260 = vrot.lane.b32.xlu0 %v3225, 96
    %v3261 = vpop.permute.xlu0 %3260
    %v3264 = vsel %vm803, %v2316, %v3231
    %v3267 = vsel %vm803, %v2317, %v3233
    %v3270 = vsel %vm803, %v2318, %v3235
    %v3273 = vsel %vm803, %v2319, %v3237
    %v3275 = vsel %vm901, %v3264, %v3243
    %v3277 = vsel %vm901, %v3267, %v3245
    %v3279 = vsel %vm901, %v3270, %v3247
    %v3281 = vsel %vm901, %v3273, %v3249
    %v3283 = vsel %vm2037, %v3275, %v3255
    %v3286 = vsel %vm2037, %v3277, %v3257
    %v3289 = vsel %vm2037, %v3279, %v3259
    %v3292 = vsel %vm2037, %v3281, %v3261
    %v3294 = vld [vmem:[#allocation7] sm:$0xf]
    %v3295 = vld [vmem:[#allocation7 + $0x4] sm:$0xf]
    %v3296 = vld [vmem:[#allocation7 + $0x8] sm:$0xf]
    %v3297 = vld [vmem:[#allocation7 + $0xc] sm:$0xf]
    %v3298 = vld [vmem:[#allocation7 + $0x10] sm:$0xf]
    %v3299 = vld [vmem:[#allocation7 + $0x14] sm:$0xf]
    %v3300 = vld [vmem:[#allocation7 + $0x18] sm:$0xf]
    %v3301 = vld [vmem:[#allocation7 + $0x1c] sm:$0xf]
    %v3302 = vld [vmem:[#allocation7 + $0x20] sm:$0xf]
    %v3303 = vld [vmem:[#allocation7 + $0x24] sm:$0xf]
    %v3304 = vld [vmem:[#allocation7 + $0x28] sm:$0xf]
    %v3305 = vld [vmem:[#allocation7 + $0x2c] sm:$0xf]
    %v3306 = vld [vmem:[#allocation7 + $0x30] sm:$0xf]
    %v3307 = vld [vmem:[#allocation7 + $0x34] sm:$0xf]
    %v3308 = vld [vmem:[#allocation7 + $0x38] sm:$0xf]
    %v3309 = vld [vmem:[#allocation7 + $0x3c] sm:$0xf]
    %v3310 = vld [vmem:[%s5] sm:$0x1]
    %v3312 = vlaneseq
    %v3313 = vshrl.u32 %v3312, 7
    %v3314 = vsub.s32 0, %v3313
    %v3315 = vrot.slane %v3310, %v3314
    %v3333 = vunpack.c.l.b16 %v3294
    %v3334 = vunpack.c.l.b16 %v3295
    %v3335 = vunpack.c.l.b16 %v3296
    %v3336 = vunpack.c.l.b16 %v3297
    %v3337 = vunpack.c.l.b16 %v3298
    %v3338 = vunpack.c.l.b16 %v3299
    %v3339 = vunpack.c.l.b16 %v3300
    %v3340 = vunpack.c.l.b16 %v3301
    %v3341 = vunpack.c.l.b16 %v3302
    %v3342 = vunpack.c.l.b16 %v3303
    %v3343 = vunpack.c.l.b16 %v3304
    %v3344 = vunpack.c.l.b16 %v3305
    %v3345 = vunpack.c.l.b16 %v3306
    %v3346 = vunpack.c.l.b16 %v3307
    %v3347 = vunpack.c.l.b16 %v3308
    %v3348 = vunpack.c.l.b16 %v3309
    %v3349 = vpack.c.b16 %v3334, %v3333
    %v3350 = vpack.c.b16 %v3336, %v3335
    %v3351 = vpack.c.b16 %v3338, %v3337
    %v3352 = vpack.c.b16 %v3340, %v3339
    %v3353 = vpack.c.b16 %v3342, %v3341
    %v3354 = vpack.c.b16 %v3344, %v3343
    %v3355 = vpack.c.b16 %v3346, %v3345
    %v3356 = vpack.c.b16 %v3348, %v3347
    %3365 = vmatprep.subr.bf16.mxu0 0
    %3366 = vmatpush1.bf16.msra.mxu0 %v3356
    %3367 = vmatprep.subr.bf16.mxu0 0
    %3368 = vmatpush1.bf16.msra.mxu0 %v3355
    %3369 = vmatprep.subr.bf16.mxu0 0
    %3370 = vmatpush1.bf16.msra.mxu0 %v3354
    %3371 = vmatprep.subr.bf16.mxu0 0
    %3372 = vmatpush1.bf16.msra.mxu0 %v3353
    %3373 = vmatprep.subr.bf16.mxu0 0
    %3374 = vmatpush1.bf16.msra.mxu0 %v3352
    %3375 = vmatprep.subr.bf16.mxu0 0
    %3376 = vmatpush1.bf16.msra.mxu0 %v3351
    %3377 = vmatprep.subr.bf16.mxu0 0
    %3378 = vmatpush1.bf16.msra.mxu0 %v3350
    %3379 = vmatprep.subr.bf16.mxu0 0
    %3380 = vmatpush1.bf16.msra.mxu0 %v3349
    %3381 = vmatprep.subr.bf16.mxu0 0
    %3382 = vmatpush2.bf16.msra.mxu0 0
    %3383 = vmatprep.subr.bf16.mxu0 0
    %3384 = vmatpush2.bf16.msra.mxu0 0
    %3385 = vmatprep.subr.bf16.mxu0 0
    %3386 = vmatpush2.bf16.msra.mxu0 0
    %3387 = vmatprep.subr.bf16.mxu0 0
    %3388 = vmatpush2.bf16.msra.mxu0 0
    %3389 = vmatprep.subr.bf16.mxu0 0
    %3390 = vmatpush2.bf16.msra.mxu0 0
    %3391 = vmatprep.subr.bf16.mxu0 0
    %3392 = vmatpush2.bf16.msra.mxu0 0
    %3393 = vmatprep.subr.bf16.mxu0 0
    %3394 = vmatpush2.bf16.msra.mxu0 0
    %3395 = vmatprep.subr.bf16.mxu0 0
    %3396 = vmatpush2.bf16.msra.mxu0 0
    %3397 = vmatprep.mubr.bf16.mxu0 0
    %3398 = vmatmul.mubr.bf16.gmra.mxu0 %v2039
    %v3399 = vpop.f32.mrf.mxu0
    %v3400 = vadd.f32 %v3315, %v3399
    %v3401 = vpop.f32.mrf.mxu0
    %v3402 = vpop.f32.mrf.mxu0
    %v3403 = vadd.f32 %v3315, %v3402
    %v3404 = vpop.f32.mrf.mxu0
    %3405 = vmatprep.mubr.bf16.mxu0 0
    %3406 = vmatmul.mubr.bf16.gmra.mxu0 %v2042
    %v3407 = vpop.f32.mrf.mxu0
    %v3408 = vadd.f32 %v3315, %v3407
    %v3409 = vpop.f32.mrf.mxu0
    %v3410 = vpop.f32.mrf.mxu0
    %v3411 = vadd.f32 %v3315, %v3410
    %v3412 = vpop.f32.mrf.mxu0
    %3413 = vmatprep.mubr.bf16.mxu0 0
    %3414 = vmatmul.mubr.bf16.gmra.mxu0 %v2045
    %v3415 = vpop.f32.mrf.mxu0
    %v3416 = vadd.f32 %v3315, %v3415
    %v3417 = vpop.f32.mrf.mxu0
    %v3418 = vpop.f32.mrf.mxu0
    %v3419 = vadd.f32 %v3315, %v3418
    %v3420 = vpop.f32.mrf.mxu0
    %3421 = vmatprep.mubr.bf16.mxu0 0
    %3422 = vmatmul.mubr.bf16.gmra.mxu0 %v2048
    %v3423 = vpop.f32.mrf.mxu0
    %v3424 = vadd.f32 %v3315, %v3423
    %v3425 = vpop.f32.mrf.mxu0
    %v3426 = vpop.f32.mrf.mxu0
    %v3427 = vadd.f32 %v3315, %v3426
    %v3428 = vpop.f32.mrf.mxu0
    %3429 = vmatprep.mubr.bf16.mxu0 0
    %3430 = vmatmul.mubr.bf16.gmra.mxu0 %v3283
    %v3431 = vpop.f32.mrf.mxu0
    %v3432 = vadd.f32 %v3315, %v3431
    %v3433 = vpop.f32.mrf.mxu0
    %v3434 = vpop.f32.mrf.mxu0
    %v3435 = vadd.f32 %v3315, %v3434
    %v3436 = vpop.f32.mrf.mxu0
    %3437 = vmatprep.mubr.bf16.mxu0 0
    %3438 = vmatmul.mubr.bf16.gmra.mxu0 %v3286
    %v3439 = vpop.f32.mrf.mxu0
    %v3440 = vadd.f32 %v3315, %v3439
    %v3441 = vpop.f32.mrf.mxu0
    %v3442 = vpop.f32.mrf.mxu0
    %v3443 = vadd.f32 %v3315, %v3442
    %v3444 = vpop.f32.mrf.mxu0
    %3445 = vmatprep.mubr.bf16.mxu0 0
    %3446 = vmatmul.mubr.bf16.gmra.mxu0 %v3289
    %v3447 = vpop.f32.mrf.mxu0
    %v3448 = vadd.f32 %v3315, %v3447
    %v3449 = vpop.f32.mrf.mxu0
    %v3450 = vpop.f32.mrf.mxu0
    %v3451 = vadd.f32 %v3315, %v3450
    %v3452 = vpop.f32.mrf.mxu0
    %3453 = vmatprep.mubr.bf16.mxu0 0
    %3454 = vmatmul.mubr.bf16.gmra.mxu0 %v3292
    %v3455 = vpop.f32.mrf.mxu0
    %v3456 = vadd.f32 %v3315, %v3455
    %v3457 = vpop.f32.mrf.mxu0
    %v3458 = vpop.f32.mrf.mxu0
    %v3459 = vadd.f32 %v3315, %v3458
    %v3460 = vpop.f32.mrf.mxu0
    %3461 = vdwg.mxu0
    %v3462 = vadd.f32 %v111, %v3400
    %v3463 = vadd.f32 %v112, %v3403
    %v3464 = vadd.f32 %v113, %v3408
    %v3465 = vadd.f32 %v114, %v3411
    %v3466 = vadd.f32 %v115, %v3416
    %v3467 = vadd.f32 %v116, %v3419
    %v3468 = vadd.f32 %v117, %v3424
    %v3469 = vadd.f32 %v118, %v3427
    %v3470 = vadd.f32 %v119, %v3432
    %v3471 = vadd.f32 %v120, %v3435
    %v3472 = vadd.f32 %v121, %v3440
    %v3473 = vadd.f32 %v122, %v3443
    %v3474 = vadd.f32 %v123, %v3448
    %v3475 = vadd.f32 %v124, %v3451
    %v3476 = vadd.f32 %v125, %v3456
    %v3477 = vadd.f32 %v126, %v3459
    %3478 = vadd.xlane.f32.xlu0 %v3462
    %v3479 = vpop.xlane.xlu0 %3478
    %3480 = vadd.xlane.f32.xlu0 %v3463
    %v3481 = vpop.xlane.xlu0 %3480
    %3482 = vadd.xlane.f32.xlu0 %v3464
    %v3483 = vpop.xlane.xlu0 %3482
    %3484 = vadd.xlane.f32.xlu0 %v3465
    %v3485 = vpop.xlane.xlu0 %3484
    %3486 = vadd.xlane.f32.xlu0 %v3466
    %v3487 = vpop.xlane.xlu0 %3486
    %3488 = vadd.xlane.f32.xlu0 %v3467
    %v3489 = vpop.xlane.xlu0 %3488
    %3490 = vadd.xlane.f32.xlu0 %v3468
    %v3491 = vpop.xlane.xlu0 %3490
    %3492 = vadd.xlane.f32.xlu0 %v3469
    %v3493 = vpop.xlane.xlu0 %3492
    %3494 = vadd.xlane.f32.xlu0 %v3470
    %v3495 = vpop.xlane.xlu0 %3494
    %3496 = vadd.xlane.f32.xlu0 %v3471
    %v3497 = vpop.xlane.xlu0 %3496
    %3498 = vadd.xlane.f32.xlu0 %v3472
    %v3499 = vpop.xlane.xlu0 %3498
    %3500 = vadd.xlane.f32.xlu0 %v3473
    %v3501 = vpop.xlane.xlu0 %3500
    %3502 = vadd.xlane.f32.xlu0 %v3474
    %v3503 = vpop.xlane.xlu0 %3502
    %3504 = vadd.xlane.f32.xlu0 %v3475
    %v3505 = vpop.xlane.xlu0 %3504
    %3506 = vadd.xlane.f32.xlu0 %v3476
    %v3507 = vpop.xlane.xlu0 %3506
    %3508 = vadd.xlane.f32.xlu0 %v3477
    %v3509 = vpop.xlane.xlu0 %3508
    %v3510 = vmul.f32 %v3479, %v159
    %v3511 = vmul.f32 %v3481, %v159
    %v3512 = vmul.f32 %v3483, %v159
    %v3513 = vmul.f32 %v3485, %v159
    %v3514 = vmul.f32 %v3487, %v159
    %v3515 = vmul.f32 %v3489, %v159
    %v3516 = vmul.f32 %v3491, %v159
    %v3517 = vmul.f32 %v3493, %v159
    %v3518 = vmul.f32 %v3495, %v159
    %v3519 = vmul.f32 %v3497, %v159
    %v3520 = vmul.f32 %v3499, %v159
    %v3521 = vmul.f32 %v3501, %v159
    %v3522 = vmul.f32 %v3503, %v159
    %v3523 = vmul.f32 %v3505, %v159
    %v3524 = vmul.f32 %v3507, %v159
    %v3525 = vmul.f32 %v3509, %v159
    %v3526 = vmul.f32 %v3462, %v3462
    %v3527 = vmul.f32 %v3463, %v3463
    %v3528 = vmul.f32 %v3464, %v3464
    %v3529 = vmul.f32 %v3465, %v3465
    %v3530 = vmul.f32 %v3466, %v3466
    %v3531 = vmul.f32 %v3467, %v3467
    %v3532 = vmul.f32 %v3468, %v3468
    %v3533 = vmul.f32 %v3469, %v3469
    %v3534 = vmul.f32 %v3470, %v3470
    %v3535 = vmul.f32 %v3471, %v3471
    %v3536 = vmul.f32 %v3472, %v3472
    %v3537 = vmul.f32 %v3473, %v3473
    %v3538 = vmul.f32 %v3474, %v3474
    %v3539 = vmul.f32 %v3475, %v3475
    %v3540 = vmul.f32 %v3476, %v3476
    %v3541 = vmul.f32 %v3477, %v3477
    %3542 = vadd.xlane.f32.xlu0 %v3526
    %v3543 = vpop.xlane.xlu0 %3542
    %3544 = vadd.xlane.f32.xlu0 %v3527
    %v3545 = vpop.xlane.xlu0 %3544
    %3546 = vadd.xlane.f32.xlu0 %v3528
    %v3547 = vpop.xlane.xlu0 %3546
    %3548 = vadd.xlane.f32.xlu0 %v3529
    %v3549 = vpop.xlane.xlu0 %3548
    %3550 = vadd.xlane.f32.xlu0 %v3530
    %v3551 = vpop.xlane.xlu0 %3550
    %3552 = vadd.xlane.f32.xlu0 %v3531
    %v3553 = vpop.xlane.xlu0 %3552
    %3554 = vadd.xlane.f32.xlu0 %v3532
    %v3555 = vpop.xlane.xlu0 %3554
    %3556 = vadd.xlane.f32.xlu0 %v3533
    %v3557 = vpop.xlane.xlu0 %3556
    %3558 = vadd.xlane.f32.xlu0 %v3534
    %v3559 = vpop.xlane.xlu0 %3558
    %3560 = vadd.xlane.f32.xlu0 %v3535
    %v3561 = vpop.xlane.xlu0 %3560
    %3562 = vadd.xlane.f32.xlu0 %v3536
    %v3563 = vpop.xlane.xlu0 %3562
    %3564 = vadd.xlane.f32.xlu0 %v3537
    %v3565 = vpop.xlane.xlu0 %3564
    %3566 = vadd.xlane.f32.xlu0 %v3538
    %v3567 = vpop.xlane.xlu0 %3566
    %3568 = vadd.xlane.f32.xlu0 %v3539
    %v3569 = vpop.xlane.xlu0 %3568
    %3570 = vadd.xlane.f32.xlu0 %v3540
    %v3571 = vpop.xlane.xlu0 %3570
    %3572 = vadd.xlane.f32.xlu0 %v3541
    %v3573 = vpop.xlane.xlu0 %3572
    %v3574 = vmul.f32 %v3543, %v159
    %v3575 = vmul.f32 %v3545, %v159
    %v3576 = vmul.f32 %v3547, %v159
    %v3577 = vmul.f32 %v3549, %v159
    %v3578 = vmul.f32 %v3551, %v159
    %v3579 = vmul.f32 %v3553, %v159
    %v3580 = vmul.f32 %v3555, %v159
    %v3581 = vmul.f32 %v3557, %v159
    %v3582 = vmul.f32 %v3559, %v159
    %v3583 = vmul.f32 %v3561, %v159
    %v3584 = vmul.f32 %v3563, %v159
    %v3585 = vmul.f32 %v3565, %v159
    %v3586 = vmul.f32 %v3567, %v159
    %v3587 = vmul.f32 %v3569, %v159
    %v3588 = vmul.f32 %v3571, %v159
    %v3589 = vmul.f32 %v3573, %v159
    %v3590 = vmul.f32 %v3510, %v3510
    %v3591 = vmul.f32 %v3511, %v3511
    %v3592 = vmul.f32 %v3512, %v3512
    %v3593 = vmul.f32 %v3513, %v3513
    %v3594 = vmul.f32 %v3514, %v3514
    %v3595 = vmul.f32 %v3515, %v3515
    %v3596 = vmul.f32 %v3516, %v3516
    %v3597 = vmul.f32 %v3517, %v3517
    %v3598 = vmul.f32 %v3518, %v3518
    %v3599 = vmul.f32 %v3519, %v3519
    %v3600 = vmul.f32 %v3520, %v3520
    %v3601 = vmul.f32 %v3521, %v3521
    %v3602 = vmul.f32 %v3522, %v3522
    %v3603 = vmul.f32 %v3523, %v3523
    %v3604 = vmul.f32 %v3524, %v3524
    %v3605 = vmul.f32 %v3525, %v3525
    %v3606 = vsub.f32 %v3574, %v3590
    %v3607 = vsub.f32 %v3575, %v3591
    %v3608 = vsub.f32 %v3576, %v3592
    %v3609 = vsub.f32 %v3577, %v3593
    %v3610 = vsub.f32 %v3578, %v3594
    %v3611 = vsub.f32 %v3579, %v3595
    %v3612 = vsub.f32 %v3580, %v3596
    %v3613 = vsub.f32 %v3581, %v3597
    %v3614 = vsub.f32 %v3582, %v3598
    %v3615 = vsub.f32 %v3583, %v3599
    %v3616 = vsub.f32 %v3584, %v3600
    %v3617 = vsub.f32 %v3585, %v3601
    %v3618 = vsub.f32 %v3586, %v3602
    %v3619 = vsub.f32 %v3587, %v3603
    %v3620 = vsub.f32 %v3588, %v3604
    %v3621 = vsub.f32 %v3589, %v3605
    %v3622 = vadd.f32 %v3606, 1e-05
    %v3623 = vadd.f32 %v3607, 1e-05
    %v3624 = vadd.f32 %v3608, 1e-05
    %v3625 = vadd.f32 %v3609, 1e-05
    %v3626 = vadd.f32 %v3610, 1e-05
    %v3627 = vadd.f32 %v3611, 1e-05
    %v3628 = vadd.f32 %v3612, 1e-05
    %v3629 = vadd.f32 %v3613, 1e-05
    %v3630 = vadd.f32 %v3614, 1e-05
    %v3631 = vadd.f32 %v3615, 1e-05
    %v3632 = vadd.f32 %v3616, 1e-05
    %v3633 = vadd.f32 %v3617, 1e-05
    %v3634 = vadd.f32 %v3618, 1e-05
    %v3635 = vadd.f32 %v3619, 1e-05
    %v3636 = vadd.f32 %v3620, 1e-05
    %v3637 = vadd.f32 %v3621, 1e-05
    %v3638 = vrsqrt.pop %v3622
    %v3639 = vrsqrt.pop %v3623
    %v3640 = vrsqrt.pop %v3624
    %v3641 = vrsqrt.pop %v3625
    %v3642 = vrsqrt.pop %v3626
    %v3643 = vrsqrt.pop %v3627
    %v3644 = vrsqrt.pop %v3628
    %v3645 = vrsqrt.pop %v3629
    %v3646 = vrsqrt.pop %v3630
    %v3647 = vrsqrt.pop %v3631
    %v3648 = vrsqrt.pop %v3632
    %v3649 = vrsqrt.pop %v3633
    %v3650 = vrsqrt.pop %v3634
    %v3651 = vrsqrt.pop %v3635
    %v3652 = vrsqrt.pop %v3636
    %v3653 = vrsqrt.pop %v3637
    %v3654 = vsub.f32 %v3462, %v3510
    %v3655 = vsub.f32 %v3463, %v3511
    %v3656 = vsub.f32 %v3464, %v3512
    %v3657 = vsub.f32 %v3465, %v3513
    %v3658 = vsub.f32 %v3466, %v3514
    %v3659 = vsub.f32 %v3467, %v3515
    %v3660 = vsub.f32 %v3468, %v3516
    %v3661 = vsub.f32 %v3469, %v3517
    %v3662 = vsub.f32 %v3470, %v3518
    %v3663 = vsub.f32 %v3471, %v3519
    %v3664 = vsub.f32 %v3472, %v3520
    %v3665 = vsub.f32 %v3473, %v3521
    %v3666 = vsub.f32 %v3474, %v3522
    %v3667 = vsub.f32 %v3475, %v3523
    %v3668 = vsub.f32 %v3476, %v3524
    %v3669 = vsub.f32 %v3477, %v3525
    %v3670 = vmul.f32 %v3654, %v3638
    %v3671 = vmul.f32 %v3655, %v3639
    %v3672 = vmul.f32 %v3656, %v3640
    %v3673 = vmul.f32 %v3657, %v3641
    %v3674 = vmul.f32 %v3658, %v3642
    %v3675 = vmul.f32 %v3659, %v3643
    %v3676 = vmul.f32 %v3660, %v3644
    %v3677 = vmul.f32 %v3661, %v3645
    %v3678 = vmul.f32 %v3662, %v3646
    %v3679 = vmul.f32 %v3663, %v3647
    %v3680 = vmul.f32 %v3664, %v3648
    %v3681 = vmul.f32 %v3665, %v3649
    %v3682 = vmul.f32 %v3666, %v3650
    %v3683 = vmul.f32 %v3667, %v3651
    %v3684 = vmul.f32 %v3668, %v3652
    %v3685 = vmul.f32 %v3669, %v3653
    %v3686 = vld [vmem:[%s6] sm:$0x1]
    %v3688 = vlaneseq
    %v3689 = vshrl.u32 %v3688, 7
    %v3690 = vsub.s32 0, %v3689
    %v3691 = vrot.slane %v3686, %v3690
    %v3693 = vmul.f32 %v3670, %v3691
    %v3694 = vmul.f32 %v3671, %v3691
    %v3695 = vmul.f32 %v3672, %v3691
    %v3696 = vmul.f32 %v3673, %v3691
    %v3697 = vmul.f32 %v3674, %v3691
    %v3698 = vmul.f32 %v3675, %v3691
    %v3699 = vmul.f32 %v3676, %v3691
    %v3700 = vmul.f32 %v3677, %v3691
    %v3701 = vmul.f32 %v3678, %v3691
    %v3702 = vmul.f32 %v3679, %v3691
    %v3703 = vmul.f32 %v3680, %v3691
    %v3704 = vmul.f32 %v3681, %v3691
    %v3705 = vmul.f32 %v3682, %v3691
    %v3706 = vmul.f32 %v3683, %v3691
    %v3707 = vmul.f32 %v3684, %v3691
    %v3708 = vmul.f32 %v3685, %v3691
    %v3709 = vld [vmem:[%s7] sm:$0x1]
    %v3711 = vlaneseq
    %v3712 = vshrl.u32 %v3711, 7
    %v3713 = vsub.s32 0, %v3712
    %v3714 = vrot.slane %v3709, %v3713
    %v3716 = vadd.f32 %v3693, %v3714
    %v3717 = vadd.f32 %v3694, %v3714
    %v3718 = vadd.f32 %v3695, %v3714
    %v3719 = vadd.f32 %v3696, %v3714
    %v3720 = vadd.f32 %v3697, %v3714
    %v3721 = vadd.f32 %v3698, %v3714
    %v3722 = vadd.f32 %v3699, %v3714
    %v3723 = vadd.f32 %v3700, %v3714
    %v3724 = vadd.f32 %v3701, %v3714
    %v3725 = vadd.f32 %v3702, %v3714
    %v3726 = vadd.f32 %v3703, %v3714
    %v3727 = vadd.f32 %v3704, %v3714
    %v3728 = vadd.f32 %v3705, %v3714
    %v3729 = vadd.f32 %v3706, %v3714
    %v3730 = vadd.f32 %v3707, %v3714
    %v3731 = vadd.f32 %v3708, %v3714
    %v3732 = vpack.c.bf16 %v3717, %v3716
    %v3733 = vpack.c.bf16 %v3719, %v3718
    %v3734 = vpack.c.bf16 %v3721, %v3720
    %v3735 = vpack.c.bf16 %v3723, %v3722
    %v3736 = vpack.c.bf16 %v3725, %v3724
    %v3737 = vpack.c.bf16 %v3727, %v3726
    %v3738 = vpack.c.bf16 %v3729, %v3728
    %v3739 = vpack.c.bf16 %v3731, %v3730
    %v3740 = vld [vmem:[#allocation8] sm:$0xff]
    %v3741 = vld [vmem:[#allocation8 + $0x8] sm:$0xff]
    %v3742 = vld [vmem:[#allocation8 + $0x10] sm:$0xff]
    %v3743 = vld [vmem:[#allocation8 + $0x18] sm:$0xff]
    %v3744 = vld [vmem:[#allocation8 + $0x20] sm:$0xff]
    %v3745 = vld [vmem:[#allocation8 + $0x28] sm:$0xff]
    %v3746 = vld [vmem:[#allocation8 + $0x30] sm:$0xff]
    %v3747 = vld [vmem:[#allocation8 + $0x38] sm:$0xff]
    %v3748 = vld [vmem:[#allocation8 + $0x40] sm:$0xff]
    %v3749 = vld [vmem:[#allocation8 + $0x48] sm:$0xff]
    %v3750 = vld [vmem:[#allocation8 + $0x50] sm:$0xff]
    %v3751 = vld [vmem:[#allocation8 + $0x58] sm:$0xff]
    %v3752 = vld [vmem:[#allocation8 + $0x60] sm:$0xff]
    %v3753 = vld [vmem:[#allocation8 + $0x68] sm:$0xff]
    %v3754 = vld [vmem:[#allocation8 + $0x70] sm:$0xff]
    %v3755 = vld [vmem:[#allocation8 + $0x78] sm:$0xff]
    %v3756 = vld [vmem:[#allocation8 + $0x80] sm:$0xff]
    %v3757 = vld [vmem:[#allocation8 + $0x88] sm:$0xff]
    %v3758 = vld [vmem:[#allocation8 + $0x90] sm:$0xff]
    %v3759 = vld [vmem:[#allocation8 + $0x98] sm:$0xff]
    %v3760 = vld [vmem:[#allocation8 + $0xa0] sm:$0xff]
    %v3761 = vld [vmem:[#allocation8 + $0xa8] sm:$0xff]
    %v3762 = vld [vmem:[#allocation8 + $0xb0] sm:$0xff]
    %v3763 = vld [vmem:[#allocation8 + $0xb8] sm:$0xff]
    %v3764 = vld [vmem:[#allocation8 + $0xc0] sm:$0xff]
    %v3765 = vld [vmem:[#allocation8 + $0xc8] sm:$0xff]
    %v3766 = vld [vmem:[#allocation8 + $0xd0] sm:$0xff]
    %v3767 = vld [vmem:[#allocation8 + $0xd8] sm:$0xff]
    %v3768 = vld [vmem:[#allocation8 + $0xe0] sm:$0xff]
    %v3769 = vld [vmem:[#allocation8 + $0xe8] sm:$0xff]
    %v3770 = vld [vmem:[#allocation8 + $0xf0] sm:$0xff]
    %v3771 = vld [vmem:[#allocation8 + $0xf8] sm:$0xff]
    %v3772 = vld [vmem:[%s9] sm:$0xf]
    %v3774 = vlaneseq
    %v3775 = vshrl.u32 %v3774, 7
    %v3776 = vsub.s32 0, %v3775
    %v3777 = vrot.slane %v3772, %v3776
    %v3778 = vlaneseq
    %v3779 = vshrl.u32 %v3778, 7
    %v3780 = vsub.s32 1, %v3779
    %v3781 = vrot.slane %v3772, %v3780
    %v3782 = vlaneseq
    %v3783 = vshrl.u32 %v3782, 7
    %v3784 = vsub.s32 2, %v3783
    %v3785 = vrot.slane %v3772, %v3784
    %v3786 = vlaneseq
    %v3787 = vshrl.u32 %v3786, 7
    %v3788 = vsub.s32 3, %v3787
    %v3789 = vrot.slane %v3772, %v3788
    %v3826 = vunpack.c.l.b16 %v3740
    %v3827 = vunpack.c.h.b16 %v3740
    %v3828 = vunpack.c.l.b16 %v3741
    %v3829 = vunpack.c.h.b16 %v3741
    %v3830 = vunpack.c.l.b16 %v3742
    %v3831 = vunpack.c.h.b16 %v3742
    %v3832 = vunpack.c.l.b16 %v3743
    %v3833 = vunpack.c.h.b16 %v3743
    %v3834 = vunpack.c.l.b16 %v3744
    %v3835 = vunpack.c.h.b16 %v3744
    %v3836 = vunpack.c.l.b16 %v3745
    %v3837 = vunpack.c.h.b16 %v3745
    %v3838 = vunpack.c.l.b16 %v3746
    %v3839 = vunpack.c.h.b16 %v3746
    %v3840 = vunpack.c.l.b16 %v3747
    %v3841 = vunpack.c.h.b16 %v3747
    %v3842 = vunpack.c.l.b16 %v3748
    %v3843 = vunpack.c.h.b16 %v3748
    %v3844 = vunpack.c.l.b16 %v3749
    %v3845 = vunpack.c.h.b16 %v3749
    %v3846 = vunpack.c.l.b16 %v3750
    %v3847 = vunpack.c.h.b16 %v3750
    %v3848 = vunpack.c.l.b16 %v3751
    %v3849 = vunpack.c.h.b16 %v3751
    %v3850 = vunpack.c.l.b16 %v3752
    %v3851 = vunpack.c.h.b16 %v3752
    %v3852 = vunpack.c.l.b16 %v3753
    %v3853 = vunpack.c.h.b16 %v3753
    %v3854 = vunpack.c.l.b16 %v3754
    %v3855 = vunpack.c.h.b16 %v3754
    %v3856 = vunpack.c.l.b16 %v3755
    %v3857 = vunpack.c.h.b16 %v3755
    %v3858 = vunpack.c.l.b16 %v3756
    %v3859 = vunpack.c.h.b16 %v3756
    %v3860 = vunpack.c.l.b16 %v3757
    %v3861 = vunpack.c.h.b16 %v3757
    %v3862 = vunpack.c.l.b16 %v3758
    %v3863 = vunpack.c.h.b16 %v3758
    %v3864 = vunpack.c.l.b16 %v3759
    %v3865 = vunpack.c.h.b16 %v3759
    %v3866 = vunpack.c.l.b16 %v3760
    %v3867 = vunpack.c.h.b16 %v3760
    %v3868 = vunpack.c.l.b16 %v3761
    %v3869 = vunpack.c.h.b16 %v3761
    %v3870 = vunpack.c.l.b16 %v3762
    %v3871 = vunpack.c.h.b16 %v3762
    %v3872 = vunpack.c.l.b16 %v3763
    %v3873 = vunpack.c.h.b16 %v3763
    %v3874 = vunpack.c.l.b16 %v3764
    %v3875 = vunpack.c.h.b16 %v3764
    %v3876 = vunpack.c.l.b16 %v3765
    %v3877 = vunpack.c.h.b16 %v3765
    %v3878 = vunpack.c.l.b16 %v3766
    %v3879 = vunpack.c.h.b16 %v3766
    %v3880 = vunpack.c.l.b16 %v3767
    %v3881 = vunpack.c.h.b16 %v3767
    %v3882 = vunpack.c.l.b16 %v3768
    %v3883 = vunpack.c.h.b16 %v3768
    %v3884 = vunpack.c.l.b16 %v3769
    %v3885 = vunpack.c.h.b16 %v3769
    %v3886 = vunpack.c.l.b16 %v3770
    %v3887 = vunpack.c.h.b16 %v3770
    %v3888 = vunpack.c.l.b16 %v3771
    %v3889 = vunpack.c.h.b16 %v3771
    %v3890 = vpack.c.b16 %v3830, %v3826
    %v3891 = vpack.c.b16 %v3831, %v3827
    %v3892 = vpack.c.b16 %v3832, %v3828
    %v3893 = vpack.c.b16 %v3833, %v3829
    %v3894 = vpack.c.b16 %v3838, %v3834
    %v3895 = vpack.c.b16 %v3839, %v3835
    %v3896 = vpack.c.b16 %v3840, %v3836
    %v3897 = vpack.c.b16 %v3841, %v3837
    %v3898 = vpack.c.b16 %v3846, %v3842
    %v3899 = vpack.c.b16 %v3847, %v3843
    %v3900 = vpack.c.b16 %v3848, %v3844
    %v3901 = vpack.c.b16 %v3849, %v3845
    %v3902 = vpack.c.b16 %v3854, %v3850
    %v3903 = vpack.c.b16 %v3855, %v3851
    %v3904 = vpack.c.b16 %v3856, %v3852
    %v3905 = vpack.c.b16 %v3857, %v3853
    %v3906 = vpack.c.b16 %v3862, %v3858
    %v3907 = vpack.c.b16 %v3863, %v3859
    %v3908 = vpack.c.b16 %v3864, %v3860
    %v3909 = vpack.c.b16 %v3865, %v3861
    %v3910 = vpack.c.b16 %v3870, %v3866
    %v3911 = vpack.c.b16 %v3871, %v3867
    %v3912 = vpack.c.b16 %v3872, %v3868
    %v3913 = vpack.c.b16 %v3873, %v3869
    %v3914 = vpack.c.b16 %v3878, %v3874
    %v3915 = vpack.c.b16 %v3879, %v3875
    %v3916 = vpack.c.b16 %v3880, %v3876
    %v3917 = vpack.c.b16 %v3881, %v3877
    %v3918 = vpack.c.b16 %v3886, %v3882
    %v3919 = vpack.c.b16 %v3887, %v3883
    %v3920 = vpack.c.b16 %v3888, %v3884
    %v3921 = vpack.c.b16 %v3889, %v3885
    %3954 = vmatprep.subr.bf16.mxu0 %v3919
    %3955 = vmatpush1.bf16.msra.mxu0 %v3918
    %3956 = vmatprep.subr.bf16.mxu0 %v3915
    %3957 = vmatpush1.bf16.msra.mxu0 %v3914
    %3958 = vmatprep.subr.bf16.mxu0 %v3911
    %3959 = vmatpush1.bf16.msra.mxu0 %v3910
    %3960 = vmatprep.subr.bf16.mxu0 %v3907
    %3961 = vmatpush1.bf16.msra.mxu0 %v3906
    %3962 = vmatprep.subr.bf16.mxu0 %v3903
    %3963 = vmatpush1.bf16.msra.mxu0 %v3902
    %3964 = vmatprep.subr.bf16.mxu0 %v3899
    %3965 = vmatpush1.bf16.msra.mxu0 %v3898
    %3966 = vmatprep.subr.bf16.mxu0 %v3895
    %3967 = vmatpush1.bf16.msra.mxu0 %v3894
    %3968 = vmatprep.subr.bf16.mxu0 %v3891
    %3969 = vmatpush1.bf16.msra.mxu0 %v3890
    %3970 = vmatprep.subr.bf16.mxu0 0
    %3971 = vmatpush2.bf16.msra.mxu0 0
    %3972 = vmatprep.subr.bf16.mxu0 0
    %3973 = vmatpush2.bf16.msra.mxu0 0
    %3974 = vmatprep.subr.bf16.mxu0 0
    %3975 = vmatpush2.bf16.msra.mxu0 0
    %3976 = vmatprep.subr.bf16.mxu0 0
    %3977 = vmatpush2.bf16.msra.mxu0 0
    %3978 = vmatprep.subr.bf16.mxu0 0
    %3979 = vmatpush2.bf16.msra.mxu0 0
    %3980 = vmatprep.subr.bf16.mxu0 0
    %3981 = vmatpush2.bf16.msra.mxu0 0
    %3982 = vmatprep.subr.bf16.mxu0 0
    %3983 = vmatpush2.bf16.msra.mxu0 0
    %3984 = vmatprep.subr.bf16.mxu0 0
    %3985 = vmatpush2.bf16.msra.mxu0 0
    %3986 = vmatprep.mubr.bf16.mxu0 0
    %3987 = vmatmul.mubr.bf16.gmra.mxu0 %v3732
    %v3988 = vpop.f32.mrf.mxu0
    %v3989 = vadd.f32 %v3777, %v3988
    %v3990 = vpop.f32.mrf.mxu0
    %v3991 = vadd.f32 %v3781, %v3990
    %v3992 = vpop.f32.mrf.mxu0
    %v3993 = vadd.f32 %v3777, %v3992
    %v3994 = vpop.f32.mrf.mxu0
    %v3995 = vadd.f32 %v3781, %v3994
    %3996 = vmatprep.mubr.bf16.mxu0 0
    %3997 = vmatmul.mubr.bf16.gmra.mxu0 %v3733
    %v3998 = vpop.f32.mrf.mxu0
    %v3999 = vadd.f32 %v3777, %v3998
    %v4000 = vpop.f32.mrf.mxu0
    %v4001 = vadd.f32 %v3781, %v4000
    %v4002 = vpop.f32.mrf.mxu0
    %v4003 = vadd.f32 %v3777, %v4002
    %v4004 = vpop.f32.mrf.mxu0
    %v4005 = vadd.f32 %v3781, %v4004
    %4006 = vmatprep.mubr.bf16.mxu0 0
    %4007 = vmatmul.mubr.bf16.gmra.mxu0 %v3734
    %v4008 = vpop.f32.mrf.mxu0
    %v4009 = vadd.f32 %v3777, %v4008
    %v4010 = vpop.f32.mrf.mxu0
    %v4011 = vadd.f32 %v3781, %v4010
    %v4012 = vpop.f32.mrf.mxu0
    %v4013 = vadd.f32 %v3777, %v4012
    %v4014 = vpop.f32.mrf.mxu0
    %v4015 = vadd.f32 %v3781, %v4014
    %4016 = vmatprep.mubr.bf16.mxu0 0
    %4017 = vmatmul.mubr.bf16.gmra.mxu0 %v3735
    %v4018 = vpop.f32.mrf.mxu0
    %v4019 = vadd.f32 %v3777, %v4018
    %v4020 = vpop.f32.mrf.mxu0
    %v4021 = vadd.f32 %v3781, %v4020
    %v4022 = vpop.f32.mrf.mxu0
    %v4023 = vadd.f32 %v3777, %v4022
    %v4024 = vpop.f32.mrf.mxu0
    %v4025 = vadd.f32 %v3781, %v4024
    %4026 = vmatprep.mubr.bf16.mxu0 0
    %4027 = vmatmul.mubr.bf16.gmra.mxu0 %v3736
    %v4028 = vpop.f32.mrf.mxu0
    %v4029 = vadd.f32 %v3777, %v4028
    %v4030 = vpop.f32.mrf.mxu0
    %v4031 = vadd.f32 %v3781, %v4030
    %v4032 = vpop.f32.mrf.mxu0
    %v4033 = vadd.f32 %v3777, %v4032
    %v4034 = vpop.f32.mrf.mxu0
    %v4035 = vadd.f32 %v3781, %v4034
    %4036 = vmatprep.mubr.bf16.mxu0 0
    %4037 = vmatmul.mubr.bf16.gmra.mxu0 %v3737
    %v4038 = vpop.f32.mrf.mxu0
    %v4039 = vadd.f32 %v3777, %v4038
    %v4040 = vpop.f32.mrf.mxu0
    %v4041 = vadd.f32 %v3781, %v4040
    %v4042 = vpop.f32.mrf.mxu0
    %v4043 = vadd.f32 %v3777, %v4042
    %v4044 = vpop.f32.mrf.mxu0
    %v4045 = vadd.f32 %v3781, %v4044
    %4046 = vmatprep.mubr.bf16.mxu0 0
    %4047 = vmatmul.mubr.bf16.gmra.mxu0 %v3738
    %v4048 = vpop.f32.mrf.mxu0
    %v4049 = vadd.f32 %v3777, %v4048
    %v4050 = vpop.f32.mrf.mxu0
    %v4051 = vadd.f32 %v3781, %v4050
    %v4052 = vpop.f32.mrf.mxu0
    %v4053 = vadd.f32 %v3777, %v4052
    %v4054 = vpop.f32.mrf.mxu0
    %v4055 = vadd.f32 %v3781, %v4054
    %4056 = vmatprep.mubr.bf16.mxu0 0
    %4057 = vmatmul.mubr.bf16.gmra.mxu0 %v3739
    %v4058 = vpop.f32.mrf.mxu0
    %v4059 = vadd.f32 %v3777, %v4058
    %v4060 = vpop.f32.mrf.mxu0
    %v4061 = vadd.f32 %v3781, %v4060
    %v4062 = vpop.f32.mrf.mxu0
    %v4063 = vadd.f32 %v3777, %v4062
    %v4064 = vpop.f32.mrf.mxu0
    %v4065 = vadd.f32 %v3781, %v4064
    %4066 = vdwg.mxu0
    %4067 = vmatprep.subr.bf16.mxu0 %v3921
    %4068 = vmatpush1.bf16.msra.mxu0 %v3920
    %4069 = vmatprep.subr.bf16.mxu0 %v3917
    %4070 = vmatpush1.bf16.msra.mxu0 %v3916
    %4071 = vmatprep.subr.bf16.mxu0 %v3913
    %4072 = vmatpush1.bf16.msra.mxu0 %v3912
    %4073 = vmatprep.subr.bf16.mxu0 %v3909
    %4074 = vmatpush1.bf16.msra.mxu0 %v3908
    %4075 = vmatprep.subr.bf16.mxu0 %v3905
    %4076 = vmatpush1.bf16.msra.mxu0 %v3904
    %4077 = vmatprep.subr.bf16.mxu0 %v3901
    %4078 = vmatpush1.bf16.msra.mxu0 %v3900
    %4079 = vmatprep.subr.bf16.mxu0 %v3897
    %4080 = vmatpush1.bf16.msra.mxu0 %v3896
    %4081 = vmatprep.subr.bf16.mxu0 %v3893
    %4082 = vmatpush1.bf16.msra.mxu0 %v3892
    %4083 = vmatprep.subr.bf16.mxu0 0
    %4084 = vmatpush2.bf16.msra.mxu0 0
    %4085 = vmatprep.subr.bf16.mxu0 0
    %4086 = vmatpush2.bf16.msra.mxu0 0
    %4087 = vmatprep.subr.bf16.mxu0 0
    %4088 = vmatpush2.bf16.msra.mxu0 0
    %4089 = vmatprep.subr.bf16.mxu0 0
    %4090 = vmatpush2.bf16.msra.mxu0 0
    %4091 = vmatprep.subr.bf16.mxu0 0
    %4092 = vmatpush2.bf16.msra.mxu0 0
    %4093 = vmatprep.subr.bf16.mxu0 0
    %4094 = vmatpush2.bf16.msra.mxu0 0
    %4095 = vmatprep.subr.bf16.mxu0 0
    %4096 = vmatpush2.bf16.msra.mxu0 0
    %4097 = vmatprep.subr.bf16.mxu0 0
    %4098 = vmatpush2.bf16.msra.mxu0 0
    %4099 = vmatprep.mubr.bf16.mxu0 0
    %4100 = vmatmul.mubr.bf16.gmra.mxu0 %v3732
    %v4101 = vpop.f32.mrf.mxu0
    %v4102 = vadd.f32 %v3785, %v4101
    %v4103 = vpop.f32.mrf.mxu0
    %v4104 = vadd.f32 %v3789, %v4103
    %v4105 = vpop.f32.mrf.mxu0
    %v4106 = vadd.f32 %v3785, %v4105
    %v4107 = vpop.f32.mrf.mxu0
    %v4108 = vadd.f32 %v3789, %v4107
    %4109 = vmatprep.mubr.bf16.mxu0 0
    %4110 = vmatmul.mubr.bf16.gmra.mxu0 %v3733
    %v4111 = vpop.f32.mrf.mxu0
    %v4112 = vadd.f32 %v3785, %v4111
    %v4113 = vpop.f32.mrf.mxu0
    %v4114 = vadd.f32 %v3789, %v4113
    %v4115 = vpop.f32.mrf.mxu0
    %v4116 = vadd.f32 %v3785, %v4115
    %v4117 = vpop.f32.mrf.mxu0
    %v4118 = vadd.f32 %v3789, %v4117
    %4119 = vmatprep.mubr.bf16.mxu0 0
    %4120 = vmatmul.mubr.bf16.gmra.mxu0 %v3734
    %v4121 = vpop.f32.mrf.mxu0
    %v4122 = vadd.f32 %v3785, %v4121
    %v4123 = vpop.f32.mrf.mxu0
    %v4124 = vadd.f32 %v3789, %v4123
    %v4125 = vpop.f32.mrf.mxu0
    %v4126 = vadd.f32 %v3785, %v4125
    %v4127 = vpop.f32.mrf.mxu0
    %v4128 = vadd.f32 %v3789, %v4127
    %4129 = vmatprep.mubr.bf16.mxu0 0
    %4130 = vmatmul.mubr.bf16.gmra.mxu0 %v3735
    %v4131 = vpop.f32.mrf.mxu0
    %v4132 = vadd.f32 %v3785, %v4131
    %v4133 = vpop.f32.mrf.mxu0
    %v4134 = vadd.f32 %v3789, %v4133
    %v4135 = vpop.f32.mrf.mxu0
    %v4136 = vadd.f32 %v3785, %v4135
    %v4137 = vpop.f32.mrf.mxu0
    %v4138 = vadd.f32 %v3789, %v4137
    %4139 = vmatprep.mubr.bf16.mxu0 0
    %4140 = vmatmul.mubr.bf16.gmra.mxu0 %v3736
    %v4141 = vpop.f32.mrf.mxu0
    %v4142 = vadd.f32 %v3785, %v4141
    %v4143 = vpop.f32.mrf.mxu0
    %v4144 = vadd.f32 %v3789, %v4143
    %v4145 = vpop.f32.mrf.mxu0
    %v4146 = vadd.f32 %v3785, %v4145
    %v4147 = vpop.f32.mrf.mxu0
    %v4148 = vadd.f32 %v3789, %v4147
    %4149 = vmatprep.mubr.bf16.mxu0 0
    %4150 = vmatmul.mubr.bf16.gmra.mxu0 %v3737
    %v4151 = vpop.f32.mrf.mxu0
    %v4152 = vadd.f32 %v3785, %v4151
    %v4153 = vpop.f32.mrf.mxu0
    %v4154 = vadd.f32 %v3789, %v4153
    %v4155 = vpop.f32.mrf.mxu0
    %v4156 = vadd.f32 %v3785, %v4155
    %v4157 = vpop.f32.mrf.mxu0
    %v4158 = vadd.f32 %v3789, %v4157
    %4159 = vmatprep.mubr.bf16.mxu0 0
    %4160 = vmatmul.mubr.bf16.gmra.mxu0 %v3738
    %v4161 = vpop.f32.mrf.mxu0
    %v4162 = vadd.f32 %v3785, %v4161
    %v4163 = vpop.f32.mrf.mxu0
    %v4164 = vadd.f32 %v3789, %v4163
    %v4165 = vpop.f32.mrf.mxu0
    %v4166 = vadd.f32 %v3785, %v4165
    %v4167 = vpop.f32.mrf.mxu0
    %v4168 = vadd.f32 %v3789, %v4167
    %4169 = vmatprep.mubr.bf16.mxu0 0
    %4170 = vmatmul.mubr.bf16.gmra.mxu0 %v3739
    %v4171 = vpop.f32.mrf.mxu0
    %v4172 = vadd.f32 %v3785, %v4171
    %v4173 = vpop.f32.mrf.mxu0
    %v4174 = vadd.f32 %v3789, %v4173
    %v4175 = vpop.f32.mrf.mxu0
    %v4176 = vadd.f32 %v3785, %v4175
    %v4177 = vpop.f32.mrf.mxu0
    %v4178 = vadd.f32 %v3789, %v4177
    %4179 = vdwg.mxu0
    %v4180 = vmul.f32 %v3989, 0.5
    %v4181 = vmul.f32 %v3991, 0.5
    %v4182 = vmul.f32 %v4102, 0.5
    %v4183 = vmul.f32 %v4104, 0.5
    %v4184 = vmul.f32 %v3993, 0.5
    %v4185 = vmul.f32 %v3995, 0.5
    %v4186 = vmul.f32 %v4106, 0.5
    %v4187 = vmul.f32 %v4108, 0.5
    %v4188 = vmul.f32 %v3999, 0.5
    %v4189 = vmul.f32 %v4001, 0.5
    %v4190 = vmul.f32 %v4112, 0.5
    %v4191 = vmul.f32 %v4114, 0.5
    %v4192 = vmul.f32 %v4003, 0.5
    %v4193 = vmul.f32 %v4005, 0.5
    %v4194 = vmul.f32 %v4116, 0.5
    %v4195 = vmul.f32 %v4118, 0.5
    %v4196 = vmul.f32 %v4009, 0.5
    %v4197 = vmul.f32 %v4011, 0.5
    %v4198 = vmul.f32 %v4122, 0.5
    %v4199 = vmul.f32 %v4124, 0.5
    %v4200 = vmul.f32 %v4013, 0.5
    %v4201 = vmul.f32 %v4015, 0.5
    %v4202 = vmul.f32 %v4126, 0.5
    %v4203 = vmul.f32 %v4128, 0.5
    %v4204 = vmul.f32 %v4019, 0.5
    %v4205 = vmul.f32 %v4021, 0.5
    %v4206 = vmul.f32 %v4132, 0.5
    %v4207 = vmul.f32 %v4134, 0.5
    %v4208 = vmul.f32 %v4023, 0.5
    %v4209 = vmul.f32 %v4025, 0.5
    %v4210 = vmul.f32 %v4136, 0.5
    %v4211 = vmul.f32 %v4138, 0.5
    %v4212 = vmul.f32 %v4029, 0.5
    %v4213 = vmul.f32 %v4031, 0.5
    %v4214 = vmul.f32 %v4142, 0.5
    %v4215 = vmul.f32 %v4144, 0.5
    %v4216 = vmul.f32 %v4033, 0.5
    %v4217 = vmul.f32 %v4035, 0.5
    %v4218 = vmul.f32 %v4146, 0.5
    %v4219 = vmul.f32 %v4148, 0.5
    %v4220 = vmul.f32 %v4039, 0.5
    %v4221 = vmul.f32 %v4041, 0.5
    %v4222 = vmul.f32 %v4152, 0.5
    %v4223 = vmul.f32 %v4154, 0.5
    %v4224 = vmul.f32 %v4043, 0.5
    %v4225 = vmul.f32 %v4045, 0.5
    %v4226 = vmul.f32 %v4156, 0.5
    %v4227 = vmul.f32 %v4158, 0.5
    %v4228 = vmul.f32 %v4049, 0.5
    %v4229 = vmul.f32 %v4051, 0.5
    %v4230 = vmul.f32 %v4162, 0.5
    %v4231 = vmul.f32 %v4164, 0.5
    %v4232 = vmul.f32 %v4053, 0.5
    %v4233 = vmul.f32 %v4055, 0.5
    %v4234 = vmul.f32 %v4166, 0.5
    %v4235 = vmul.f32 %v4168, 0.5
    %v4236 = vmul.f32 %v4059, 0.5
    %v4237 = vmul.f32 %v4061, 0.5
    %v4238 = vmul.f32 %v4172, 0.5
    %v4239 = vmul.f32 %v4174, 0.5
    %v4240 = vmul.f32 %v4063, 0.5
    %v4241 = vmul.f32 %v4065, 0.5
    %v4242 = vmul.f32 %v4176, 0.5
    %v4243 = vmul.f32 %v4178, 0.5
    %v4244 = vmul.f32 %v3989, %v3989
    %v4245 = vmul.f32 %v3991, %v3991
    %v4246 = vmul.f32 %v4102, %v4102
    %v4247 = vmul.f32 %v4104, %v4104
    %v4248 = vmul.f32 %v3993, %v3993
    %v4249 = vmul.f32 %v3995, %v3995
    %v4250 = vmul.f32 %v4106, %v4106
    %v4251 = vmul.f32 %v4108, %v4108
    %v4252 = vmul.f32 %v3999, %v3999
    %v4253 = vmul.f32 %v4001, %v4001
    %v4254 = vmul.f32 %v4112, %v4112
    %v4255 = vmul.f32 %v4114, %v4114
    %v4256 = vmul.f32 %v4003, %v4003
    %v4257 = vmul.f32 %v4005, %v4005
    %v4258 = vmul.f32 %v4116, %v4116
    %v4259 = vmul.f32 %v4118, %v4118
    %v4260 = vmul.f32 %v4009, %v4009
    %v4261 = vmul.f32 %v4011, %v4011
    %v4262 = vmul.f32 %v4122, %v4122
    %v4263 = vmul.f32 %v4124, %v4124
    %v4264 = vmul.f32 %v4013, %v4013
    %v4265 = vmul.f32 %v4015, %v4015
    %v4266 = vmul.f32 %v4126, %v4126
    %v4267 = vmul.f32 %v4128, %v4128
    %v4268 = vmul.f32 %v4019, %v4019
    %v4269 = vmul.f32 %v4021, %v4021
    %v4270 = vmul.f32 %v4132, %v4132
    %v4271 = vmul.f32 %v4134, %v4134
    %v4272 = vmul.f32 %v4023, %v4023
    %v4273 = vmul.f32 %v4025, %v4025
    %v4274 = vmul.f32 %v4136, %v4136
    %v4275 = vmul.f32 %v4138, %v4138
    %v4276 = vmul.f32 %v4029, %v4029
    %v4277 = vmul.f32 %v4031, %v4031
    %v4278 = vmul.f32 %v4142, %v4142
    %v4279 = vmul.f32 %v4144, %v4144
    %v4280 = vmul.f32 %v4033, %v4033
    %v4281 = vmul.f32 %v4035, %v4035
    %v4282 = vmul.f32 %v4146, %v4146
    %v4283 = vmul.f32 %v4148, %v4148
    %v4284 = vmul.f32 %v4039, %v4039
    %v4285 = vmul.f32 %v4041, %v4041
    %v4286 = vmul.f32 %v4152, %v4152
    %v4287 = vmul.f32 %v4154, %v4154
    %v4288 = vmul.f32 %v4043, %v4043
    %v4289 = vmul.f32 %v4045, %v4045
    %v4290 = vmul.f32 %v4156, %v4156
    %v4291 = vmul.f32 %v4158, %v4158
    %v4292 = vmul.f32 %v4049, %v4049
    %v4293 = vmul.f32 %v4051, %v4051
    %v4294 = vmul.f32 %v4162, %v4162
    %v4295 = vmul.f32 %v4164, %v4164
    %v4296 = vmul.f32 %v4053, %v4053
    %v4297 = vmul.f32 %v4055, %v4055
    %v4298 = vmul.f32 %v4166, %v4166
    %v4299 = vmul.f32 %v4168, %v4168
    %v4300 = vmul.f32 %v4059, %v4059
    %v4301 = vmul.f32 %v4061, %v4061
    %v4302 = vmul.f32 %v4172, %v4172
    %v4303 = vmul.f32 %v4174, %v4174
    %v4304 = vmul.f32 %v4063, %v4063
    %v4305 = vmul.f32 %v4065, %v4065
    %v4306 = vmul.f32 %v4176, %v4176
    %v4307 = vmul.f32 %v4178, %v4178
    %v4308 = vmul.f32 %v4244, %v3989
    %v4309 = vmul.f32 %v4245, %v3991
    %v4310 = vmul.f32 %v4246, %v4102
    %v4311 = vmul.f32 %v4247, %v4104
    %v4312 = vmul.f32 %v4248, %v3993
    %v4313 = vmul.f32 %v4249, %v3995
    %v4314 = vmul.f32 %v4250, %v4106
    %v4315 = vmul.f32 %v4251, %v4108
    %v4316 = vmul.f32 %v4252, %v3999
    %v4317 = vmul.f32 %v4253, %v4001
    %v4318 = vmul.f32 %v4254, %v4112
    %v4319 = vmul.f32 %v4255, %v4114
    %v4320 = vmul.f32 %v4256, %v4003
    %v4321 = vmul.f32 %v4257, %v4005
    %v4322 = vmul.f32 %v4258, %v4116
    %v4323 = vmul.f32 %v4259, %v4118
    %v4324 = vmul.f32 %v4260, %v4009
    %v4325 = vmul.f32 %v4261, %v4011
    %v4326 = vmul.f32 %v4262, %v4122
    %v4327 = vmul.f32 %v4263, %v4124
    %v4328 = vmul.f32 %v4264, %v4013
    %v4329 = vmul.f32 %v4265, %v4015
    %v4330 = vmul.f32 %v4266, %v4126
    %v4331 = vmul.f32 %v4267, %v4128
    %v4332 = vmul.f32 %v4268, %v4019
    %v4333 = vmul.f32 %v4269, %v4021
    %v4334 = vmul.f32 %v4270, %v4132
    %v4335 = vmul.f32 %v4271, %v4134
    %v4336 = vmul.f32 %v4272, %v4023
    %v4337 = vmul.f32 %v4273, %v4025
    %v4338 = vmul.f32 %v4274, %v4136
    %v4339 = vmul.f32 %v4275, %v4138
    %v4340 = vmul.f32 %v4276, %v4029
    %v4341 = vmul.f32 %v4277, %v4031
    %v4342 = vmul.f32 %v4278, %v4142
    %v4343 = vmul.f32 %v4279, %v4144
    %v4344 = vmul.f32 %v4280, %v4033
    %v4345 = vmul.f32 %v4281, %v4035
    %v4346 = vmul.f32 %v4282, %v4146
    %v4347 = vmul.f32 %v4283, %v4148
    %v4348 = vmul.f32 %v4284, %v4039
    %v4349 = vmul.f32 %v4285, %v4041
    %v4350 = vmul.f32 %v4286, %v4152
    %v4351 = vmul.f32 %v4287, %v4154
    %v4352 = vmul.f32 %v4288, %v4043
    %v4353 = vmul.f32 %v4289, %v4045
    %v4354 = vmul.f32 %v4290, %v4156
    %v4355 = vmul.f32 %v4291, %v4158
    %v4356 = vmul.f32 %v4292, %v4049
    %v4357 = vmul.f32 %v4293, %v4051
    %v4358 = vmul.f32 %v4294, %v4162
    %v4359 = vmul.f32 %v4295, %v4164
    %v4360 = vmul.f32 %v4296, %v4053
    %v4361 = vmul.f32 %v4297, %v4055
    %v4362 = vmul.f32 %v4298, %v4166
    %v4363 = vmul.f32 %v4299, %v4168
    %v4364 = vmul.f32 %v4300, %v4059
    %v4365 = vmul.f32 %v4301, %v4061
    %v4366 = vmul.f32 %v4302, %v4172
    %v4367 = vmul.f32 %v4303, %v4174
    %v4368 = vmul.f32 %v4304, %v4063
    %v4369 = vmul.f32 %v4305, %v4065
    %v4370 = vmul.f32 %v4306, %v4176
    %v4371 = vmul.f32 %v4307, %v4178
    %v4372 = vmul.f32 %v4308, 0.044715
    %v4373 = vmul.f32 %v4309, 0.044715
    %v4374 = vmul.f32 %v4310, 0.044715
    %v4375 = vmul.f32 %v4311, 0.044715
    %v4376 = vmul.f32 %v4312, 0.044715
    %v4377 = vmul.f32 %v4313, 0.044715
    %v4378 = vmul.f32 %v4314, 0.044715
    %v4379 = vmul.f32 %v4315, 0.044715
    %v4380 = vmul.f32 %v4316, 0.044715
    %v4381 = vmul.f32 %v4317, 0.044715
    %v4382 = vmul.f32 %v4318, 0.044715
    %v4383 = vmul.f32 %v4319, 0.044715
    %v4384 = vmul.f32 %v4320, 0.044715
    %v4385 = vmul.f32 %v4321, 0.044715
    %v4386 = vmul.f32 %v4322, 0.044715
    %v4387 = vmul.f32 %v4323, 0.044715
    %v4388 = vmul.f32 %v4324, 0.044715
    %v4389 = vmul.f32 %v4325, 0.044715
    %v4390 = vmul.f32 %v4326, 0.044715
    %v4391 = vmul.f32 %v4327, 0.044715
    %v4392 = vmul.f32 %v4328, 0.044715
    %v4393 = vmul.f32 %v4329, 0.044715
    %v4394 = vmul.f32 %v4330, 0.044715
    %v4395 = vmul.f32 %v4331, 0.044715
    %v4396 = vmul.f32 %v4332, 0.044715
    %v4397 = vmul.f32 %v4333, 0.044715
    %v4398 = vmul.f32 %v4334, 0.044715
    %v4399 = vmul.f32 %v4335, 0.044715
    %v4400 = vmul.f32 %v4336, 0.044715
    %v4401 = vmul.f32 %v4337, 0.044715
    %v4402 = vmul.f32 %v4338, 0.044715
    %v4403 = vmul.f32 %v4339, 0.044715
    %v4404 = vmul.f32 %v4340, 0.044715
    %v4405 = vmul.f32 %v4341, 0.044715
    %v4406 = vmul.f32 %v4342, 0.044715
    %v4407 = vmul.f32 %v4343, 0.044715
    %v4408 = vmul.f32 %v4344, 0.044715
    %v4409 = vmul.f32 %v4345, 0.044715
    %v4410 = vmul.f32 %v4346, 0.044715
    %v4411 = vmul.f32 %v4347, 0.044715
    %v4412 = vmul.f32 %v4348, 0.044715
    %v4413 = vmul.f32 %v4349, 0.044715
    %v4414 = vmul.f32 %v4350, 0.044715
    %v4415 = vmul.f32 %v4351, 0.044715
    %v4416 = vmul.f32 %v4352, 0.044715
    %v4417 = vmul.f32 %v4353, 0.044715
    %v4418 = vmul.f32 %v4354, 0.044715
    %v4419 = vmul.f32 %v4355, 0.044715
    %v4420 = vmul.f32 %v4356, 0.044715
    %v4421 = vmul.f32 %v4357, 0.044715
    %v4422 = vmul.f32 %v4358, 0.044715
    %v4423 = vmul.f32 %v4359, 0.044715
    %v4424 = vmul.f32 %v4360, 0.044715
    %v4425 = vmul.f32 %v4361, 0.044715
    %v4426 = vmul.f32 %v4362, 0.044715
    %v4427 = vmul.f32 %v4363, 0.044715
    %v4428 = vmul.f32 %v4364, 0.044715
    %v4429 = vmul.f32 %v4365, 0.044715
    %v4430 = vmul.f32 %v4366, 0.044715
    %v4431 = vmul.f32 %v4367, 0.044715
    %v4432 = vmul.f32 %v4368, 0.044715
    %v4433 = vmul.f32 %v4369, 0.044715
    %v4434 = vmul.f32 %v4370, 0.044715
    %v4435 = vmul.f32 %v4371, 0.044715
    %v4436 = vadd.f32 %v3989, %v4372
    %v4437 = vadd.f32 %v3991, %v4373
    %v4438 = vadd.f32 %v4102, %v4374
    %v4439 = vadd.f32 %v4104, %v4375
    %v4440 = vadd.f32 %v3993, %v4376
    %v4441 = vadd.f32 %v3995, %v4377
    %v4442 = vadd.f32 %v4106, %v4378
    %v4443 = vadd.f32 %v4108, %v4379
    %v4444 = vadd.f32 %v3999, %v4380
    %v4445 = vadd.f32 %v4001, %v4381
    %v4446 = vadd.f32 %v4112, %v4382
    %v4447 = vadd.f32 %v4114, %v4383
    %v4448 = vadd.f32 %v4003, %v4384
    %v4449 = vadd.f32 %v4005, %v4385
    %v4450 = vadd.f32 %v4116, %v4386
    %v4451 = vadd.f32 %v4118, %v4387
    %v4452 = vadd.f32 %v4009, %v4388
    %v4453 = vadd.f32 %v4011, %v4389
    %v4454 = vadd.f32 %v4122, %v4390
    %v4455 = vadd.f32 %v4124, %v4391
    %v4456 = vadd.f32 %v4013, %v4392
    %v4457 = vadd.f32 %v4015, %v4393
    %v4458 = vadd.f32 %v4126, %v4394
    %v4459 = vadd.f32 %v4128, %v4395
    %v4460 = vadd.f32 %v4019, %v4396
    %v4461 = vadd.f32 %v4021, %v4397
    %v4462 = vadd.f32 %v4132, %v4398
    %v4463 = vadd.f32 %v4134, %v4399
    %v4464 = vadd.f32 %v4023, %v4400
    %v4465 = vadd.f32 %v4025, %v4401
    %v4466 = vadd.f32 %v4136, %v4402
    %v4467 = vadd.f32 %v4138, %v4403
    %v4468 = vadd.f32 %v4029, %v4404
    %v4469 = vadd.f32 %v4031, %v4405
    %v4470 = vadd.f32 %v4142, %v4406
    %v4471 = vadd.f32 %v4144, %v4407
    %v4472 = vadd.f32 %v4033, %v4408
    %v4473 = vadd.f32 %v4035, %v4409
    %v4474 = vadd.f32 %v4146, %v4410
    %v4475 = vadd.f32 %v4148, %v4411
    %v4476 = vadd.f32 %v4039, %v4412
    %v4477 = vadd.f32 %v4041, %v4413
    %v4478 = vadd.f32 %v4152, %v4414
    %v4479 = vadd.f32 %v4154, %v4415
    %v4480 = vadd.f32 %v4043, %v4416
    %v4481 = vadd.f32 %v4045, %v4417
    %v4482 = vadd.f32 %v4156, %v4418
    %v4483 = vadd.f32 %v4158, %v4419
    %v4484 = vadd.f32 %v4049, %v4420
    %v4485 = vadd.f32 %v4051, %v4421
    %v4486 = vadd.f32 %v4162, %v4422
    %v4487 = vadd.f32 %v4164, %v4423
    %v4488 = vadd.f32 %v4053, %v4424
    %v4489 = vadd.f32 %v4055, %v4425
    %v4490 = vadd.f32 %v4166, %v4426
    %v4491 = vadd.f32 %v4168, %v4427
    %v4492 = vadd.f32 %v4059, %v4428
    %v4493 = vadd.f32 %v4061, %v4429
    %v4494 = vadd.f32 %v4172, %v4430
    %v4495 = vadd.f32 %v4174, %v4431
    %v4496 = vadd.f32 %v4063, %v4432
    %v4497 = vadd.f32 %v4065, %v4433
    %v4498 = vadd.f32 %v4176, %v4434
    %v4499 = vadd.f32 %v4178, %v4435
    %v4500 = vmul.f32 %v4436, 0.7978846
    %v4501 = vmul.f32 %v4437, 0.7978846
    %v4502 = vmul.f32 %v4438, 0.7978846
    %v4503 = vmul.f32 %v4439, 0.7978846
    %v4504 = vmul.f32 %v4440, 0.7978846
    %v4505 = vmul.f32 %v4441, 0.7978846
    %v4506 = vmul.f32 %v4442, 0.7978846
    %v4507 = vmul.f32 %v4443, 0.7978846
    %v4508 = vmul.f32 %v4444, 0.7978846
    %v4509 = vmul.f32 %v4445, 0.7978846
    %v4510 = vmul.f32 %v4446, 0.7978846
    %v4511 = vmul.f32 %v4447, 0.7978846
    %v4512 = vmul.f32 %v4448, 0.7978846
    %v4513 = vmul.f32 %v4449, 0.7978846
    %v4514 = vmul.f32 %v4450, 0.7978846
    %v4515 = vmul.f32 %v4451, 0.7978846
    %v4516 = vmul.f32 %v4452, 0.7978846
    %v4517 = vmul.f32 %v4453, 0.7978846
    %v4518 = vmul.f32 %v4454, 0.7978846
    %v4519 = vmul.f32 %v4455, 0.7978846
    %v4520 = vmul.f32 %v4456, 0.7978846
    %v4521 = vmul.f32 %v4457, 0.7978846
    %v4522 = vmul.f32 %v4458, 0.7978846
    %v4523 = vmul.f32 %v4459, 0.7978846
    %v4524 = vmul.f32 %v4460, 0.7978846
    %v4525 = vmul.f32 %v4461, 0.7978846
    %v4526 = vmul.f32 %v4462, 0.7978846
    %v4527 = vmul.f32 %v4463, 0.7978846
    %v4528 = vmul.f32 %v4464, 0.7978846
    %v4529 = vmul.f32 %v4465, 0.7978846
    %v4530 = vmul.f32 %v4466, 0.7978846
    %v4531 = vmul.f32 %v4467, 0.7978846
    %v4532 = vmul.f32 %v4468, 0.7978846
    %v4533 = vmul.f32 %v4469, 0.7978846
    %v4534 = vmul.f32 %v4470, 0.7978846
    %v4535 = vmul.f32 %v4471, 0.7978846
    %v4536 = vmul.f32 %v4472, 0.7978846
    %v4537 = vmul.f32 %v4473, 0.7978846
    %v4538 = vmul.f32 %v4474, 0.7978846
    %v4539 = vmul.f32 %v4475, 0.7978846
    %v4540 = vmul.f32 %v4476, 0.7978846
    %v4541 = vmul.f32 %v4477, 0.7978846
    %v4542 = vmul.f32 %v4478, 0.7978846
    %v4543 = vmul.f32 %v4479, 0.7978846
    %v4544 = vmul.f32 %v4480, 0.7978846
    %v4545 = vmul.f32 %v4481, 0.7978846
    %v4546 = vmul.f32 %v4482, 0.7978846
    %v4547 = vmul.f32 %v4483, 0.7978846
    %v4548 = vmul.f32 %v4484, 0.7978846
    %v4549 = vmul.f32 %v4485, 0.7978846
    %v4550 = vmul.f32 %v4486, 0.7978846
    %v4551 = vmul.f32 %v4487, 0.7978846
    %v4552 = vmul.f32 %v4488, 0.7978846
    %v4553 = vmul.f32 %v4489, 0.7978846
    %v4554 = vmul.f32 %v4490, 0.7978846
    %v4555 = vmul.f32 %v4491, 0.7978846
    %v4556 = vmul.f32 %v4492, 0.7978846
    %v4557 = vmul.f32 %v4493, 0.7978846
    %v4558 = vmul.f32 %v4494, 0.7978846
    %v4559 = vmul.f32 %v4495, 0.7978846
    %v4560 = vmul.f32 %v4496, 0.7978846
    %v4561 = vmul.f32 %v4497, 0.7978846
    %v4562 = vmul.f32 %v4498, 0.7978846
    %v4563 = vmul.f32 %v4499, 0.7978846
    %v4564 = vtanh.pop %v4500
    %v4565 = vtanh.pop %v4501
    %v4566 = vtanh.pop %v4502
    %v4567 = vtanh.pop %v4503
    %v4568 = vtanh.pop %v4504
    %v4569 = vtanh.pop %v4505
    %v4570 = vtanh.pop %v4506
    %v4571 = vtanh.pop %v4507
    %v4572 = vtanh.pop %v4508
    %v4573 = vtanh.pop %v4509
    %v4574 = vtanh.pop %v4510
    %v4575 = vtanh.pop %v4511
    %v4576 = vtanh.pop %v4512
    %v4577 = vtanh.pop %v4513
    %v4578 = vtanh.pop %v4514
    %v4579 = vtanh.pop %v4515
    %v4580 = vtanh.pop %v4516
    %v4581 = vtanh.pop %v4517
    %v4582 = vtanh.pop %v4518
    %v4583 = vtanh.pop %v4519
    %v4584 = vtanh.pop %v4520
    %v4585 = vtanh.pop %v4521
    %v4586 = vtanh.pop %v4522
    %v4587 = vtanh.pop %v4523
    %v4588 = vtanh.pop %v4524
    %v4589 = vtanh.pop %v4525
    %v4590 = vtanh.pop %v4526
    %v4591 = vtanh.pop %v4527
    %v4592 = vtanh.pop %v4528
    %v4593 = vtanh.pop %v4529
    %v4594 = vtanh.pop %v4530
    %v4595 = vtanh.pop %v4531
    %v4596 = vtanh.pop %v4532
    %v4597 = vtanh.pop %v4533
    %v4598 = vtanh.pop %v4534
    %v4599 = vtanh.pop %v4535
    %v4600 = vtanh.pop %v4536
    %v4601 = vtanh.pop %v4537
    %v4602 = vtanh.pop %v4538
    %v4603 = vtanh.pop %v4539
    %v4604 = vtanh.pop %v4540
    %v4605 = vtanh.pop %v4541
    %v4606 = vtanh.pop %v4542
    %v4607 = vtanh.pop %v4543
    %v4608 = vtanh.pop %v4544
    %v4609 = vtanh.pop %v4545
    %v4610 = vtanh.pop %v4546
    %v4611 = vtanh.pop %v4547
    %v4612 = vtanh.pop %v4548
    %v4613 = vtanh.pop %v4549
    %v4614 = vtanh.pop %v4550
    %v4615 = vtanh.pop %v4551
    %v4616 = vtanh.pop %v4552
    %v4617 = vtanh.pop %v4553
    %v4618 = vtanh.pop %v4554
    %v4619 = vtanh.pop %v4555
    %v4620 = vtanh.pop %v4556
    %v4621 = vtanh.pop %v4557
    %v4622 = vtanh.pop %v4558
    %v4623 = vtanh.pop %v4559
    %v4624 = vtanh.pop %v4560
    %v4625 = vtanh.pop %v4561
    %v4626 = vtanh.pop %v4562
    %v4627 = vtanh.pop %v4563
    %v4628 = vadd.f32 %v4564, 1.0
    %v4629 = vadd.f32 %v4565, 1.0
    %v4630 = vadd.f32 %v4566, 1.0
    %v4631 = vadd.f32 %v4567, 1.0
    %v4632 = vadd.f32 %v4568, 1.0
    %v4633 = vadd.f32 %v4569, 1.0
    %v4634 = vadd.f32 %v4570, 1.0
    %v4635 = vadd.f32 %v4571, 1.0
    %v4636 = vadd.f32 %v4572, 1.0
    %v4637 = vadd.f32 %v4573, 1.0
    %v4638 = vadd.f32 %v4574, 1.0
    %v4639 = vadd.f32 %v4575, 1.0
    %v4640 = vadd.f32 %v4576, 1.0
    %v4641 = vadd.f32 %v4577, 1.0
    %v4642 = vadd.f32 %v4578, 1.0
    %v4643 = vadd.f32 %v4579, 1.0
    %v4644 = vadd.f32 %v4580, 1.0
    %v4645 = vadd.f32 %v4581, 1.0
    %v4646 = vadd.f32 %v4582, 1.0
    %v4647 = vadd.f32 %v4583, 1.0
    %v4648 = vadd.f32 %v4584, 1.0
    %v4649 = vadd.f32 %v4585, 1.0
    %v4650 = vadd.f32 %v4586, 1.0
    %v4651 = vadd.f32 %v4587, 1.0
    %v4652 = vadd.f32 %v4588, 1.0
    %v4653 = vadd.f32 %v4589, 1.0
    %v4654 = vadd.f32 %v4590, 1.0
    %v4655 = vadd.f32 %v4591, 1.0
    %v4656 = vadd.f32 %v4592, 1.0
    %v4657 = vadd.f32 %v4593, 1.0
    %v4658 = vadd.f32 %v4594, 1.0
    %v4659 = vadd.f32 %v4595, 1.0
    %v4660 = vadd.f32 %v4596, 1.0
    %v4661 = vadd.f32 %v4597, 1.0
    %v4662 = vadd.f32 %v4598, 1.0
    %v4663 = vadd.f32 %v4599, 1.0
    %v4664 = vadd.f32 %v4600, 1.0
    %v4665 = vadd.f32 %v4601, 1.0
    %v4666 = vadd.f32 %v4602, 1.0
    %v4667 = vadd.f32 %v4603, 1.0
    %v4668 = vadd.f32 %v4604, 1.0
    %v4669 = vadd.f32 %v4605, 1.0
    %v4670 = vadd.f32 %v4606, 1.0
    %v4671 = vadd.f32 %v4607, 1.0
    %v4672 = vadd.f32 %v4608, 1.0
    %v4673 = vadd.f32 %v4609, 1.0
    %v4674 = vadd.f32 %v4610, 1.0
    %v4675 = vadd.f32 %v4611, 1.0
    %v4676 = vadd.f32 %v4612, 1.0
    %v4677 = vadd.f32 %v4613, 1.0
    %v4678 = vadd.f32 %v4614, 1.0
    %v4679 = vadd.f32 %v4615, 1.0
    %v4680 = vadd.f32 %v4616, 1.0
    %v4681 = vadd.f32 %v4617, 1.0
    %v4682 = vadd.f32 %v4618, 1.0
    %v4683 = vadd.f32 %v4619, 1.0
    %v4684 = vadd.f32 %v4620, 1.0
    %v4685 = vadd.f32 %v4621, 1.0
    %v4686 = vadd.f32 %v4622, 1.0
    %v4687 = vadd.f32 %v4623, 1.0
    %v4688 = vadd.f32 %v4624, 1.0
    %v4689 = vadd.f32 %v4625, 1.0
    %v4690 = vadd.f32 %v4626, 1.0
    %v4691 = vadd.f32 %v4627, 1.0
    %v4692 = vmul.f32 %v4180, %v4628
    %v4693 = vmul.f32 %v4181, %v4629
    %v4694 = vmul.f32 %v4182, %v4630
    %v4695 = vmul.f32 %v4183, %v4631
    %v4696 = vmul.f32 %v4184, %v4632
    %v4697 = vmul.f32 %v4185, %v4633
    %v4698 = vmul.f32 %v4186, %v4634
    %v4699 = vmul.f32 %v4187, %v4635
    %v4700 = vmul.f32 %v4188, %v4636
    %v4701 = vmul.f32 %v4189, %v4637
    %v4702 = vmul.f32 %v4190, %v4638
    %v4703 = vmul.f32 %v4191, %v4639
    %v4704 = vmul.f32 %v4192, %v4640
    %v4705 = vmul.f32 %v4193, %v4641
    %v4706 = vmul.f32 %v4194, %v4642
    %v4707 = vmul.f32 %v4195, %v4643
    %v4708 = vmul.f32 %v4196, %v4644
    %v4709 = vmul.f32 %v4197, %v4645
    %v4710 = vmul.f32 %v4198, %v4646
    %v4711 = vmul.f32 %v4199, %v4647
    %v4712 = vmul.f32 %v4200, %v4648
    %v4713 = vmul.f32 %v4201, %v4649
    %v4714 = vmul.f32 %v4202, %v4650
    %v4715 = vmul.f32 %v4203, %v4651
    %v4716 = vmul.f32 %v4204, %v4652
    %v4717 = vmul.f32 %v4205, %v4653
    %v4718 = vmul.f32 %v4206, %v4654
    %v4719 = vmul.f32 %v4207, %v4655
    %v4720 = vmul.f32 %v4208, %v4656
    %v4721 = vmul.f32 %v4209, %v4657
    %v4722 = vmul.f32 %v4210, %v4658
    %v4723 = vmul.f32 %v4211, %v4659
    %v4724 = vmul.f32 %v4212, %v4660
    %v4725 = vmul.f32 %v4213, %v4661
    %v4726 = vmul.f32 %v4214, %v4662
    %v4727 = vmul.f32 %v4215, %v4663
    %v4728 = vmul.f32 %v4216, %v4664
    %v4729 = vmul.f32 %v4217, %v4665
    %v4730 = vmul.f32 %v4218, %v4666
    %v4731 = vmul.f32 %v4219, %v4667
    %v4732 = vmul.f32 %v4220, %v4668
    %v4733 = vmul.f32 %v4221, %v4669
    %v4734 = vmul.f32 %v4222, %v4670
    %v4735 = vmul.f32 %v4223, %v4671
    %v4736 = vmul.f32 %v4224, %v4672
    %v4737 = vmul.f32 %v4225, %v4673
    %v4738 = vmul.f32 %v4226, %v4674
    %v4739 = vmul.f32 %v4227, %v4675
    %v4740 = vmul.f32 %v4228, %v4676
    %v4741 = vmul.f32 %v4229, %v4677
    %v4742 = vmul.f32 %v4230, %v4678
    %v4743 = vmul.f32 %v4231, %v4679
    %v4744 = vmul.f32 %v4232, %v4680
    %v4745 = vmul.f32 %v4233, %v4681
    %v4746 = vmul.f32 %v4234, %v4682
    %v4747 = vmul.f32 %v4235, %v4683
    %v4748 = vmul.f32 %v4236, %v4684
    %v4749 = vmul.f32 %v4237, %v4685
    %v4750 = vmul.f32 %v4238, %v4686
    %v4751 = vmul.f32 %v4239, %v4687
    %v4752 = vmul.f32 %v4240, %v4688
    %v4753 = vmul.f32 %v4241, %v4689
    %v4754 = vmul.f32 %v4242, %v4690
    %v4755 = vmul.f32 %v4243, %v4691
    %v4756 = vpack.c.bf16 %v4696, %v4692
    %v4757 = vpack.c.bf16 %v4697, %v4693
    %v4758 = vpack.c.bf16 %v4698, %v4694
    %v4759 = vpack.c.bf16 %v4699, %v4695
    %v4760 = vpack.c.bf16 %v4704, %v4700
    %v4761 = vpack.c.bf16 %v4705, %v4701
    %v4762 = vpack.c.bf16 %v4706, %v4702
    %v4763 = vpack.c.bf16 %v4707, %v4703
    %v4764 = vpack.c.bf16 %v4712, %v4708
    %v4765 = vpack.c.bf16 %v4713, %v4709
    %v4766 = vpack.c.bf16 %v4714, %v4710
    %v4767 = vpack.c.bf16 %v4715, %v4711
    %v4768 = vpack.c.bf16 %v4720, %v4716
    %v4769 = vpack.c.bf16 %v4721, %v4717
    %v4770 = vpack.c.bf16 %v4722, %v4718
    %v4771 = vpack.c.bf16 %v4723, %v4719
    %v4772 = vpack.c.bf16 %v4728, %v4724
    %v4773 = vpack.c.bf16 %v4729, %v4725
    %v4774 = vpack.c.bf16 %v4730, %v4726
    %v4775 = vpack.c.bf16 %v4731, %v4727
    %v4776 = vpack.c.bf16 %v4736, %v4732
    %v4777 = vpack.c.bf16 %v4737, %v4733
    %v4778 = vpack.c.bf16 %v4738, %v4734
    %v4779 = vpack.c.bf16 %v4739, %v4735
    %v4780 = vpack.c.bf16 %v4744, %v4740
    %v4781 = vpack.c.bf16 %v4745, %v4741
    %v4782 = vpack.c.bf16 %v4746, %v4742
    %v4783 = vpack.c.bf16 %v4747, %v4743
    %v4784 = vpack.c.bf16 %v4752, %v4748
    %v4785 = vpack.c.bf16 %v4753, %v4749
    %v4786 = vpack.c.bf16 %v4754, %v4750
    %v4787 = vpack.c.bf16 %v4755, %v4751
    %v4788 = vld [vmem:[#allocation10] sm:$0xf]
    %v4789 = vld [vmem:[#allocation10 + $0x4] sm:$0xf]
    %v4790 = vld [vmem:[#allocation10 + $0x8] sm:$0xf]
    %v4791 = vld [vmem:[#allocation10 + $0xc] sm:$0xf]
    %v4792 = vld [vmem:[#allocation10 + $0x10] sm:$0xf]
    %v4793 = vld [vmem:[#allocation10 + $0x14] sm:$0xf]
    %v4794 = vld [vmem:[#allocation10 + $0x18] sm:$0xf]
    %v4795 = vld [vmem:[#allocation10 + $0x1c] sm:$0xf]
    %v4796 = vld [vmem:[#allocation10 + $0x20] sm:$0xf]
    %v4797 = vld [vmem:[#allocation10 + $0x24] sm:$0xf]
    %v4798 = vld [vmem:[#allocation10 + $0x28] sm:$0xf]
    %v4799 = vld [vmem:[#allocation10 + $0x2c] sm:$0xf]
    %v4800 = vld [vmem:[#allocation10 + $0x30] sm:$0xf]
    %v4801 = vld [vmem:[#allocation10 + $0x34] sm:$0xf]
    %v4802 = vld [vmem:[#allocation10 + $0x38] sm:$0xf]
    %v4803 = vld [vmem:[#allocation10 + $0x3c] sm:$0xf]
    %v4804 = vld [vmem:[#allocation10 + $0x40] sm:$0xf]
    %v4805 = vld [vmem:[#allocation10 + $0x44] sm:$0xf]
    %v4806 = vld [vmem:[#allocation10 + $0x48] sm:$0xf]
    %v4807 = vld [vmem:[#allocation10 + $0x4c] sm:$0xf]
    %v4808 = vld [vmem:[#allocation10 + $0x50] sm:$0xf]
    %v4809 = vld [vmem:[#allocation10 + $0x54] sm:$0xf]
    %v4810 = vld [vmem:[#allocation10 + $0x58] sm:$0xf]
    %v4811 = vld [vmem:[#allocation10 + $0x5c] sm:$0xf]
    %v4812 = vld [vmem:[#allocation10 + $0x60] sm:$0xf]
    %v4813 = vld [vmem:[#allocation10 + $0x64] sm:$0xf]
    %v4814 = vld [vmem:[#allocation10 + $0x68] sm:$0xf]
    %v4815 = vld [vmem:[#allocation10 + $0x6c] sm:$0xf]
    %v4816 = vld [vmem:[#allocation10 + $0x70] sm:$0xf]
    %v4817 = vld [vmem:[#allocation10 + $0x74] sm:$0xf]
    %v4818 = vld [vmem:[#allocation10 + $0x78] sm:$0xf]
    %v4819 = vld [vmem:[#allocation10 + $0x7c] sm:$0xf]
    %v4820 = vld [vmem:[#allocation10 + $0x80] sm:$0xf]
    %v4821 = vld [vmem:[#allocation10 + $0x84] sm:$0xf]
    %v4822 = vld [vmem:[#allocation10 + $0x88] sm:$0xf]
    %v4823 = vld [vmem:[#allocation10 + $0x8c] sm:$0xf]
    %v4824 = vld [vmem:[#allocation10 + $0x90] sm:$0xf]
    %v4825 = vld [vmem:[#allocation10 + $0x94] sm:$0xf]
    %v4826 = vld [vmem:[#allocation10 + $0x98] sm:$0xf]
    %v4827 = vld [vmem:[#allocation10 + $0x9c] sm:$0xf]
    %v4828 = vld [vmem:[#allocation10 + $0xa0] sm:$0xf]
    %v4829 = vld [vmem:[#allocation10 + $0xa4] sm:$0xf]
    %v4830 = vld [vmem:[#allocation10 + $0xa8] sm:$0xf]
    %v4831 = vld [vmem:[#allocation10 + $0xac] sm:$0xf]
    %v4832 = vld [vmem:[#allocation10 + $0xb0] sm:$0xf]
    %v4833 = vld [vmem:[#allocation10 + $0xb4] sm:$0xf]
    %v4834 = vld [vmem:[#allocation10 + $0xb8] sm:$0xf]
    %v4835 = vld [vmem:[#allocation10 + $0xbc] sm:$0xf]
    %v4836 = vld [vmem:[#allocation10 + $0xc0] sm:$0xf]
    %v4837 = vld [vmem:[#allocation10 + $0xc4] sm:$0xf]
    %v4838 = vld [vmem:[#allocation10 + $0xc8] sm:$0xf]
    %v4839 = vld [vmem:[#allocation10 + $0xcc] sm:$0xf]
    %v4840 = vld [vmem:[#allocation10 + $0xd0] sm:$0xf]
    %v4841 = vld [vmem:[#allocation10 + $0xd4] sm:$0xf]
    %v4842 = vld [vmem:[#allocation10 + $0xd8] sm:$0xf]
    %v4843 = vld [vmem:[#allocation10 + $0xdc] sm:$0xf]
    %v4844 = vld [vmem:[#allocation10 + $0xe0] sm:$0xf]
    %v4845 = vld [vmem:[#allocation10 + $0xe4] sm:$0xf]
    %v4846 = vld [vmem:[#allocation10 + $0xe8] sm:$0xf]
    %v4847 = vld [vmem:[#allocation10 + $0xec] sm:$0xf]
    %v4848 = vld [vmem:[#allocation10 + $0xf0] sm:$0xf]
    %v4849 = vld [vmem:[#allocation10 + $0xf4] sm:$0xf]
    %v4850 = vld [vmem:[#allocation10 + $0xf8] sm:$0xf]
    %v4851 = vld [vmem:[#allocation10 + $0xfc] sm:$0xf]
    %v4852 = vld [vmem:[%s11] sm:$0x1]
    %v4854 = vlaneseq
    %v4855 = vshrl.u32 %v4854, 7
    %v4856 = vsub.s32 0, %v4855
    %v4857 = vrot.slane %v4852, %v4856
    %v4923 = vunpack.c.l.b16 %v4788
    %v4924 = vunpack.c.l.b16 %v4789
    %v4925 = vunpack.c.l.b16 %v4790
    %v4926 = vunpack.c.l.b16 %v4791
    %v4927 = vunpack.c.l.b16 %v4792
    %v4928 = vunpack.c.l.b16 %v4793
    %v4929 = vunpack.c.l.b16 %v4794
    %v4930 = vunpack.c.l.b16 %v4795
    %v4931 = vunpack.c.l.b16 %v4796
    %v4932 = vunpack.c.l.b16 %v4797
    %v4933 = vunpack.c.l.b16 %v4798
    %v4934 = vunpack.c.l.b16 %v4799
    %v4935 = vunpack.c.l.b16 %v4800
    %v4936 = vunpack.c.l.b16 %v4801
    %v4937 = vunpack.c.l.b16 %v4802
    %v4938 = vunpack.c.l.b16 %v4803
    %v4939 = vunpack.c.l.b16 %v4804
    %v4940 = vunpack.c.l.b16 %v4805
    %v4941 = vunpack.c.l.b16 %v4806
    %v4942 = vunpack.c.l.b16 %v4807
    %v4943 = vunpack.c.l.b16 %v4808
    %v4944 = vunpack.c.l.b16 %v4809
    %v4945 = vunpack.c.l.b16 %v4810
    %v4946 = vunpack.c.l.b16 %v4811
    %v4947 = vunpack.c.l.b16 %v4812
    %v4948 = vunpack.c.l.b16 %v4813
    %v4949 = vunpack.c.l.b16 %v4814
    %v4950 = vunpack.c.l.b16 %v4815
    %v4951 = vunpack.c.l.b16 %v4816
    %v4952 = vunpack.c.l.b16 %v4817
    %v4953 = vunpack.c.l.b16 %v4818
    %v4954 = vunpack.c.l.b16 %v4819
    %v4955 = vunpack.c.l.b16 %v4820
    %v4956 = vunpack.c.l.b16 %v4821
    %v4957 = vunpack.c.l.b16 %v4822
    %v4958 = vunpack.c.l.b16 %v4823
    %v4959 = vunpack.c.l.b16 %v4824
    %v4960 = vunpack.c.l.b16 %v4825
    %v4961 = vunpack.c.l.b16 %v4826
    %v4962 = vunpack.c.l.b16 %v4827
    %v4963 = vunpack.c.l.b16 %v4828
    %v4964 = vunpack.c.l.b16 %v4829
    %v4965 = vunpack.c.l.b16 %v4830
    %v4966 = vunpack.c.l.b16 %v4831
    %v4967 = vunpack.c.l.b16 %v4832
    %v4968 = vunpack.c.l.b16 %v4833
    %v4969 = vunpack.c.l.b16 %v4834
    %v4970 = vunpack.c.l.b16 %v4835
    %v4971 = vunpack.c.l.b16 %v4836
    %v4972 = vunpack.c.l.b16 %v4837
    %v4973 = vunpack.c.l.b16 %v4838
    %v4974 = vunpack.c.l.b16 %v4839
    %v4975 = vunpack.c.l.b16 %v4840
    %v4976 = vunpack.c.l.b16 %v4841
    %v4977 = vunpack.c.l.b16 %v4842
    %v4978 = vunpack.c.l.b16 %v4843
    %v4979 = vunpack.c.l.b16 %v4844
    %v4980 = vunpack.c.l.b16 %v4845
    %v4981 = vunpack.c.l.b16 %v4846
    %v4982 = vunpack.c.l.b16 %v4847
    %v4983 = vunpack.c.l.b16 %v4848
    %v4984 = vunpack.c.l.b16 %v4849
    %v4985 = vunpack.c.l.b16 %v4850
    %v4986 = vunpack.c.l.b16 %v4851
    %v4987 = vpack.c.b16 %v4924, %v4923
    %v4988 = vpack.c.b16 %v4926, %v4925
    %v4989 = vpack.c.b16 %v4928, %v4927
    %v4990 = vpack.c.b16 %v4930, %v4929
    %v4991 = vpack.c.b16 %v4932, %v4931
    %v4992 = vpack.c.b16 %v4934, %v4933
    %v4993 = vpack.c.b16 %v4936, %v4935
    %v4994 = vpack.c.b16 %v4938, %v4937
    %v4995 = vpack.c.b16 %v4940, %v4939
    %v4996 = vpack.c.b16 %v4942, %v4941
    %v4997 = vpack.c.b16 %v4944, %v4943
    %v4998 = vpack.c.b16 %v4946, %v4945
    %v4999 = vpack.c.b16 %v4948, %v4947
    %v5000 = vpack.c.b16 %v4950, %v4949
    %v5001 = vpack.c.b16 %v4952, %v4951
    %v5002 = vpack.c.b16 %v4954, %v4953
    %v5003 = vpack.c.b16 %v4956, %v4955
    %v5004 = vpack.c.b16 %v4958, %v4957
    %v5005 = vpack.c.b16 %v4960, %v4959
    %v5006 = vpack.c.b16 %v4962, %v4961
    %v5007 = vpack.c.b16 %v4964, %v4963
    %v5008 = vpack.c.b16 %v4966, %v4965
    %v5009 = vpack.c.b16 %v4968, %v4967
    %v5010 = vpack.c.b16 %v4970, %v4969
    %v5011 = vpack.c.b16 %v4972, %v4971
    %v5012 = vpack.c.b16 %v4974, %v4973
    %v5013 = vpack.c.b16 %v4976, %v4975
    %v5014 = vpack.c.b16 %v4978, %v4977
    %v5015 = vpack.c.b16 %v4980, %v4979
    %v5016 = vpack.c.b16 %v4982, %v4981
    %v5017 = vpack.c.b16 %v4984, %v4983
    %v5018 = vpack.c.b16 %v4986, %v4985
    %5051 = vmatprep.subr.bf16.mxu0 0
    %5052 = vmatpush1.bf16.msra.mxu0 %v4994
    %5053 = vmatprep.subr.bf16.mxu0 0
    %5054 = vmatpush1.bf16.msra.mxu0 %v4993
    %5055 = vmatprep.subr.bf16.mxu0 0
    %5056 = vmatpush1.bf16.msra.mxu0 %v4992
    %5057 = vmatprep.subr.bf16.mxu0 0
    %5058 = vmatpush1.bf16.msra.mxu0 %v4991
    %5059 = vmatprep.subr.bf16.mxu0 0
    %5060 = vmatpush1.bf16.msra.mxu0 %v4990
    %5061 = vmatprep.subr.bf16.mxu0 0
    %5062 = vmatpush1.bf16.msra.mxu0 %v4989
    %5063 = vmatprep.subr.bf16.mxu0 0
    %5064 = vmatpush1.bf16.msra.mxu0 %v4988
    %5065 = vmatprep.subr.bf16.mxu0 0
    %5066 = vmatpush1.bf16.msra.mxu0 %v4987
    %5067 = vmatprep.subr.bf16.mxu0 0
    %5068 = vmatpush2.bf16.msra.mxu0 %v5002
    %5069 = vmatprep.subr.bf16.mxu0 0
    %5070 = vmatpush2.bf16.msra.mxu0 %v5001
    %5071 = vmatprep.subr.bf16.mxu0 0
    %5072 = vmatpush2.bf16.msra.mxu0 %v5000
    %5073 = vmatprep.subr.bf16.mxu0 0
    %5074 = vmatpush2.bf16.msra.mxu0 %v4999
    %5075 = vmatprep.subr.bf16.mxu0 0
    %5076 = vmatpush2.bf16.msra.mxu0 %v4998
    %5077 = vmatprep.subr.bf16.mxu0 0
    %5078 = vmatpush2.bf16.msra.mxu0 %v4997
    %5079 = vmatprep.subr.bf16.mxu0 0
    %5080 = vmatpush2.bf16.msra.mxu0 %v4996
    %5081 = vmatprep.subr.bf16.mxu0 0
    %5082 = vmatpush2.bf16.msra.mxu0 %v4995
    %5083 = vmatprep.mubr.bf16.mxu0 %v4757
    %5084 = vmatmul.mubr.bf16.gmra.mxu0 %v4756
    %v5085 = vpop.f32.mrf.mxu0
    %v5086 = vadd.f32 %v4857, %v5085
    %v5087 = vpop.f32.mrf.mxu0
    %v5088 = vpop.f32.mrf.mxu0
    %v5089 = vadd.f32 %v4857, %v5088
    %v5090 = vpop.f32.mrf.mxu0
    %5091 = vmatprep.mubr.bf16.mxu0 %v4761
    %5092 = vmatmul.mubr.bf16.gmra.mxu0 %v4760
    %v5093 = vpop.f32.mrf.mxu0
    %v5094 = vadd.f32 %v4857, %v5093
    %v5095 = vpop.f32.mrf.mxu0
    %v5096 = vpop.f32.mrf.mxu0
    %v5097 = vadd.f32 %v4857, %v5096
    %v5098 = vpop.f32.mrf.mxu0
    %5099 = vmatprep.mubr.bf16.mxu0 %v4765
    %5100 = vmatmul.mubr.bf16.gmra.mxu0 %v4764
    %v5101 = vpop.f32.mrf.mxu0
    %v5102 = vadd.f32 %v4857, %v5101
    %v5103 = vpop.f32.mrf.mxu0
    %v5104 = vpop.f32.mrf.mxu0
    %v5105 = vadd.f32 %v4857, %v5104
    %v5106 = vpop.f32.mrf.mxu0
    %5107 = vmatprep.mubr.bf16.mxu0 %v4769
    %5108 = vmatmul.mubr.bf16.gmra.mxu0 %v4768
    %v5109 = vpop.f32.mrf.mxu0
    %v5110 = vadd.f32 %v4857, %v5109
    %v5111 = vpop.f32.mrf.mxu0
    %v5112 = vpop.f32.mrf.mxu0
    %v5113 = vadd.f32 %v4857, %v5112
    %v5114 = vpop.f32.mrf.mxu0
    %5115 = vmatprep.mubr.bf16.mxu0 %v4773
    %5116 = vmatmul.mubr.bf16.gmra.mxu0 %v4772
    %v5117 = vpop.f32.mrf.mxu0
    %v5118 = vadd.f32 %v4857, %v5117
    %v5119 = vpop.f32.mrf.mxu0
    %v5120 = vpop.f32.mrf.mxu0
    %v5121 = vadd.f32 %v4857, %v5120
    %v5122 = vpop.f32.mrf.mxu0
    %5123 = vmatprep.mubr.bf16.mxu0 %v4777
    %5124 = vmatmul.mubr.bf16.gmra.mxu0 %v4776
    %v5125 = vpop.f32.mrf.mxu0
    %v5126 = vadd.f32 %v4857, %v5125
    %v5127 = vpop.f32.mrf.mxu0
    %v5128 = vpop.f32.mrf.mxu0
    %v5129 = vadd.f32 %v4857, %v5128
    %v5130 = vpop.f32.mrf.mxu0
    %5131 = vmatprep.mubr.bf16.mxu0 %v4781
    %5132 = vmatmul.mubr.bf16.gmra.mxu0 %v4780
    %v5133 = vpop.f32.mrf.mxu0
    %v5134 = vadd.f32 %v4857, %v5133
    %v5135 = vpop.f32.mrf.mxu0
    %v5136 = vpop.f32.mrf.mxu0
    %v5137 = vadd.f32 %v4857, %v5136
    %v5138 = vpop.f32.mrf.mxu0
    %5139 = vmatprep.mubr.bf16.mxu0 %v4785
    %5140 = vmatmul.mubr.bf16.gmra.mxu0 %v4784
    %v5141 = vpop.f32.mrf.mxu0
    %v5142 = vadd.f32 %v4857, %v5141
    %v5143 = vpop.f32.mrf.mxu0
    %v5144 = vpop.f32.mrf.mxu0
    %v5145 = vadd.f32 %v4857, %v5144
    %v5146 = vpop.f32.mrf.mxu0
    %5147 = vdwg.mxu0
    %5148 = vmatprep.subr.bf16.mxu0 0
    %5149 = vmatpush1.bf16.msra.mxu0 %v5010
    %5150 = vmatprep.subr.bf16.mxu0 0
    %5151 = vmatpush1.bf16.msra.mxu0 %v5009
    %5152 = vmatprep.subr.bf16.mxu0 0
    %5153 = vmatpush1.bf16.msra.mxu0 %v5008
    %5154 = vmatprep.subr.bf16.mxu0 0
    %5155 = vmatpush1.bf16.msra.mxu0 %v5007
    %5156 = vmatprep.subr.bf16.mxu0 0
    %5157 = vmatpush1.bf16.msra.mxu0 %v5006
    %5158 = vmatprep.subr.bf16.mxu0 0
    %5159 = vmatpush1.bf16.msra.mxu0 %v5005
    %5160 = vmatprep.subr.bf16.mxu0 0
    %5161 = vmatpush1.bf16.msra.mxu0 %v5004
    %5162 = vmatprep.subr.bf16.mxu0 0
    %5163 = vmatpush1.bf16.msra.mxu0 %v5003
    %5164 = vmatprep.subr.bf16.mxu0 0
    %5165 = vmatpush2.bf16.msra.mxu0 %v5018
    %5166 = vmatprep.subr.bf16.mxu0 0
    %5167 = vmatpush2.bf16.msra.mxu0 %v5017
    %5168 = vmatprep.subr.bf16.mxu0 0
    %5169 = vmatpush2.bf16.msra.mxu0 %v5016
    %5170 = vmatprep.subr.bf16.mxu0 0
    %5171 = vmatpush2.bf16.msra.mxu0 %v5015
    %5172 = vmatprep.subr.bf16.mxu0 0
    %5173 = vmatpush2.bf16.msra.mxu0 %v5014
    %5174 = vmatprep.subr.bf16.mxu0 0
    %5175 = vmatpush2.bf16.msra.mxu0 %v5013
    %5176 = vmatprep.subr.bf16.mxu0 0
    %5177 = vmatpush2.bf16.msra.mxu0 %v5012
    %5178 = vmatprep.subr.bf16.mxu0 0
    %5179 = vmatpush2.bf16.msra.mxu0 %v5011
    %5180 = vmatprep.mubr.bf16.mxu0 %v4759
    %5181 = vmatmul.mubr.bf16.gmra.mxu0 %v4758
    %v5182 = vpop.f32.mrf.mxu0
    %v5183 = vadd.f32 %v5086, %v5182
    %v5184 = vpop.f32.mrf.mxu0
    %v5185 = vpop.f32.mrf.mxu0
    %v5186 = vadd.f32 %v5089, %v5185
    %v5187 = vpop.f32.mrf.mxu0
    %5188 = vmatprep.mubr.bf16.mxu0 %v4763
    %5189 = vmatmul.mubr.bf16.gmra.mxu0 %v4762
    %v5190 = vpop.f32.mrf.mxu0
    %v5191 = vadd.f32 %v5094, %v5190
    %v5192 = vpop.f32.mrf.mxu0
    %v5193 = vpop.f32.mrf.mxu0
    %v5194 = vadd.f32 %v5097, %v5193
    %v5195 = vpop.f32.mrf.mxu0
    %5196 = vmatprep.mubr.bf16.mxu0 %v4767
    %5197 = vmatmul.mubr.bf16.gmra.mxu0 %v4766
    %v5198 = vpop.f32.mrf.mxu0
    %v5199 = vadd.f32 %v5102, %v5198
    %v5200 = vpop.f32.mrf.mxu0
    %v5201 = vpop.f32.mrf.mxu0
    %v5202 = vadd.f32 %v5105, %v5201
    %v5203 = vpop.f32.mrf.mxu0
    %5204 = vmatprep.mubr.bf16.mxu0 %v4771
    %5205 = vmatmul.mubr.bf16.gmra.mxu0 %v4770
    %v5206 = vpop.f32.mrf.mxu0
    %v5207 = vadd.f32 %v5110, %v5206
    %v5208 = vpop.f32.mrf.mxu0
    %v5209 = vpop.f32.mrf.mxu0
    %v5210 = vadd.f32 %v5113, %v5209
    %v5211 = vpop.f32.mrf.mxu0
    %5212 = vmatprep.mubr.bf16.mxu0 %v4775
    %5213 = vmatmul.mubr.bf16.gmra.mxu0 %v4774
    %v5214 = vpop.f32.mrf.mxu0
    %v5215 = vadd.f32 %v5118, %v5214
    %v5216 = vpop.f32.mrf.mxu0
    %v5217 = vpop.f32.mrf.mxu0
    %v5218 = vadd.f32 %v5121, %v5217
    %v5219 = vpop.f32.mrf.mxu0
    %5220 = vmatprep.mubr.bf16.mxu0 %v4779
    %5221 = vmatmul.mubr.bf16.gmra.mxu0 %v4778
    %v5222 = vpop.f32.mrf.mxu0
    %v5223 = vadd.f32 %v5126, %v5222
    %v5224 = vpop.f32.mrf.mxu0
    %v5225 = vpop.f32.mrf.mxu0
    %v5226 = vadd.f32 %v5129, %v5225
    %v5227 = vpop.f32.mrf.mxu0
    %5228 = vmatprep.mubr.bf16.mxu0 %v4783
    %5229 = vmatmul.mubr.bf16.gmra.mxu0 %v4782
    %v5230 = vpop.f32.mrf.mxu0
    %v5231 = vadd.f32 %v5134, %v5230
    %v5232 = vpop.f32.mrf.mxu0
    %v5233 = vpop.f32.mrf.mxu0
    %v5234 = vadd.f32 %v5137, %v5233
    %v5235 = vpop.f32.mrf.mxu0
    %5236 = vmatprep.mubr.bf16.mxu0 %v4787
    %5237 = vmatmul.mubr.bf16.gmra.mxu0 %v4786
    %v5238 = vpop.f32.mrf.mxu0
    %v5239 = vadd.f32 %v5142, %v5238
    %v5240 = vpop.f32.mrf.mxu0
    %v5241 = vpop.f32.mrf.mxu0
    %v5242 = vadd.f32 %v5145, %v5241
    %v5243 = vpop.f32.mrf.mxu0
    %5244 = vdwg.mxu0
    %v5245 = vadd.f32 %v3462, %v5183
    %v5246 = vadd.f32 %v3463, %v5186
    %v5247 = vadd.f32 %v3464, %v5191
    %v5248 = vadd.f32 %v3465, %v5194
    %v5249 = vadd.f32 %v3466, %v5199
    %v5250 = vadd.f32 %v3467, %v5202
    %v5251 = vadd.f32 %v3468, %v5207
    %v5252 = vadd.f32 %v3469, %v5210
    %v5253 = vadd.f32 %v3470, %v5215
    %v5254 = vadd.f32 %v3471, %v5218
    %v5255 = vadd.f32 %v3472, %v5223
    %v5256 = vadd.f32 %v3473, %v5226
    %v5257 = vadd.f32 %v3474, %v5231
    %v5258 = vadd.f32 %v3475, %v5234
    %v5259 = vadd.f32 %v3476, %v5239
    %v5260 = vadd.f32 %v3477, %v5242
    %5261 = vst [vmem:[#allocation11] sm:$0xff] %v5245
    %5262 = vst [vmem:[#allocation11 + $0x8] sm:$0xff] %v5246
    %5263 = vst [vmem:[#allocation11 + $0x10] sm:$0xff] %v5247
    %5264 = vst [vmem:[#allocation11 + $0x18] sm:$0xff] %v5248
    %5265 = vst [vmem:[#allocation11 + $0x20] sm:$0xff] %v5249
    %5266 = vst [vmem:[#allocation11 + $0x28] sm:$0xff] %v5250
    %5267 = vst [vmem:[#allocation11 + $0x30] sm:$0xff] %v5251
    %5268 = vst [vmem:[#allocation11 + $0x38] sm:$0xff] %v5252
    %5269 = vst [vmem:[#allocation11 + $0x40] sm:$0xff] %v5253
    %5270 = vst [vmem:[#allocation11 + $0x48] sm:$0xff] %v5254
    %5271 = vst [vmem:[#allocation11 + $0x50] sm:$0xff] %v5255
    %5272 = vst [vmem:[#allocation11 + $0x58] sm:$0xff] %v5256
    %5273 = vst [vmem:[#allocation11 + $0x60] sm:$0xff] %v5257
    %5274 = vst [vmem:[#allocation11 + $0x68] sm:$0xff] %v5258
    %5275 = vst [vmem:[#allocation11 + $0x70] sm:$0xff] %v5259
    %5276 = vst [vmem:[#allocation11 + $0x78] sm:$0xff] %v5260
    // Predicated region
    $region70: #{tpu_custom_call.1} parent=1 // pred_check
      _
    $region71: #{tpu_custom_call.1} parent=1 // pred_check_branch
      %5278 = sbr.rel (0) target = $region73
    $region72: #{tpu_custom_call.1} parent=1 // pred_region
      %s5280 = ssub.s32 2048, 2048
      %5281 = vsyncadd [#allocation4], %s5280
      %s5282 = sshll.u32 [#allocation11], 4
      %s5283 = int_to_ptr.vmem [resolvable:$true] %s5282
      %5288 = dma.vmem_to_hbm [thread:$0]  %s5283, 2048, %s12, [#allocation4], 128, 128, 8
    $region73: #{tpu_custom_call.1} parent=1 // pred_fallthru
      _
    // Predicated region
    $region74: #{tpu_custom_call.1} parent=1 // pred_check
      _
    $region75: #{tpu_custom_call.1} parent=1 // pred_check_branch
      %5290 = sbr.rel (0) target = $region77
    $region76: #{tpu_custom_call.1} parent=1 // pred_region
      %5291 = dma.done [#allocation4], 2048
    $region77: #{tpu_custom_call.1} parent=1 // pred_fallthru
      _
    %5292 = vsyncpa [#allocation3], 1
    %5293 = vsyncpa [#allocation6], 1
    %5294 = vsyncpa [#allocation9], 1
    %5295 = vsyncpa [#allocation4], 1

</llo_original>
